<compile_context>
chip_gen: v7x
topology: tpu7x:2x2x1
jax: 0.10.0
libtpu: 0.0.40
codegen_flags: <defaults>
</compile_context>

<pallas_src>
import math
import functools

import jax
import jax.numpy as jnp
from jax import lax
from jax.experimental import pallas as pl
from jax.experimental.pallas import tpu as pltpu


def _fit(dim, target, align):
    """Largest block size <= target that divides `dim` and is a multiple of
    `align` (TPU (8,128) tiling); falls back to the full dimension."""
    if dim <= target:
        return dim
    d = (min(target, dim) // align) * align
    while d >= align:
        if dim % d == 0:
            return d
        d -= align
    return dim


def _pick_chunk(L, D):
    """Chunk length for the scan: largest divisor of L in {16,...,1} whose live
    per-chunk data (u_c, delta_c, y rows ~ 3*Lc*D*4 B) stays within ~32 KiB."""
    budget = 32 * 1024
    for c in (16, 8, 4, 2, 1):
        if L % c == 0 and 3 * c * D * 4 <= budget:
            return c
    return 1


# --------------------------------------------------------------------------- #
# Kernel 1: tiled matmul with f32 accumulator (in_proj: (B*L, C) @ (C, 2*Dc))
#   activations arrive already in bf16 (cast once in the wrapper).
# --------------------------------------------------------------------------- #
def _matmul_kernel(x_ref, w_ref, o_ref, acc_ref):
    @pl.when(pl.program_id(2) == 0)
    def _():
        acc_ref[...] = jnp.zeros_like(acc_ref)

    acc_ref[...] += jnp.dot(x_ref[...], w_ref[...],
                            preferred_element_type=jnp.float32)

    @pl.when(pl.program_id(2) == pl.num_programs(2) - 1)
    def _():
        o_ref[...] = acc_ref[...]


def matmul_bf16(x_bf16, w_bf16, *, tm=512, tn=256, tk=512):
    M, K = x_bf16.shape
    _, Np = w_bf16.shape
    tm, tn, tk = _fit(M, tm, 8), _fit(Np, tn, 128), _fit(K, tk, 128)
    return pl.pallas_call(
        _matmul_kernel,
        out_shape=jax.ShapeDtypeStruct((M, Np), jnp.float32),
        grid=(M // tm, Np // tn, K // tk),
        in_specs=[pl.BlockSpec((tm, tk), lambda i, j, k: (i, k)),
                  pl.BlockSpec((tk, tn), lambda i, j, k: (k, j))],
        out_specs=pl.BlockSpec((tm, tn), lambda i, j, k: (i, j)),
        scratch_shapes=[pltpu.VMEM((tm, tn), jnp.float32)],
        compiler_params=pltpu.CompilerParams(
            dimension_semantics=("parallel", "parallel", "arbitrary")),
    )(x_bf16, w_bf16)


# --------------------------------------------------------------------------- #
# Kernel 2: depthwise 3x3 conv + SiLU (NHWC), no padded staging buffer:
#   horizontal combine (W shifts) then vertical combine (H shifts).
# --------------------------------------------------------------------------- #
# TODO(synk): for very large H*W feature maps, tile H with a 1-row halo
# (manual DMA) so the per-step footprint fits v7x's 64 MiB VMEM.
def _dwconv_silu_kernel(x_ref, w_ref, b_ref, o_ref, *, H, W2, Dc):
    x = x_ref[...]                                               # (H, W2, Dc)
    zc = jnp.zeros((H, 1, Dc), jnp.float32)
    xl = jnp.concatenate([zc, x[:, :W2 - 1, :]], axis=1)         # x[:, w-1]
    xr = jnp.concatenate([x[:, 1:, :], zc], axis=1)              # x[:, w+1]

    # g_i[h, w] = sum_j x[h, w+j-1] * w[i, j]
    g = []
    for i in range(3):
        g.append(xl * w_ref[i:i + 1, 0:1, :]
                 + x * w_ref[i:i + 1, 1:2, :]
                 + xr * w_ref[i:i + 1, 2:3, :])

    zr = jnp.zeros((1, W2, Dc), jnp.float32)
    acc = (jnp.concatenate([zr, g[0][:H - 1]], axis=0)           # g0[h-1]
           + g[1]
           + jnp.concatenate([g[2][1:], zr], axis=0))            # g2[h+1]
    acc = acc + b_ref[...]
    o_ref[...] = acc * jax.nn.sigmoid(acc)                       # SiLU


def dwconv_silu(x, w, b):
    # x: (B, H, W2, Dc)   w: (3, 3, Dc)   b: (Dc,)
    B, H, W2, Dc = x.shape
    kern = functools.partial(_dwconv_silu_kernel, H=H, W2=W2, Dc=Dc)
    return pl.pallas_call(
        kern,
        out_shape=jax.ShapeDtypeStruct((B, H, W2, Dc), jnp.float32),
        grid=(B,),
        in_specs=[pl.BlockSpec((None, H, W2, Dc), lambda b_: (b_, 0, 0, 0)),
                  pl.BlockSpec((3, 3, Dc), lambda b_: (0, 0, 0)),
                  pl.BlockSpec((1, 1, Dc), lambda b_: (0, 0, 0))],
        out_specs=pl.BlockSpec((None, H, W2, Dc), lambda b_: (b_, 0, 0, 0)),
        compiler_params=pltpu.CompilerParams(dimension_semantics=("parallel",)),
    )(x, w, b.reshape(1, 1, Dc))


# --------------------------------------------------------------------------- #
# Kernel 3: streamed selective scan with fused x_proj/dt_proj on the MXU.
#   Grid point (b, m): u = xs[b, m] (L, D) is scanned FORWARD (direction m) and
#   BACKWARD (direction m+2); both results are summed into ONE (L, D) output,
#   written in original position order (flips never touch HBM).
# --------------------------------------------------------------------------- #
def _scan_kernel(u_ref, xw_ref, dtb_ref, a_ref, ds_ref, o_ref,
                 *, N, D, L, Lc, DN):
    nch = L // Lc

    for r, reverse in ((0, False), (1, True)):
        xw_r = xw_ref[r]       # (D, DN) bf16, fused [W_delta | W_B | W_C]
        A = a_ref[r]           # (N, D) f32, already -exp(a_log), D on lanes
        dtb = dtb_ref[r]       # (1, D)
        dsr = ds_ref[r]        # (1, D)

        def chunk_step(c, h):
            cc = (nch - 1 - c) if reverse else c
            start = pl.multiple_of(cc * Lc, Lc)
            u_c = u_ref[pl.ds(start, Lc), :]                       # (Lc, D)

            # fused x_proj + dt_proj: one MXU matmul -> [delta_pre | B | C]
            xdbl_c = jnp.dot(u_c.astype(jnp.bfloat16), xw_r,
                             preferred_element_type=jnp.float32)   # (Lc, DN)
            d_c = jax.nn.softplus(xdbl_c[:, :D] + dtb)             # (Lc, D)
            b_c = xdbl_c[:, D:D + N][:, :, None]                   # (Lc, N, 1)
            c_c = xdbl_c[:, D + N:][:, :, None]                    # (Lc, N, 1)

            rows = [None] * Lc
            order = range(Lc - 1, -1, -1) if reverse else range(Lc)
            for s in order:                                        # unrolled
                dA_s = jnp.exp(d_c[s:s + 1, :] * A)                # (N, D)
                dBu_s = (d_c[s:s + 1, :] * u_c[s:s + 1, :]) * b_c[s]   # (N, D)
                h = dA_s * h + dBu_s
                rows[s] = jnp.sum(h * c_c[s], axis=0, keepdims=True)   # (1, D)
            y_c = jnp.concatenate(rows, axis=0) + u_c * dsr        # (Lc, D)

            if reverse:   # accumulate backward pass onto the forward result
                o_ref[pl.ds(start, Lc), :] = o_ref[pl.ds(start, Lc), :] + y_c
            else:
                o_ref[pl.ds(start, Lc), :] = y_c
            return h

        lax.fori_loop(0, nch, chunk_step, jnp.zeros((N, D), jnp.float32))


def selective_scan(xs, xwf2_bf16, dtb2, a2neg, ds2, *, N):
    # xs: (B, 2, L, D) — only the 2 base orderings, never flipped in HBM.
    B, two, L, D = xs.shape
    assert two == 2
    DN = D + 2 * N
    Lc = _pick_chunk(L, D)
    kern = functools.partial(_scan_kernel, N=N, D=D, L=L, Lc=Lc, DN=DN)
    # TODO(synk): for realistic L on v7x (64 MiB VMEM), add an L grid axis with
    # h carried in persistent scratch plus an explicit vmem_limit_bytes.
    return pl.pallas_call(
        kern,
        out_shape=jax.ShapeDtypeStruct((B, 2, L, D), jnp.float32),
        grid=(B, 2),
        in_specs=[
            pl.BlockSpec((None, None, L, D), lambda b, m: (b, m, 0, 0)),
            pl.BlockSpec((None, 2, D, DN), lambda b, m: (m, 0, 0, 0)),
            pl.BlockSpec((None, 2, 1, D), lambda b, m: (m, 0, 0, 0)),
            pl.BlockSpec((None, 2, N, D), lambda b, m: (m, 0, 0, 0)),
            pl.BlockSpec((None, 2, 1, D), lambda b, m: (m, 0, 0, 0)),
        ],
        out_specs=pl.BlockSpec((None, None, L, D), lambda b, m: (b, m, 0, 0)),
        compiler_params=pltpu.CompilerParams(
            dimension_semantics=("parallel", "parallel")),
    )(xs, xwf2_bf16, dtb2, a2neg, ds2)


# --------------------------------------------------------------------------- #
# Kernel 4: row-tiled out_norm (LayerNorm) + SiLU(z) gating + out_proj matmul
# --------------------------------------------------------------------------- #
def _norm_gate_proj_kernel(y_ref, z_ref, g_ref, bta_ref, w_ref, o_ref):
    y = y_ref[...]
    mu = jnp.mean(y, axis=-1, keepdims=True)
    var = jnp.mean(jnp.square(y - mu), axis=-1, keepdims=True)
    yn = (y - mu) * lax.rsqrt(var + 1e-5)
    yn = yn * g_ref[...] + bta_ref[...]
    z = z_ref[...]
    gated = yn * (z * jax.nn.sigmoid(z))                       # y * SiLU(z)
    o_ref[...] = jnp.dot(gated.astype(jnp.bfloat16), w_ref[...],
                         preferred_element_type=jnp.float32)


def norm_gate_proj(y, z, gamma, beta, w_out_bf16, *, tm=512):
    M, Dc = y.shape
    Cc = w_out_bf16.shape[1]
    tm = _fit(M, tm, 8)
    return pl.pallas_call(
        _norm_gate_proj_kernel,
        out_shape=jax.ShapeDtypeStruct((M, Cc), jnp.float32),
        grid=(M // tm,),
        in_specs=[pl.BlockSpec((tm, Dc), lambda i: (i, 0)),
                  pl.BlockSpec((tm, Dc), lambda i: (i, 0)),
                  pl.BlockSpec((1, Dc), lambda i: (0, 0)),
                  pl.BlockSpec((1, Dc), lambda i: (0, 0)),
                  pl.BlockSpec((Dc, Cc), lambda i: (0, 0))],   # weight resident
        out_specs=pl.BlockSpec((tm, Cc), lambda i: (i, 0)),
        compiler_params=pltpu.CompilerParams(dimension_semantics=("parallel",)),
    )(y, z, gamma, beta, w_out_bf16)


# --------------------------------------------------------------------------- #
# Parameters (deterministic, synthetic) + kernel-friendly derived layouts
# --------------------------------------------------------------------------- #
def init_params(key, in_c, d_state=16, expand=2):
    d_inner = int(expand * in_c)
    dt_rank = int(math.ceil(in_c / 16))
    K = 4
    ks = jax.random.split(key, 6)
    p = {
        "d_inner": d_inner, "d_state": d_state, "dt_rank": dt_rank,
        "w_in": 0.1 * jax.random.normal(ks[0], (in_c, 2 * d_inner), jnp.float32),
        "conv_w": 0.1 * jax.random.normal(ks[1], (3, 3, d_inner), jnp.float32),
        "conv_b": jnp.zeros((d_inner,), jnp.float32),
        "x_proj_w": 0.1 * jax.random.normal(
            ks[2], (K, dt_rank + 2 * d_state, d_inner), jnp.float32),
        "dt_w": 0.5 * jax.random.normal(ks[3], (K, d_inner, dt_rank), jnp.float32),
        "dt_b": jnp.full((K, 1, d_inner), math.log(math.expm1(0.01)), jnp.float32),
        "a_log": jnp.tile(
            jnp.log(jnp.arange(1, d_state + 1, dtype=jnp.float32))[None, None, :],
            (K, d_inner, 1)),
        "ds": jnp.ones((K, 1, d_inner), jnp.float32),
        "ln_g": jnp.ones((1, d_inner), jnp.float32),
        "ln_b": jnp.zeros((1, d_inner), jnp.float32),
        "w_out": 0.1 * jax.random.normal(ks[4], (d_inner, in_c), jnp.float32),
    }
    R, N, D = dt_rank, d_state, d_inner

    # Fused x_proj + dt_proj weight per direction k:
    #   pre_delta = u @ (x_proj_dt.T @ dt_w.T)   -> (D, D)
    #   [B | C]   = u @ x_proj_bc.T              -> (D, 2N)
    def fused_w(k):
        xw = p["x_proj_w"][k]                               # (R+2N, D)
        wd = xw[:R].T @ p["dt_w"][k].T                      # (D, D)
        return jnp.concatenate([wd, xw[R:].T], axis=1)      # (D, D+2N)

    # grouped by base ordering m (fwd k=m, bwd k=m+2); bf16 cast ONCE.
    p["xwf2_bf16"] = jnp.stack(
        [jnp.stack([fused_w(m), fused_w(m + 2)], axis=0) for m in range(2)],
        axis=0).astype(jnp.bfloat16)                        # (2, 2, D, D+2N)
    p["dtb2"] = jnp.stack(
        [jnp.stack([p["dt_b"][m], p["dt_b"][m + 2]], axis=0) for m in range(2)],
        axis=0)                                             # (2, 2, 1, D)
    p["a2neg"] = jnp.stack(                                 # A = -exp(a_log), D on lanes
        [jnp.stack([-jnp.exp(p["a_log"][m].T), -jnp.exp(p["a_log"][m + 2].T)],
                   axis=0) for m in range(2)], axis=0)      # (2, 2, N, D)
    p["ds2"] = jnp.stack(
        [jnp.stack([p["ds"][m], p["ds"][m + 2]], axis=0) for m in range(2)],
        axis=0)                                             # (2, 2, 1, D)
    p["w_in_bf16"] = p["w_in"].astype(jnp.bfloat16)
    p["w_out_bf16"] = p["w_out"].astype(jnp.bfloat16)
    return p


# --------------------------------------------------------------------------- #
# Full forward (interleave rgb/t -> SS2D -> keep t positions -> NCHW)
# --------------------------------------------------------------------------- #
def mamba1_forward(rgb, t, params):
    B, C, H, W = rgb.shape
    W2 = 2 * W
    L = H * W2
    Dc = params["d_inner"]
    N = params["d_state"]

    # interleave rgb/t columns -> (B, H, 2W, C)
    rgb_l = jnp.transpose(rgb, (0, 2, 3, 1))
    t_l = jnp.transpose(t, (0, 2, 3, 1))
    rgbt = jnp.stack([rgb_l, t_l], axis=3).reshape(B, H, W2, C)

    # in_proj: activation cast to bf16 once (mem-bound matmul reads half the bytes)
    xz = matmul_bf16(rgbt.reshape(B * L, C).astype(jnp.bfloat16),
                     params["w_in_bf16"])
    xz = xz.reshape(B, H, W2, 2 * Dc)
    xpart, z = xz[..., :Dc], xz[..., Dc:]

    # depthwise conv + SiLU
    xc = dwconv_silu(xpart, params["conv_w"], params["conv_b"])        # (B, H, W2, Dc)

    # scan inputs, channel-last (L, D): d0 row-major (H, W2), d1 col-major (W2, H)
    d0 = xc.reshape(B, L, Dc)
    d1 = jnp.transpose(xc, (0, 2, 1, 3)).reshape(B, L, Dc)
    xs = jnp.stack([d0, d1], axis=1)                                   # (B, 2, L, Dc)
    # TODO(synk): fold the m=1 (W2,H) reorder into the scan kernel to avoid
    # materializing this extra HBM copy of the largest activation.

    # fused x_proj/dt_proj + streamed scans; fwd+bwd already summed in-kernel
    y = selective_scan(xs, params["xwf2_bf16"], params["dtb2"],
                       params["a2neg"], params["ds2"], N=N)            # (B, 2, L, Dc)

    y_row = y[:, 0]                                                    # (H, W2) order
    y_col = jnp.transpose(y[:, 1].reshape(B, W2, H, Dc),
                          (0, 2, 1, 3)).reshape(B, L, Dc)
    y_sum = y_row + y_col                                              # (B, L, Dc)

    # keep only the thermal (odd interleave) positions BEFORE LN/gate/out_proj
    y_t = y_sum.reshape(B, H, W, 2, Dc)[:, :, :, 1, :].reshape(B * H * W, Dc)
    z_t = z.reshape(B, H, W, 2, Dc)[:, :, :, 1, :].reshape(B * H * W, Dc)

    out = norm_gate_proj(y_t, z_t, params["ln_g"], params["ln_b"],
                         params["w_out_bf16"])                         # (B*H*W, C)
    out = out.reshape(B, H, W, C)
    return jnp.transpose(out, (0, 3, 1, 2))


# --------------------------------------------------------------------------- #
# Pure-JAX reference (same bf16 matmul policy) for validation
# --------------------------------------------------------------------------- #
def reference_forward(rgb, t, params):
    B, C, H, W = rgb.shape
    W2 = 2 * W
    L = H * W2
    Dc = params["d_inner"]
    N = params["d_state"]
    R = params["dt_rank"]

    rgb_l = jnp.transpose(rgb, (0, 2, 3, 1))
    t_l = jnp.transpose(t, (0, 2, 3, 1))
    rgbt = jnp.stack([rgb_l, t_l], axis=3).reshape(B, H, W2, C)

    xz = jnp.dot(rgbt.reshape(B * L, C).astype(jnp.bfloat16),
                 params["w_in"].astype(jnp.bfloat16),
                 preferred_element_type=jnp.float32).reshape(B, H, W2, 2 * Dc)
    xpart, z = xz[..., :Dc], xz[..., Dc:]

    xp = jnp.pad(xpart, ((0, 0), (1, 1), (1, 1), (0, 0)))
    acc = jnp.zeros_like(xpart)
    for i in range(3):
        for j in range(3):
            acc = acc + xp[:, i:i + H, j:j + W2, :] * params["conv_w"][i, j]
    acc = acc + params["conv_b"]
    xc = acc * jax.nn.sigmoid(acc)

    d0 = xc.reshape(B, L, Dc)
    d1 = jnp.transpose(xc, (0, 2, 1, 3)).reshape(B, L, Dc)
    bases = [d0, d1, d0, d1]
    revs = [False, False, True, True]
    ys = []
    for k in range(4):
        u = bases[k]
        if revs[k]:
            u = jnp.flip(u, axis=1)
        xw = params["x_proj_w"][k]
        wd = xw[:R].T @ params["dt_w"][k].T                            # (D, D)
        wf = jnp.concatenate([wd, xw[R:].T], axis=1).astype(jnp.bfloat16)
        x_dbl = jnp.dot(u.reshape(B * L, Dc).astype(jnp.bfloat16), wf,
                        preferred_element_type=jnp.float32).reshape(B, L, -1)
        delta = jax.nn.softplus(x_dbl[..., :Dc] + params["dt_b"][k])   # (B, L, D)
        Bm = x_dbl[..., Dc:Dc + N]
        Cm = x_dbl[..., Dc + N:]
        A = -jnp.exp(params["a_log"][k])                               # (D, N)
        dA = jnp.exp(delta[..., None] * A[None, None, :, :])           # (B, L, D, N)
        dBu = (delta * u)[..., None] * Bm[:, :, None, :]               # (B, L, D, N)

        def step(h, inp):
            dA_l, dBu_l, C_l = inp
            h = dA_l * h + dBu_l
            return h, jnp.sum(h * C_l[:, None, :], axis=-1)

        _, y_t = lax.scan(step, jnp.zeros((B, Dc, N), jnp.float32),
                          (jnp.moveaxis(dA, 1, 0), jnp.moveaxis(dBu, 1, 0),
                           jnp.moveaxis(Cm, 1, 0)))
        y = jnp.moveaxis(y_t, 0, 1) + u * params["ds"][k]
        if revs[k]:
            y = jnp.flip(y, axis=1)
        ys.append(y)

    y_row = ys[0] + ys[2]
    y_col = ys[1] + ys[3]
    y_col = jnp.transpose(y_col.reshape(B, W2, H, Dc), (0, 2, 1, 3)).reshape(B, L, Dc)
    y = y_row + y_col

    mu = jnp.mean(y, axis=-1, keepdims=True)
    var = jnp.mean(jnp.square(y - mu), axis=-1, keepdims=True)
    yn = (y - mu) * lax.rsqrt(var + 1e-5) * params["ln_g"] + params["ln_b"]
    zz = z.reshape(B, L, Dc)
    gated = yn * (zz * jax.nn.sigmoid(zz))
    out = jnp.dot(gated.reshape(B * L, Dc).astype(jnp.bfloat16),
                  params["w_out"].astype(jnp.bfloat16),
                  preferred_element_type=jnp.float32)
    out = out.reshape(B, H, W2, C)[:, :, 1::2, :]
    return jnp.transpose(out, (0, 3, 1, 2))


if __name__ == "__main__":
    key = jax.random.PRNGKey(0)
    k_rgb, k_t, k_par = jax.random.split(key, 3)

    B, C, H, W = 2, 32, 8, 8
    rgb = jax.random.normal(k_rgb, (B, C, H, W), jnp.float32)
    t = jax.random.normal(k_t, (B, C, H, W), jnp.float32)
    params = init_params(k_par, C)

    fwd = jax.jit(lambda r, tt: mamba1_forward(r, tt, params))
    out = fwd(rgb, t)
    jax.block_until_ready(out)

    assert out.shape == (B, C, H, W), out.shape
    assert bool(jnp.all(jnp.isfinite(out)))

    ref = jax.jit(lambda r, tt: reference_forward(r, tt, params))(rgb, t)
    jax.block_until_ready(ref)
    err = float(jnp.max(jnp.abs(out - ref)))
    assert err < 2e-2, f"max abs err vs reference: {err}"

    print("KERNEL_OK")
</pallas_src>

<mosaic_0001>
module attributes {stable_mosaic.version = 11 : i64} {
  func.func @_matmul_kernel(%arg0: i32, %arg1: i32, %arg2: i32, %arg3: memref<256x32xbf16, #tpu.memory_space<vmem>>, %arg4: memref<32x128xbf16, #tpu.memory_space<vmem>>, %arg5: memref<256x128xf32, #tpu.memory_space<vmem>>, %arg6: memref<256x128xf32, #tpu.memory_space<vmem>>) attributes {dimension_semantics = [#tpu.dimension_semantics<parallel>, #tpu.dimension_semantics<parallel>, #tpu.dimension_semantics<arbitrary>], iteration_bounds = array<i64: 1, 1, 1>, scalar_prefetch = 0 : i64, scratch_operands = 1 : i64, tpu.core_type = #tpu.core_type<tc>, window_params = [{transform_indices = @transform_0, window_bounds = array<i64: 256, 32>}, {transform_indices = @transform_1, window_bounds = array<i64: 32, 128>}, {transform_indices = @transform_2, window_bounds = array<i64: 256, 128>}]} {
    %c0_i32 = arith.constant 0 : i32
    %0 = arith.cmpi eq, %arg2, %c0_i32 : i32
    %1 = arith.extui %0 : i1 to i32
    %c0_i32_0 = arith.constant 0 : i32
    %2 = arith.cmpi ne, %1, %c0_i32_0 : i32
    scf.if %2 {
      %cst_10 = arith.constant 0.000000e+00 : f32
      %12 = vector.broadcast %cst_10 : f32 to vector<256x128xf32>
      %c0_11 = arith.constant 0 : index
      %c0_12 = arith.constant 0 : index
      %13 = vector.load %arg6[%c0_11, %c0_12] : memref<256x128xf32, #tpu.memory_space<vmem>>, vector<256x128xf32>
      tpu.vector_store %arg6[%c0_11, %c0_12], %12 {strides = array<i32>} : memref<256x128xf32, #tpu.memory_space<vmem>>, vector<256x128xf32>,
    } else {
    }
    %c0 = arith.constant 0 : index
    %c0_1 = arith.constant 0 : index
    %3 = vector.load %arg6[%c0, %c0_1] : memref<256x128xf32, #tpu.memory_space<vmem>>, vector<256x128xf32>
    %c0_2 = arith.constant 0 : index
    %c0_3 = arith.constant 0 : index
    %4 = vector.load %arg3[%c0_2, %c0_3] : memref<256x32xbf16, #tpu.memory_space<vmem>>, vector<256x32xbf16>
    %c0_4 = arith.constant 0 : index
    %c0_5 = arith.constant 0 : index
    %5 = vector.load %arg4[%c0_4, %c0_5] : memref<32x128xbf16, #tpu.memory_space<vmem>>, vector<32x128xbf16>
    %cst = arith.constant dense<0.000000e+00> : vector<256x128xf32>
    %6 = tpu.matmul %4, %5, %cst {dimension_numbers = #tpu.dot_dimension_numbers<[1], [0], [0], [1], [0, 0, 1, 1], [], []>} : vector<256x32xbf16>, vector<32x128xbf16>, vector<256x128xf32> -> vector<256x128xf32>
    %7 = arith.addf %3, %6 : vector<256x128xf32>
    %c0_6 = arith.constant 0 : index
    %c0_7 = arith.constant 0 : index
    %8 = vector.load %arg6[%c0_6, %c0_7] : memref<256x128xf32, #tpu.memory_space<vmem>>, vector<256x128xf32>
    tpu.vector_store %arg6[%c0_6, %c0_7], %7 {strides = array<i32>} : memref<256x128xf32, #tpu.memory_space<vmem>>, vector<256x128xf32>,
    %c0_i32_8 = arith.constant 0 : i32
    %9 = arith.cmpi eq, %arg2, %c0_i32_8 : i32
    %10 = arith.extui %9 : i1 to i32
    %c0_i32_9 = arith.constant 0 : i32
    %11 = arith.cmpi ne, %10, %c0_i32_9 : i32
    scf.if %11 {
      %c0_10 = arith.constant 0 : index
      %c0_11 = arith.constant 0 : index
      %12 = vector.load %arg6[%c0_10, %c0_11] : memref<256x128xf32, #tpu.memory_space<vmem>>, vector<256x128xf32>
      %c0_12 = arith.constant 0 : index
      %c0_13 = arith.constant 0 : index
      %13 = vector.load %arg5[%c0_12, %c0_13] : memref<256x128xf32, #tpu.memory_space<vmem>>, vector<256x128xf32>
      tpu.vector_store %arg5[%c0_12, %c0_13], %12 {strides = array<i32>} : memref<256x128xf32, #tpu.memory_space<vmem>>, vector<256x128xf32>,
    } else {
    }
    return
  }
  func.func @transform_0(%arg0: i32, %arg1: i32, %arg2: i32) -> (i32, i32) {
    %c0_i32 = arith.constant 0 : i32
    return %arg0, %arg2 : i32, i32
  }
  func.func @transform_1(%arg0: i32, %arg1: i32, %arg2: i32) -> (i32, i32) {
    %c0_i32 = arith.constant 0 : i32
    return %arg2, %arg1 : i32, i32
  }
  func.func @transform_2(%arg0: i32, %arg1: i32, %arg2: i32) -> (i32, i32) {
    %c0_i32 = arith.constant 0 : i32
    return %arg0, %arg1 : i32, i32
  }
}

module attributes {stable_mosaic.version = 11 : i64} {
  func.func @_dwconv_silu_kernel(%arg0: i32, %arg1: memref<1x8x16x64xf32, #tpu.memory_space<vmem>>, %arg2: memref<3x3x64xf32, #tpu.memory_space<vmem>>, %arg3: memref<1x1x64xf32, #tpu.memory_space<vmem>>, %arg4: memref<1x8x16x64xf32, #tpu.memory_space<vmem>>) attributes {dimension_semantics = [#tpu.dimension_semantics<parallel>], iteration_bounds = array<i64: 2>, scalar_prefetch = 0 : i64, scratch_operands = 0 : i64, tpu.core_type = #tpu.core_type<tc>, window_params = [{transform_indices = @transform_0, window_bounds = array<i64: 1, 8, 16, 64>}, {pipeline_mode = #tpu.pipeline_mode<synchronous>, transform_indices = @transform_1, window_bounds = array<i64: 3, 3, 64>}, {pipeline_mode = #tpu.pipeline_mode<synchronous>, transform_indices = @transform_2, window_bounds = array<i64: 1, 1, 64>}, {transform_indices = @transform_3, window_bounds = array<i64: 1, 8, 16, 64>}]} {
    %c0 = arith.constant 0 : index
    %c0_0 = arith.constant 0 : index
    %c0_1 = arith.constant 0 : index
    %c0_2 = arith.constant 0 : index
    %0 = vector.load %arg1[%c0, %c0_0, %c0_1, %c0_2] : memref<1x8x16x64xf32, #tpu.memory_space<vmem>>, vector<1x8x16x64xf32>
    %1 = vector.shape_cast %0 : vector<1x8x16x64xf32> to vector<8x16x64xf32>
    %cst = arith.constant 0.000000e+00 : f32
    %2 = vector.broadcast %cst : f32 to vector<8x1x64xf32>
    %3 = vector.extract_strided_slice %1 {offsets = [0, 0, 0], sizes = [8, 15, 64], strides = [1, 1, 1]} : vector<8x16x64xf32> to vector<8x15x64xf32>
    %4 = tpu.concatenate %2, %3 in 1 : vector<8x1x64xf32>, vector<8x15x64xf32> -> vector<8x16x64xf32>
    %5 = vector.extract_strided_slice %1 {offsets = [0, 1, 0], sizes = [8, 15, 64], strides = [1, 1, 1]} : vector<8x16x64xf32> to vector<8x15x64xf32>
    %6 = tpu.concatenate %5, %2 in 1 : vector<8x15x64xf32>, vector<8x1x64xf32> -> vector<8x16x64xf32>
    %c0_3 = arith.constant 0 : index
    %c0_4 = arith.constant 0 : index
    %c0_5 = arith.constant 0 : index
    %7 = vector.load %arg2[%c0_3, %c0_4, %c0_5] : memref<3x3x64xf32, #tpu.memory_space<vmem>>, vector<1x1x64xf32>
    %8 = vector.broadcast %7 : vector<1x1x64xf32> to vector<8x16x64xf32>
    %9 = arith.mulf %4, %8 : vector<8x16x64xf32>
    %c0_6 = arith.constant 0 : index
    %c1 = arith.constant 1 : index
    %c0_7 = arith.constant 0 : index
    %10 = vector.load %arg2[%c0_6, %c1, %c0_7] : memref<3x3x64xf32, #tpu.memory_space<vmem>>, vector<1x1x64xf32>
    %11 = vector.broadcast %10 : vector<1x1x64xf32> to vector<8x16x64xf32>
    %12 = arith.mulf %1, %11 : vector<8x16x64xf32>
    %13 = arith.addf %9, %12 : vector<8x16x64xf32>
    %c0_8 = arith.constant 0 : index
    %c2 = arith.constant 2 : index
    %c0_9 = arith.constant 0 : index
    %14 = vector.load %arg2[%c0_8, %c2, %c0_9] : memref<3x3x64xf32, #tpu.memory_space<vmem>>, vector<1x1x64xf32>
    %15 = vector.broadcast %14 : vector<1x1x64xf32> to vector<8x16x64xf32>
    %16 = arith.mulf %6, %15 : vector<8x16x64xf32>
    %17 = arith.addf %13, %16 : vector<8x16x64xf32>
    %c1_10 = arith.constant 1 : index
    %c0_11 = arith.constant 0 : index
    %c0_12 = arith.constant 0 : index
    %18 = vector.load %arg2[%c1_10, %c0_11, %c0_12] : memref<3x3x64xf32, #tpu.memory_space<vmem>>, vector<1x1x64xf32>
    %19 = vector.broadcast %18 : vector<1x1x64xf32> to vector<8x16x64xf32>
    %20 = arith.mulf %4, %19 : vector<8x16x64xf32>
    %c1_13 = arith.constant 1 : index
    %c1_14 = arith.constant 1 : index
    %c0_15 = arith.constant 0 : index
    %21 = vector.load %arg2[%c1_13, %c1_14, %c0_15] : memref<3x3x64xf32, #tpu.memory_space<vmem>>, vector<1x1x64xf32>
    %22 = vector.broadcast %21 : vector<1x1x64xf32> to vector<8x16x64xf32>
    %23 = arith.mulf %1, %22 : vector<8x16x64xf32>
    %24 = arith.addf %20, %23 : vector<8x16x64xf32>
    %c1_16 = arith.constant 1 : index
    %c2_17 = arith.constant 2 : index
    %c0_18 = arith.constant 0 : index
    %25 = vector.load %arg2[%c1_16, %c2_17, %c0_18] : memref<3x3x64xf32, #tpu.memory_space<vmem>>, vector<1x1x64xf32>
    %26 = vector.broadcast %25 : vector<1x1x64xf32> to vector<8x16x64xf32>
    %27 = arith.mulf %6, %26 : vector<8x16x64xf32>
    %28 = arith.addf %24, %27 : vector<8x16x64xf32>
    %c2_19 = arith.constant 2 : index
    %c0_20 = arith.constant 0 : index
    %c0_21 = arith.constant 0 : index
    %29 = vector.load %arg2[%c2_19, %c0_20, %c0_21] : memref<3x3x64xf32, #tpu.memory_space<vmem>>, vector<1x1x64xf32>
    %30 = vector.broadcast %29 : vector<1x1x64xf32> to vector<8x16x64xf32>
    %31 = arith.mulf %4, %30 : vector<8x16x64xf32>
    %c2_22 = arith.constant 2 : index
    %c1_23 = arith.constant 1 : index
    %c0_24 = arith.constant 0 : index
    %32 = vector.load %arg2[%c2_22, %c1_23, %c0_24] : memref<3x3x64xf32, #tpu.memory_space<vmem>>, vector<1x1x64xf32>
    %33 = vector.broadcast %32 : vector<1x1x64xf32> to vector<8x16x64xf32>
    %34 = arith.mulf %1, %33 : vector<8x16x64xf32>
    %35 = arith.addf %31, %34 : vector<8x16x64xf32>
    %c2_25 = arith.constant 2 : index
    %c2_26 = arith.constant 2 : index
    %c0_27 = arith.constant 0 : index
    %36 = vector.load %arg2[%c2_25, %c2_26, %c0_27] : memref<3x3x64xf32, #tpu.memory_space<vmem>>, vector<1x1x64xf32>
    %37 = vector.broadcast %36 : vector<1x1x64xf32> to vector<8x16x64xf32>
    %38 = arith.mulf %6, %37 : vector<8x16x64xf32>
    %39 = arith.addf %35, %38 : vector<8x16x64xf32>
    %cst_28 = arith.constant 0.000000e+00 : f32
    %40 = vector.broadcast %cst_28 : f32 to vector<1x16x64xf32>
    %41 = vector.extract_strided_slice %17 {offsets = [0, 0, 0], sizes = [7, 16, 64], strides = [1, 1, 1]} : vector<8x16x64xf32> to vector<7x16x64xf32>
    %42 = tpu.concatenate %40, %41 in 0 : vector<1x16x64xf32>, vector<7x16x64xf32> -> vector<8x16x64xf32>
    %43 = arith.addf %42, %28 : vector<8x16x64xf32>
    %44 = vector.extract_strided_slice %39 {offsets = [1, 0, 0], sizes = [7, 16, 64], strides = [1, 1, 1]} : vector<8x16x64xf32> to vector<7x16x64xf32>
    %45 = tpu.concatenate %44, %40 in 0 : vector<7x16x64xf32>, vector<1x16x64xf32> -> vector<8x16x64xf32>
    %46 = arith.addf %43, %45 : vector<8x16x64xf32>
    %c0_29 = arith.constant 0 : index
    %c0_30 = arith.constant 0 : index
    %c0_31 = arith.constant 0 : index
    %47 = vector.load %arg3[%c0_29, %c0_30, %c0_31] : memref<1x1x64xf32, #tpu.memory_space<vmem>>, vector<1x1x64xf32>
    %48 = vector.broadcast %47 : vector<1x1x64xf32> to vector<8x16x64xf32>
    %49 = arith.addf %46, %48 : vector<8x16x64xf32>
    %50 = arith.negf %49 : vector<8x16x64xf32>
    %51 = math.exp %50 : vector<8x16x64xf32>
    %cst_32 = arith.constant 1.000000e+00 : f32
    %52 = vector.broadcast %cst_32 : f32 to vector<8x16x64xf32>
    %53 = arith.addf %52, %51 : vector<8x16x64xf32>
    %54 = arith.divf %52, %53 : vector<8x16x64xf32>
    %55 = arith.mulf %49, %54 : vector<8x16x64xf32>
    %c0_33 = arith.constant 0 : index
    %c0_34 = arith.constant 0 : index
    %c0_35 = arith.constant 0 : index
    %c0_36 = arith.constant 0 : index
    %56 = vector.load %arg4[%c0_33, %c0_34, %c0_35, %c0_36] : memref<1x8x16x64xf32, #tpu.memory_space<vmem>>, vector<1x8x16x64xf32>
    %57 = vector.shape_cast %56 : vector<1x8x16x64xf32> to vector<8x16x64xf32>
    %58 = vector.shape_cast %55 : vector<8x16x64xf32> to vector<1x8x16x64xf32>
    tpu.vector_store %arg4[%c0_33, %c0_34, %c0_35, %c0_36], %58 {strides = array<i32>} : memref<1x8x16x64xf32, #tpu.memory_space<vmem>>, vector<1x8x16x64xf32>,
    return
  }
  func.func @transform_0(%arg0: i32) -> (i32, i32, i32, i32) {
    %c0_i32 = arith.constant 0 : i32
    %c0_i32_0 = arith.constant 0 : i32
    %c0_i32_1 = arith.constant 0 : i32
    %c0_i32_2 = arith.constant 0 : i32
    return %arg0, %c0_i32, %c0_i32_0, %c0_i32_1 : i32, i32, i32, i32
  }
  func.func @transform_1(%arg0: i32) -> (i32, i32, i32) {
    %c0_i32 = arith.constant 0 : i32
    %c0_i32_0 = arith.constant 0 : i32
    %c0_i32_1 = arith.constant 0 : i32
    %c0_i32_2 = arith.constant 0 : i32
    return %c0_i32, %c0_i32_0, %c0_i32_1 : i32, i32, i32
  }
  func.func @transform_2(%arg0: i32) -> (i32, i32, i32) {
    %c0_i32 = arith.constant 0 : i32
    %c0_i32_0 = arith.constant 0 : i32
    %c0_i32_1 = arith.constant 0 : i32
    %c0_i32_2 = arith.constant 0 : i32
    return %c0_i32, %c0_i32_0, %c0_i32_1 : i32, i32, i32
  }
  func.func @transform_3(%arg0: i32) -> (i32, i32, i32, i32) {
    %c0_i32 = arith.constant 0 : i32
    %c0_i32_0 = arith.constant 0 : i32
    %c0_i32_1 = arith.constant 0 : i32
    %c0_i32_2 = arith.constant 0 : i32
    return %arg0, %c0_i32, %c0_i32_0, %c0_i32_1 : i32, i32, i32, i32
  }
}

module attributes {stable_mosaic.version = 11 : i64} {
  func.func @_scan_kernel(%arg0: i32, %arg1: i32, %arg2: memref<1x1x128x64xf32, #tpu.memory_space<vmem>>, %arg3: memref<1x2x64x96xbf16, #tpu.memory_space<vmem>>, %arg4: memref<1x2x1x64xf32, #tpu.memory_space<vmem>>, %arg5: memref<1x2x16x64xf32, #tpu.memory_space<vmem>>, %arg6: memref<1x2x1x64xf32, #tpu.memory_space<vmem>>, %arg7: memref<1x1x128x64xf32, #tpu.memory_space<vmem>>) attributes {dimension_semantics = [#tpu.dimension_semantics<parallel>, #tpu.dimension_semantics<parallel>], iteration_bounds = array<i64: 2, 2>, scalar_prefetch = 0 : i64, scratch_operands = 0 : i64, tpu.core_type = #tpu.core_type<tc>, window_params = [{transform_indices = @transform_0, window_bounds = array<i64: 1, 1, 128, 64>}, {transform_indices = @transform_1, window_bounds = array<i64: 1, 2, 64, 96>}, {transform_indices = @transform_2, window_bounds = array<i64: 1, 2, 1, 64>}, {transform_indices = @transform_3, window_bounds = array<i64: 1, 2, 16, 64>}, {transform_indices = @transform_4, window_bounds = array<i64: 1, 2, 1, 64>}, {transform_indices = @transform_5, window_bounds = array<i64: 1, 1, 128, 64>}]} {
    %c0 = arith.constant 0 : index
    %c0_0 = arith.constant 0 : index
    %c0_1 = arith.constant 0 : index
    %c0_2 = arith.constant 0 : index
    %0 = vector.load %arg3[%c0, %c0_0, %c0_1, %c0_2] : memref<1x2x64x96xbf16, #tpu.memory_space<vmem>>, vector<1x1x64x96xbf16>
    %1 = vector.shape_cast %0 : vector<1x1x64x96xbf16> to vector<64x96xbf16>
    %c0_3 = arith.constant 0 : index
    %c0_4 = arith.constant 0 : index
    %c0_5 = arith.constant 0 : index
    %c0_6 = arith.constant 0 : index
    %2 = vector.load %arg5[%c0_3, %c0_4, %c0_5, %c0_6] : memref<1x2x16x64xf32, #tpu.memory_space<vmem>>, vector<1x1x16x64xf32>
    %3 = vector.shape_cast %2 : vector<1x1x16x64xf32> to vector<16x64xf32>
    %c0_7 = arith.constant 0 : index
    %c0_8 = arith.constant 0 : index
    %c0_9 = arith.constant 0 : index
    %c0_10 = arith.constant 0 : index
    %4 = vector.load %arg4[%c0_7, %c0_8, %c0_9, %c0_10] : memref<1x2x1x64xf32, #tpu.memory_space<vmem>>, vector<1x1x1x64xf32>
    %5 = vector.shape_cast %4 : vector<1x1x1x64xf32> to vector<1x64xf32>
    %c0_11 = arith.constant 0 : index
    %c0_12 = arith.constant 0 : index
    %c0_13 = arith.constant 0 : index
    %c0_14 = arith.constant 0 : index
    %6 = vector.load %arg6[%c0_11, %c0_12, %c0_13, %c0_14] : memref<1x2x1x64xf32, #tpu.memory_space<vmem>>, vector<1x1x1x64xf32>
    %7 = vector.shape_cast %6 : vector<1x1x1x64xf32> to vector<1x64xf32>
    %cst = arith.constant 0.000000e+00 : f32
    %8 = vector.broadcast %cst : f32 to vector<16x64xf32>
    %c0_i32 = arith.constant 0 : i32
    %c8_i32 = arith.constant 8 : i32
    %9 = arith.addi %c0_i32, %c8_i32 : i32
    %c1_i32 = arith.constant 1 : i32
    %10 = scf.for %arg8 = %c0_i32 to %9 step %c1_i32 iter_args(%arg9 = %8) -> (vector<16x64xf32>)  : i32 {
      %c16_i32 = arith.constant 16 : i32
      %22 = arith.muli %arg8, %c16_i32 : i32
      %23 = tpu.assume_multiple %22, 16 : i32
      %c0_36 = arith.constant 0 : index
      %c0_37 = arith.constant 0 : index
      %24 = arith.index_cast %23 : i32 to index
      %c0_38 = arith.constant 0 : index
      %25 = vector.load %arg2[%c0_36, %c0_37, %24, %c0_38] : memref<1x1x128x64xf32, #tpu.memory_space<vmem>>, vector<1x1x16x64xf32>
      %26 = vector.shape_cast %25 : vector<1x1x16x64xf32> to vector<16x64xf32>
      %27 = arith.truncf %26 : vector<16x64xf32> to vector<16x64xbf16>
      %cst_39 = arith.constant dense<0.000000e+00> : vector<16x96xf32>
      %28 = tpu.matmul %27, %1, %cst_39 {dimension_numbers = #tpu.dot_dimension_numbers<[1], [0], [0], [1], [0, 0, 1, 1], [], []>} : vector<16x64xbf16>, vector<64x96xbf16>, vector<16x96xf32> -> vector<16x96xf32>
      %29 = vector.extract_strided_slice %28 {offsets = [0, 0], sizes = [16, 64], strides = [1, 1]} : vector<16x96xf32> to vector<16x64xf32>
      %30 = vector.broadcast %5 : vector<1x64xf32> to vector<16x64xf32>
      %31 = arith.addf %29, %30 : vector<16x64xf32>
      %cst_40 = arith.constant 0.000000e+00 : f32
      %32 = vector.broadcast %cst_40 : f32 to vector<16x64xf32>
      %33 = arith.maximumf %31, %32 : vector<16x64xf32>
      %34 = vector.broadcast %cst_40 : f32 to vector<16x64xf32>
      %35 = arith.subf %31, %34 : vector<16x64xf32>
      %36 = arith.cmpf one, %35, %35 : vector<16x64xf32>
      %37 = vector.broadcast %cst_40 : f32 to vector<16x64xf32>
      %38 = arith.addf %31, %37 : vector<16x64xf32>
      %39 = math.absf %35 : vector<16x64xf32>
      %cst_41 = arith.constant 0.000000e+00 : f32
      %40 = vector.broadcast %cst_41 : f32 to vector<16x64xf32>
      %41 = arith.subf %40, %39 : vector<16x64xf32>
      %42 = math.exp %41 : vector<16x64xf32>
      %43 = math.log1p %42 : vector<16x64xf32>
      %44 = arith.addf %33, %43 : vector<16x64xf32>
      %45 = arith.select %36, %38, %44 : vector<16x64xi1>, vector<16x64xf32>
      %46 = vector.extract_strided_slice %28 {offsets = [0, 64], sizes = [16, 16], strides = [1, 1]} : vector<16x96xf32> to vector<16x16xf32>
      %47 = vector.shape_cast %46 : vector<16x16xf32> to vector<16x16x1xf32>
      %48 = vector.extract_strided_slice %28 {offsets = [0, 80], sizes = [16, 16], strides = [1, 1]} : vector<16x96xf32> to vector<16x16xf32>
      %49 = vector.shape_cast %48 : vector<16x16xf32> to vector<16x16x1xf32>
      %50 = vector.extract_strided_slice %45 {offsets = [0, 0], sizes = [1, 64], strides = [1, 1]} : vector<16x64xf32> to vector<1x64xf32>
      %51 = vector.broadcast %50 : vector<1x64xf32> to vector<16x64xf32>
      %52 = arith.mulf %51, %3 : vector<16x64xf32>
      %53 = math.exp %52 : vector<16x64xf32>
      %54 = vector.extract_strided_slice %45 {offsets = [0, 0], sizes = [1, 64], strides = [1, 1]} : vector<16x64xf32> to vector<1x64xf32>
      %55 = vector.extract_strided_slice %26 {offsets = [0, 0], sizes = [1, 64], strides = [1, 1]} : vector<16x64xf32> to vector<1x64xf32>
      %56 = arith.mulf %54, %55 : vector<1x64xf32>
      %57 = vector.extract_strided_slice %47 {offsets = [0, 0, 0], sizes = [1, 16, 1], strides = [1, 1, 1]} : vector<16x16x1xf32> to vector<1x16x1xf32>
      %58 = vector.shape_cast %57 : vector<1x16x1xf32> to vector<16x1xf32>
      %59 = vector.broadcast %56 : vector<1x64xf32> to vector<16x64xf32>
      %60 = vector.broadcast %58 : vector<16x1xf32> to vector<16x64xf32>
      %61 = arith.mulf %59, %60 : vector<16x64xf32>
      %62 = arith.mulf %53, %arg9 : vector<16x64xf32>
      %63 = arith.addf %62, %61 : vector<16x64xf32>
      %64 = vector.extract_strided_slice %49 {offsets = [0, 0, 0], sizes = [1, 16, 1], strides = [1, 1, 1]} : vector<16x16x1xf32> to vector<1x16x1xf32>
      %65 = vector.shape_cast %64 : vector<1x16x1xf32> to vector<16x1xf32>
      %66 = vector.broadcast %65 : vector<16x1xf32> to vector<16x64xf32>
      %67 = arith.mulf %63, %66 : vector<16x64xf32>
      %cst_42 = arith.constant dense<0.000000e+00> : vector<64xf32>
      %68 = vector.multi_reduction <add>, %67, %cst_42 [0] : vector<16x64xf32> to vector<64xf32>
      %69 = vector.shape_cast %68 : vector<64xf32> to vector<1x64xf32>
      %70 = vector.extract_strided_slice %45 {offsets = [1, 0], sizes = [1, 64], strides = [1, 1]} : vector<16x64xf32> to vector<1x64xf32>
      %71 = vector.broadcast %70 : vector<1x64xf32> to vector<16x64xf32>
      %72 = arith.mulf %71, %3 : vector<16x64xf32>
      %73 = math.exp %72 : vector<16x64xf32>
      %74 = vector.extract_strided_slice %45 {offsets = [1, 0], sizes = [1, 64], strides = [1, 1]} : vector<16x64xf32> to vector<1x64xf32>
      %75 = vector.extract_strided_slice %26 {offsets = [1, 0], sizes = [1, 64], strides = [1, 1]} : vector<16x64xf32> to vector<1x64xf32>
      %76 = arith.mulf %74, %75 : vector<1x64xf32>
      %77 = vector.extract_strided_slice %47 {offsets = [1, 0, 0], sizes = [1, 16, 1], strides = [1, 1, 1]} : vector<16x16x1xf32> to vector<1x16x1xf32>
      %78 = vector.shape_cast %77 : vector<1x16x1xf32> to vector<16x1xf32>
      %79 = vector.broadcast %76 : vector<1x64xf32> to vector<16x64xf32>
      %80 = vector.broadcast %78 : vector<16x1xf32> to vector<16x64xf32>
      %81 = arith.mulf %79, %80 : vector<16x64xf32>
      %82 = arith.mulf %73, %63 : vector<16x64xf32>
      %83 = arith.addf %82, %81 : vector<16x64xf32>
      %84 = vector.extract_strided_slice %49 {offsets = [1, 0, 0], sizes = [1, 16, 1], strides = [1, 1, 1]} : vector<16x16x1xf32> to vector<1x16x1xf32>
      %85 = vector.shape_cast %84 : vector<1x16x1xf32> to vector<16x1xf32>
      %86 = vector.broadcast %85 : vector<16x1xf32> to vector<16x64xf32>
      %87 = arith.mulf %83, %86 : vector<16x64xf32>
      %cst_43 = arith.constant dense<0.000000e+00> : vector<64xf32>
      %88 = vector.multi_reduction <add>, %87, %cst_43 [0] : vector<16x64xf32> to vector<64xf32>
      %89 = vector.shape_cast %88 : vector<64xf32> to vector<1x64xf32>
      %90 = vector.extract_strided_slice %45 {offsets = [2, 0], sizes = [1, 64], strides = [1, 1]} : vector<16x64xf32> to vector<1x64xf32>
      %91 = vector.broadcast %90 : vector<1x64xf32> to vector<16x64xf32>
      %92 = arith.mulf %91, %3 : vector<16x64xf32>
      %93 = math.exp %92 : vector<16x64xf32>
      %94 = vector.extract_strided_slice %45 {offsets = [2, 0], sizes = [1, 64], strides = [1, 1]} : vector<16x64xf32> to vector<1x64xf32>
      %95 = vector.extract_strided_slice %26 {offsets = [2, 0], sizes = [1, 64], strides = [1, 1]} : vector<16x64xf32> to vector<1x64xf32>
      %96 = arith.mulf %94, %95 : vector<1x64xf32>
      %97 = vector.extract_strided_slice %47 {offsets = [2, 0, 0], sizes = [1, 16, 1], strides = [1, 1, 1]} : vector<16x16x1xf32> to vector<1x16x1xf32>
      %98 = vector.shape_cast %97 : vector<1x16x1xf32> to vector<16x1xf32>
      %99 = vector.broadcast %96 : vector<1x64xf32> to vector<16x64xf32>
      %100 = vector.broadcast %98 : vector<16x1xf32> to vector<16x64xf32>
      %101 = arith.mulf %99, %100 : vector<16x64xf32>
      %102 = arith.mulf %93, %83 : vector<16x64xf32>
      %103 = arith.addf %102, %101 : vector<16x64xf32>
      %104 = vector.extract_strided_slice %49 {offsets = [2, 0, 0], sizes = [1, 16, 1], strides = [1, 1, 1]} : vector<16x16x1xf32> to vector<1x16x1xf32>
      %105 = vector.shape_cast %104 : vector<1x16x1xf32> to vector<16x1xf32>
      %106 = vector.broadcast %105 : vector<16x1xf32> to vector<16x64xf32>
      %107 = arith.mulf %103, %106 : vector<16x64xf32>
      %cst_44 = arith.constant dense<0.000000e+00> : vector<64xf32>
      %108 = vector.multi_reduction <add>, %107, %cst_44 [0] : vector<16x64xf32> to vector<64xf32>
      %109 = vector.shape_cast %108 : vector<64xf32> to vector<1x64xf32>
      %110 = vector.extract_strided_slice %45 {offsets = [3, 0], sizes = [1, 64], strides = [1, 1]} : vector<16x64xf32> to vector<1x64xf32>
      %111 = vector.broadcast %110 : vector<1x64xf32> to vector<16x64xf32>
      %112 = arith.mulf %111, %3 : vector<16x64xf32>
      %113 = math.exp %112 : vector<16x64xf32>
      %114 = vector.extract_strided_slice %45 {offsets = [3, 0], sizes = [1, 64], strides = [1, 1]} : vector<16x64xf32> to vector<1x64xf32>
      %115 = vector.extract_strided_slice %26 {offsets = [3, 0], sizes = [1, 64], strides = [1, 1]} : vector<16x64xf32> to vector<1x64xf32>
      %116 = arith.mulf %114, %115 : vector<1x64xf32>
      %117 = vector.extract_strided_slice %47 {offsets = [3, 0, 0], sizes = [1, 16, 1], strides = [1, 1, 1]} : vector<16x16x1xf32> to vector<1x16x1xf32>
      %118 = vector.shape_cast %117 : vector<1x16x1xf32> to vector<16x1xf32>
      %119 = vector.broadcast %116 : vector<1x64xf32> to vector<16x64xf32>
      %120 = vector.broadcast %118 : vector<16x1xf32> to vector<16x64xf32>
      %121 = arith.mulf %119, %120 : vector<16x64xf32>
      %122 = arith.mulf %113, %103 : vector<16x64xf32>
      %123 = arith.addf %122, %121 : vector<16x64xf32>
      %124 = vector.extract_strided_slice %49 {offsets = [3, 0, 0], sizes = [1, 16, 1], strides = [1, 1, 1]} : vector<16x16x1xf32> to vector<1x16x1xf32>
      %125 = vector.shape_cast %124 : vector<1x16x1xf32> to vector<16x1xf32>
      %126 = vector.broadcast %125 : vector<16x1xf32> to vector<16x64xf32>
      %127 = arith.mulf %123, %126 : vector<16x64xf32>
      %cst_45 = arith.constant dense<0.000000e+00> : vector<64xf32>
      %128 = vector.multi_reduction <add>, %127, %cst_45 [0] : vector<16x64xf32> to vector<64xf32>
      %129 = vector.shape_cast %128 : vector<64xf32> to vector<1x64xf32>
      %130 = vector.extract_strided_slice %45 {offsets = [4, 0], sizes = [1, 64], strides = [1, 1]} : vector<16x64xf32> to vector<1x64xf32>
      %131 = vector.broadcast %130 : vector<1x64xf32> to vector<16x64xf32>
      %132 = arith.mulf %131, %3 : vector<16x64xf32>
      %133 = math.exp %132 : vector<16x64xf32>
      %134 = vector.extract_strided_slice %45 {offsets = [4, 0], sizes = [1, 64], strides = [1, 1]} : vector<16x64xf32> to vector<1x64xf32>
      %135 = vector.extract_strided_slice %26 {offsets = [4, 0], sizes = [1, 64], strides = [1, 1]} : vector<16x64xf32> to vector<1x64xf32>
      %136 = arith.mulf %134, %135 : vector<1x64xf32>
      %137 = vector.extract_strided_slice %47 {offsets = [4, 0, 0], sizes = [1, 16, 1], strides = [1, 1, 1]} : vector<16x16x1xf32> to vector<1x16x1xf32>
      %138 = vector.shape_cast %137 : vector<1x16x1xf32> to vector<16x1xf32>
      %139 = vector.broadcast %136 : vector<1x64xf32> to vector<16x64xf32>
      %140 = vector.broadcast %138 : vector<16x1xf32> to vector<16x64xf32>
      %141 = arith.mulf %139, %140 : vector<16x64xf32>
      %142 = arith.mulf %133, %123 : vector<16x64xf32>
      %143 = arith.addf %142, %141 : vector<16x64xf32>
      %144 = vector.extract_strided_slice %49 {offsets = [4, 0, 0], sizes = [1, 16, 1], strides = [1, 1, 1]} : vector<16x16x1xf32> to vector<1x16x1xf32>
      %145 = vector.shape_cast %144 : vector<1x16x1xf32> to vector<16x1xf32>
      %146 = vector.broadcast %145 : vector<16x1xf32> to vector<16x64xf32>
      %147 = arith.mulf %143, %146 : vector<16x64xf32>
      %cst_46 = arith.constant dense<0.000000e+00> : vector<64xf32>
      %148 = vector.multi_reduction <add>, %147, %cst_46 [0] : vector<16x64xf32> to vector<64xf32>
      %149 = vector.shape_cast %148 : vector<64xf32> to vector<1x64xf32>
      %150 = vector.extract_strided_slice %45 {offsets = [5, 0], sizes = [1, 64], strides = [1, 1]} : vector<16x64xf32> to vector<1x64xf32>
      %151 = vector.broadcast %150 : vector<1x64xf32> to vector<16x64xf32>
      %152 = arith.mulf %151, %3 : vector<16x64xf32>
      %153 = math.exp %152 : vector<16x64xf32>
      %154 = vector.extract_strided_slice %45 {offsets = [5, 0], sizes = [1, 64], strides = [1, 1]} : vector<16x64xf32> to vector<1x64xf32>
      %155 = vector.extract_strided_slice %26 {offsets = [5, 0], sizes = [1, 64], strides = [1, 1]} : vector<16x64xf32> to vector<1x64xf32>
      %156 = arith.mulf %154, %155 : vector<1x64xf32>
      %157 = vector.extract_strided_slice %47 {offsets = [5, 0, 0], sizes = [1, 16, 1], strides = [1, 1, 1]} : vector<16x16x1xf32> to vector<1x16x1xf32>
      %158 = vector.shape_cast %157 : vector<1x16x1xf32> to vector<16x1xf32>
      %159 = vector.broadcast %156 : vector<1x64xf32> to vector<16x64xf32>
      %160 = vector.broadcast %158 : vector<16x1xf32> to vector<16x64xf32>
      %161 = arith.mulf %159, %160 : vector<16x64xf32>
      %162 = arith.mulf %153, %143 : vector<16x64xf32>
      %163 = arith.addf %162, %161 : vector<16x64xf32>
      %164 = vector.extract_strided_slice %49 {offsets = [5, 0, 0], sizes = [1, 16, 1], strides = [1, 1, 1]} : vector<16x16x1xf32> to vector<1x16x1xf32>
      %165 = vector.shape_cast %164 : vector<1x16x1xf32> to vector<16x1xf32>
      %166 = vector.broadcast %165 : vector<16x1xf32> to vector<16x64xf32>
      %167 = arith.mulf %163, %166 : vector<16x64xf32>
      %cst_47 = arith.constant dense<0.000000e+00> : vector<64xf32>
      %168 = vector.multi_reduction <add>, %167, %cst_47 [0] : vector<16x64xf32> to vector<64xf32>
      %169 = vector.shape_cast %168 : vector<64xf32> to vector<1x64xf32>
      %170 = vector.extract_strided_slice %45 {offsets = [6, 0], sizes = [1, 64], strides = [1, 1]} : vector<16x64xf32> to vector<1x64xf32>
      %171 = vector.broadcast %170 : vector<1x64xf32> to vector<16x64xf32>
      %172 = arith.mulf %171, %3 : vector<16x64xf32>
      %173 = math.exp %172 : vector<16x64xf32>
      %174 = vector.extract_strided_slice %45 {offsets = [6, 0], sizes = [1, 64], strides = [1, 1]} : vector<16x64xf32> to vector<1x64xf32>
      %175 = vector.extract_strided_slice %26 {offsets = [6, 0], sizes = [1, 64], strides = [1, 1]} : vector<16x64xf32> to vector<1x64xf32>
      %176 = arith.mulf %174, %175 : vector<1x64xf32>
      %177 = vector.extract_strided_slice %47 {offsets = [6, 0, 0], sizes = [1, 16, 1], strides = [1, 1, 1]} : vector<16x16x1xf32> to vector<1x16x1xf32>
      %178 = vector.shape_cast %177 : vector<1x16x1xf32> to vector<16x1xf32>
      %179 = vector.broadcast %176 : vector<1x64xf32> to vector<16x64xf32>
      %180 = vector.broadcast %178 : vector<16x1xf32> to vector<16x64xf32>
      %181 = arith.mulf %179, %180 : vector<16x64xf32>
      %182 = arith.mulf %173, %163 : vector<16x64xf32>
      %183 = arith.addf %182, %181 : vector<16x64xf32>
      %184 = vector.extract_strided_slice %49 {offsets = [6, 0, 0], sizes = [1, 16, 1], strides = [1, 1, 1]} : vector<16x16x1xf32> to vector<1x16x1xf32>
      %185 = vector.shape_cast %184 : vector<1x16x1xf32> to vector<16x1xf32>
      %186 = vector.broadcast %185 : vector<16x1xf32> to vector<16x64xf32>
      %187 = arith.mulf %183, %186 : vector<16x64xf32>
      %cst_48 = arith.constant dense<0.000000e+00> : vector<64xf32>
      %188 = vector.multi_reduction <add>, %187, %cst_48 [0] : vector<16x64xf32> to vector<64xf32>
      %189 = vector.shape_cast %188 : vector<64xf32> to vector<1x64xf32>
      %190 = vector.extract_strided_slice %45 {offsets = [7, 0], sizes = [1, 64], strides = [1, 1]} : vector<16x64xf32> to vector<1x64xf32>
      %191 = vector.broadcast %190 : vector<1x64xf32> to vector<16x64xf32>
      %192 = arith.mulf %191, %3 : vector<16x64xf32>
      %193 = math.exp %192 : vector<16x64xf32>
      %194 = vector.extract_strided_slice %45 {offsets = [7, 0], sizes = [1, 64], strides = [1, 1]} : vector<16x64xf32> to vector<1x64xf32>
      %195 = vector.extract_strided_slice %26 {offsets = [7, 0], sizes = [1, 64], strides = [1, 1]} : vector<16x64xf32> to vector<1x64xf32>
      %196 = arith.mulf %194, %195 : vector<1x64xf32>
      %197 = vector.extract_strided_slice %47 {offsets = [7, 0, 0], sizes = [1, 16, 1], strides = [1, 1, 1]} : vector<16x16x1xf32> to vector<1x16x1xf32>
      %198 = vector.shape_cast %197 : vector<1x16x1xf32> to vector<16x1xf32>
      %199 = vector.broadcast %196 : vector<1x64xf32> to vector<16x64xf32>
      %200 = vector.broadcast %198 : vector<16x1xf32> to vector<16x64xf32>
      %201 = arith.mulf %199, %200 : vector<16x64xf32>
      %202 = arith.mulf %193, %183 : vector<16x64xf32>
      %203 = arith.addf %202, %201 : vector<16x64xf32>
      %204 = vector.extract_strided_slice %49 {offsets = [7, 0, 0], sizes = [1, 16, 1], strides = [1, 1, 1]} : vector<16x16x1xf32> to vector<1x16x1xf32>
      %205 = vector.shape_cast %204 : vector<1x16x1xf32> to vector<16x1xf32>
      %206 = vector.broadcast %205 : vector<16x1xf32> to vector<16x64xf32>
      %207 = arith.mulf %203, %206 : vector<16x64xf32>
      %cst_49 = arith.constant dense<0.000000e+00> : vector<64xf32>
      %208 = vector.multi_reduction <add>, %207, %cst_49 [0] : vector<16x64xf32> to vector<64xf32>
      %209 = vector.shape_cast %208 : vector<64xf32> to vector<1x64xf32>
      %210 = vector.extract_strided_slice %45 {offsets = [8, 0], sizes = [1, 64], strides = [1, 1]} : vector<16x64xf32> to vector<1x64xf32>
      %211 = vector.broadcast %210 : vector<1x64xf32> to vector<16x64xf32>
      %212 = arith.mulf %211, %3 : vector<16x64xf32>
      %213 = math.exp %212 : vector<16x64xf32>
      %214 = vector.extract_strided_slice %45 {offsets = [8, 0], sizes = [1, 64], strides = [1, 1]} : vector<16x64xf32> to vector<1x64xf32>
      %215 = vector.extract_strided_slice %26 {offsets = [8, 0], sizes = [1, 64], strides = [1, 1]} : vector<16x64xf32> to vector<1x64xf32>
      %216 = arith.mulf %214, %215 : vector<1x64xf32>
      %217 = vector.extract_strided_slice %47 {offsets = [8, 0, 0], sizes = [1, 16, 1], strides = [1, 1, 1]} : vector<16x16x1xf32> to vector<1x16x1xf32>
      %218 = vector.shape_cast %217 : vector<1x16x1xf32> to vector<16x1xf32>
      %219 = vector.broadcast %216 : vector<1x64xf32> to vector<16x64xf32>
      %220 = vector.broadcast %218 : vector<16x1xf32> to vector<16x64xf32>
      %221 = arith.mulf %219, %220 : vector<16x64xf32>
      %222 = arith.mulf %213, %203 : vector<16x64xf32>
      %223 = arith.addf %222, %221 : vector<16x64xf32>
      %224 = vector.extract_strided_slice %49 {offsets = [8, 0, 0], sizes = [1, 16, 1], strides = [1, 1, 1]} : vector<16x16x1xf32> to vector<1x16x1xf32>
      %225 = vector.shape_cast %224 : vector<1x16x1xf32> to vector<16x1xf32>
      %226 = vector.broadcast %225 : vector<16x1xf32> to vector<16x64xf32>
      %227 = arith.mulf %223, %226 : vector<16x64xf32>
      %cst_50 = arith.constant dense<0.000000e+00> : vector<64xf32>
      %228 = vector.multi_reduction <add>, %227, %cst_50 [0] : vector<16x64xf32> to vector<64xf32>
      %229 = vector.shape_cast %228 : vector<64xf32> to vector<1x64xf32>
      %230 = vector.extract_strided_slice %45 {offsets = [9, 0], sizes = [1, 64], strides = [1, 1]} : vector<16x64xf32> to vector<1x64xf32>
      %231 = vector.broadcast %230 : vector<1x64xf32> to vector<16x64xf32>
      %232 = arith.mulf %231, %3 : vector<16x64xf32>
      %233 = math.exp %232 : vector<16x64xf32>
      %234 = vector.extract_strided_slice %45 {offsets = [9, 0], sizes = [1, 64], strides = [1, 1]} : vector<16x64xf32> to vector<1x64xf32>
      %235 = vector.extract_strided_slice %26 {offsets = [9, 0], sizes = [1, 64], strides = [1, 1]} : vector<16x64xf32> to vector<1x64xf32>
      %236 = arith.mulf %234, %235 : vector<1x64xf32>
      %237 = vector.extract_strided_slice %47 {offsets = [9, 0, 0], sizes = [1, 16, 1], strides = [1, 1, 1]} : vector<16x16x1xf32> to vector<1x16x1xf32>
      %238 = vector.shape_cast %237 : vector<1x16x1xf32> to vector<16x1xf32>
      %239 = vector.broadcast %236 : vector<1x64xf32> to vector<16x64xf32>
      %240 = vector.broadcast %238 : vector<16x1xf32> to vector<16x64xf32>
      %241 = arith.mulf %239, %240 : vector<16x64xf32>
      %242 = arith.mulf %233, %223 : vector<16x64xf32>
      %243 = arith.addf %242, %241 : vector<16x64xf32>
      %244 = vector.extract_strided_slice %49 {offsets = [9, 0, 0], sizes = [1, 16, 1], strides = [1, 1, 1]} : vector<16x16x1xf32> to vector<1x16x1xf32>
      %245 = vector.shape_cast %244 : vector<1x16x1xf32> to vector<16x1xf32>
      %246 = vector.broadcast %245 : vector<16x1xf32> to vector<16x64xf32>
      %247 = arith.mulf %243, %246 : vector<16x64xf32>
      %cst_51 = arith.constant dense<0.000000e+00> : vector<64xf32>
      %248 = vector.multi_reduction <add>, %247, %cst_51 [0] : vector<16x64xf32> to vector<64xf32>
      %249 = vector.shape_cast %248 : vector<64xf32> to vector<1x64xf32>
      %250 = vector.extract_strided_slice %45 {offsets = [10, 0], sizes = [1, 64], strides = [1, 1]} : vector<16x64xf32> to vector<1x64xf32>
      %251 = vector.broadcast %250 : vector<1x64xf32> to vector<16x64xf32>
      %252 = arith.mulf %251, %3 : vector<16x64xf32>
      %253 = math.exp %252 : vector<16x64xf32>
      %254 = vector.extract_strided_slice %45 {offsets = [10, 0], sizes = [1, 64], strides = [1, 1]} : vector<16x64xf32> to vector<1x64xf32>
      %255 = vector.extract_strided_slice %26 {offsets = [10, 0], sizes = [1, 64], strides = [1, 1]} : vector<16x64xf32> to vector<1x64xf32>
      %256 = arith.mulf %254, %255 : vector<1x64xf32>
      %257 = vector.extract_strided_slice %47 {offsets = [10, 0, 0], sizes = [1, 16, 1], strides = [1, 1, 1]} : vector<16x16x1xf32> to vector<1x16x1xf32>
      %258 = vector.shape_cast %257 : vector<1x16x1xf32> to vector<16x1xf32>
      %259 = vector.broadcast %256 : vector<1x64xf32> to vector<16x64xf32>
      %260 = vector.broadcast %258 : vector<16x1xf32> to vector<16x64xf32>
      %261 = arith.mulf %259, %260 : vector<16x64xf32>
      %262 = arith.mulf %253, %243 : vector<16x64xf32>
      %263 = arith.addf %262, %261 : vector<16x64xf32>
      %264 = vector.extract_strided_slice %49 {offsets = [10, 0, 0], sizes = [1, 16, 1], strides = [1, 1, 1]} : vector<16x16x1xf32> to vector<1x16x1xf32>
      %265 = vector.shape_cast %264 : vector<1x16x1xf32> to vector<16x1xf32>
      %266 = vector.broadcast %265 : vector<16x1xf32> to vector<16x64xf32>
      %267 = arith.mulf %263, %266 : vector<16x64xf32>
      %cst_52 = arith.constant dense<0.000000e+00> : vector<64xf32>
      %268 = vector.multi_reduction <add>, %267, %cst_52 [0] : vector<16x64xf32> to vector<64xf32>
      %269 = vector.shape_cast %268 : vector<64xf32> to vector<1x64xf32>
      %270 = vector.extract_strided_slice %45 {offsets = [11, 0], sizes = [1, 64], strides = [1, 1]} : vector<16x64xf32> to vector<1x64xf32>
      %271 = vector.broadcast %270 : vector<1x64xf32> to vector<16x64xf32>
      %272 = arith.mulf %271, %3 : vector<16x64xf32>
      %273 = math.exp %272 : vector<16x64xf32>
      %274 = vector.extract_strided_slice %45 {offsets = [11, 0], sizes = [1, 64], strides = [1, 1]} : vector<16x64xf32> to vector<1x64xf32>
      %275 = vector.extract_strided_slice %26 {offsets = [11, 0], sizes = [1, 64], strides = [1, 1]} : vector<16x64xf32> to vector<1x64xf32>
      %276 = arith.mulf %274, %275 : vector<1x64xf32>
      %277 = vector.extract_strided_slice %47 {offsets = [11, 0, 0], sizes = [1, 16, 1], strides = [1, 1, 1]} : vector<16x16x1xf32> to vector<1x16x1xf32>
      %278 = vector.shape_cast %277 : vector<1x16x1xf32> to vector<16x1xf32>
      %279 = vector.broadcast %276 : vector<1x64xf32> to vector<16x64xf32>
      %280 = vector.broadcast %278 : vector<16x1xf32> to vector<16x64xf32>
      %281 = arith.mulf %279, %280 : vector<16x64xf32>
      %282 = arith.mulf %273, %263 : vector<16x64xf32>
      %283 = arith.addf %282, %281 : vector<16x64xf32>
      %284 = vector.extract_strided_slice %49 {offsets = [11, 0, 0], sizes = [1, 16, 1], strides = [1, 1, 1]} : vector<16x16x1xf32> to vector<1x16x1xf32>
      %285 = vector.shape_cast %284 : vector<1x16x1xf32> to vector<16x1xf32>
      %286 = vector.broadcast %285 : vector<16x1xf32> to vector<16x64xf32>
      %287 = arith.mulf %283, %286 : vector<16x64xf32>
      %cst_53 = arith.constant dense<0.000000e+00> : vector<64xf32>
      %288 = vector.multi_reduction <add>, %287, %cst_53 [0] : vector<16x64xf32> to vector<64xf32>
      %289 = vector.shape_cast %288 : vector<64xf32> to vector<1x64xf32>
      %290 = vector.extract_strided_slice %45 {offsets = [12, 0], sizes = [1, 64], strides = [1, 1]} : vector<16x64xf32> to vector<1x64xf32>
      %291 = vector.broadcast %290 : vector<1x64xf32> to vector<16x64xf32>
      %292 = arith.mulf %291, %3 : vector<16x64xf32>
      %293 = math.exp %292 : vector<16x64xf32>
      %294 = vector.extract_strided_slice %45 {offsets = [12, 0], sizes = [1, 64], strides = [1, 1]} : vector<16x64xf32> to vector<1x64xf32>
      %295 = vector.extract_strided_slice %26 {offsets = [12, 0], sizes = [1, 64], strides = [1, 1]} : vector<16x64xf32> to vector<1x64xf32>
      %296 = arith.mulf %294, %295 : vector<1x64xf32>
      %297 = vector.extract_strided_slice %47 {offsets = [12, 0, 0], sizes = [1, 16, 1], strides = [1, 1, 1]} : vector<16x16x1xf32> to vector<1x16x1xf32>
      %298 = vector.shape_cast %297 : vector<1x16x1xf32> to vector<16x1xf32>
      %299 = vector.broadcast %296 : vector<1x64xf32> to vector<16x64xf32>
      %300 = vector.broadcast %298 : vector<16x1xf32> to vector<16x64xf32>
      %301 = arith.mulf %299, %300 : vector<16x64xf32>
      %302 = arith.mulf %293, %283 : vector<16x64xf32>
      %303 = arith.addf %302, %301 : vector<16x64xf32>
      %304 = vector.extract_strided_slice %49 {offsets = [12, 0, 0], sizes = [1, 16, 1], strides = [1, 1, 1]} : vector<16x16x1xf32> to vector<1x16x1xf32>
      %305 = vector.shape_cast %304 : vector<1x16x1xf32> to vector<16x1xf32>
      %306 = vector.broadcast %305 : vector<16x1xf32> to vector<16x64xf32>
      %307 = arith.mulf %303, %306 : vector<16x64xf32>
      %cst_54 = arith.constant dense<0.000000e+00> : vector<64xf32>
      %308 = vector.multi_reduction <add>, %307, %cst_54 [0] : vector<16x64xf32> to vector<64xf32>
      %309 = vector.shape_cast %308 : vector<64xf32> to vector<1x64xf32>
      %310 = vector.extract_strided_slice %45 {offsets = [13, 0], sizes = [1, 64], strides = [1, 1]} : vector<16x64xf32> to vector<1x64xf32>
      %311 = vector.broadcast %310 : vector<1x64xf32> to vector<16x64xf32>
      %312 = arith.mulf %311, %3 : vector<16x64xf32>
      %313 = math.exp %312 : vector<16x64xf32>
      %314 = vector.extract_strided_slice %45 {offsets = [13, 0], sizes = [1, 64], strides = [1, 1]} : vector<16x64xf32> to vector<1x64xf32>
      %315 = vector.extract_strided_slice %26 {offsets = [13, 0], sizes = [1, 64], strides = [1, 1]} : vector<16x64xf32> to vector<1x64xf32>
      %316 = arith.mulf %314, %315 : vector<1x64xf32>
      %317 = vector.extract_strided_slice %47 {offsets = [13, 0, 0], sizes = [1, 16, 1], strides = [1, 1, 1]} : vector<16x16x1xf32> to vector<1x16x1xf32>
      %318 = vector.shape_cast %317 : vector<1x16x1xf32> to vector<16x1xf32>
      %319 = vector.broadcast %316 : vector<1x64xf32> to vector<16x64xf32>
      %320 = vector.broadcast %318 : vector<16x1xf32> to vector<16x64xf32>
      %321 = arith.mulf %319, %320 : vector<16x64xf32>
      %322 = arith.mulf %313, %303 : vector<16x64xf32>
      %323 = arith.addf %322, %321 : vector<16x64xf32>
      %324 = vector.extract_strided_slice %49 {offsets = [13, 0, 0], sizes = [1, 16, 1], strides = [1, 1, 1]} : vector<16x16x1xf32> to vector<1x16x1xf32>
      %325 = vector.shape_cast %324 : vector<1x16x1xf32> to vector<16x1xf32>
      %326 = vector.broadcast %325 : vector<16x1xf32> to vector<16x64xf32>
      %327 = arith.mulf %323, %326 : vector<16x64xf32>
      %cst_55 = arith.constant dense<0.000000e+00> : vector<64xf32>
      %328 = vector.multi_reduction <add>, %327, %cst_55 [0] : vector<16x64xf32> to vector<64xf32>
      %329 = vector.shape_cast %328 : vector<64xf32> to vector<1x64xf32>
      %330 = vector.extract_strided_slice %45 {offsets = [14, 0], sizes = [1, 64], strides = [1, 1]} : vector<16x64xf32> to vector<1x64xf32>
      %331 = vector.broadcast %330 : vector<1x64xf32> to vector<16x64xf32>
      %332 = arith.mulf %331, %3 : vector<16x64xf32>
      %333 = math.exp %332 : vector<16x64xf32>
      %334 = vector.extract_strided_slice %45 {offsets = [14, 0], sizes = [1, 64], strides = [1, 1]} : vector<16x64xf32> to vector<1x64xf32>
      %335 = vector.extract_strided_slice %26 {offsets = [14, 0], sizes = [1, 64], strides = [1, 1]} : vector<16x64xf32> to vector<1x64xf32>
      %336 = arith.mulf %334, %335 : vector<1x64xf32>
      %337 = vector.extract_strided_slice %47 {offsets = [14, 0, 0], sizes = [1, 16, 1], strides = [1, 1, 1]} : vector<16x16x1xf32> to vector<1x16x1xf32>
      %338 = vector.shape_cast %337 : vector<1x16x1xf32> to vector<16x1xf32>
      %339 = vector.broadcast %336 : vector<1x64xf32> to vector<16x64xf32>
      %340 = vector.broadcast %338 : vector<16x1xf32> to vector<16x64xf32>
      %341 = arith.mulf %339, %340 : vector<16x64xf32>
      %342 = arith.mulf %333, %323 : vector<16x64xf32>
      %343 = arith.addf %342, %341 : vector<16x64xf32>
      %344 = vector.extract_strided_slice %49 {offsets = [14, 0, 0], sizes = [1, 16, 1], strides = [1, 1, 1]} : vector<16x16x1xf32> to vector<1x16x1xf32>
      %345 = vector.shape_cast %344 : vector<1x16x1xf32> to vector<16x1xf32>
      %346 = vector.broadcast %345 : vector<16x1xf32> to vector<16x64xf32>
      %347 = arith.mulf %343, %346 : vector<16x64xf32>
      %cst_56 = arith.constant dense<0.000000e+00> : vector<64xf32>
      %348 = vector.multi_reduction <add>, %347, %cst_56 [0] : vector<16x64xf32> to vector<64xf32>
      %349 = vector.shape_cast %348 : vector<64xf32> to vector<1x64xf32>
      %350 = vector.extract_strided_slice %45 {offsets = [15, 0], sizes = [1, 64], strides = [1, 1]} : vector<16x64xf32> to vector<1x64xf32>
      %351 = vector.broadcast %350 : vector<1x64xf32> to vector<16x64xf32>
      %352 = arith.mulf %351, %3 : vector<16x64xf32>
      %353 = math.exp %352 : vector<16x64xf32>
      %354 = vector.extract_strided_slice %45 {offsets = [15, 0], sizes = [1, 64], strides = [1, 1]} : vector<16x64xf32> to vector<1x64xf32>
      %355 = vector.extract_strided_slice %26 {offsets = [15, 0], sizes = [1, 64], strides = [1, 1]} : vector<16x64xf32> to vector<1x64xf32>
      %356 = arith.mulf %354, %355 : vector<1x64xf32>
      %357 = vector.extract_strided_slice %47 {offsets = [15, 0, 0], sizes = [1, 16, 1], strides = [1, 1, 1]} : vector<16x16x1xf32> to vector<1x16x1xf32>
      %358 = vector.shape_cast %357 : vector<1x16x1xf32> to vector<16x1xf32>
      %359 = vector.broadcast %356 : vector<1x64xf32> to vector<16x64xf32>
      %360 = vector.broadcast %358 : vector<16x1xf32> to vector<16x64xf32>
      %361 = arith.mulf %359, %360 : vector<16x64xf32>
      %362 = arith.mulf %353, %343 : vector<16x64xf32>
      %363 = arith.addf %362, %361 : vector<16x64xf32>
      %364 = vector.extract_strided_slice %49 {offsets = [15, 0, 0], sizes = [1, 16, 1], strides = [1, 1, 1]} : vector<16x16x1xf32> to vector<1x16x1xf32>
      %365 = vector.shape_cast %364 : vector<1x16x1xf32> to vector<16x1xf32>
      %366 = vector.broadcast %365 : vector<16x1xf32> to vector<16x64xf32>
      %367 = arith.mulf %363, %366 : vector<16x64xf32>
      %cst_57 = arith.constant dense<0.000000e+00> : vector<64xf32>
      %368 = vector.multi_reduction <add>, %367, %cst_57 [0] : vector<16x64xf32> to vector<64xf32>
      %369 = vector.shape_cast %368 : vector<64xf32> to vector<1x64xf32>
      %370 = tpu.concatenate %69, %89, %109, %129, %149, %169, %189, %209, %229, %249, %269, %289, %309, %329, %349, %369 in 0 : vector<1x64xf32>, vector<1x64xf32>, vector<1x64xf32>, vector<1x64xf32>, vector<1x64xf32>, vector<1x64xf32>, vector<1x64xf32>, vector<1x64xf32>, vector<1x64xf32>, vector<1x64xf32>, vector<1x64xf32>, vector<1x64xf32>, vector<1x64xf32>, vector<1x64xf32>, vector<1x64xf32>, vector<1x64xf32> -> vector<16x64xf32>
      %371 = vector.broadcast %7 : vector<1x64xf32> to vector<16x64xf32>
      %372 = arith.mulf %26, %371 : vector<16x64xf32>
      %373 = arith.addf %370, %372 : vector<16x64xf32>
      %c0_58 = arith.constant 0 : index
      %c0_59 = arith.constant 0 : index
      %374 = arith.index_cast %23 : i32 to index
      %c0_60 = arith.constant 0 : index
      %375 = vector.load %arg7[%c0_58, %c0_59, %374, %c0_60] : memref<1x1x128x64xf32, #tpu.memory_space<vmem>>, vector<1x1x16x64xf32>
      %376 = vector.shape_cast %375 : vector<1x1x16x64xf32> to vector<16x64xf32>
      %377 = vector.shape_cast %373 : vector<16x64xf32> to vector<1x1x16x64xf32>
      tpu.vector_store %arg7[%c0_58, %c0_59, %374, %c0_60], %377 {strides = array<i32>} : memref<1x1x128x64xf32, #tpu.memory_space<vmem>>, vector<1x1x16x64xf32>,
      scf.yield %363 : vector<16x64xf32>
    }
    %c8_i32_15 = arith.constant 8 : i32
    %c0_16 = arith.constant 0 : index
    %c1 = arith.constant 1 : index
    %c0_17 = arith.constant 0 : index
    %c0_18 = arith.constant 0 : index
    %11 = vector.load %arg3[%c0_16, %c1, %c0_17, %c0_18] : memref<1x2x64x96xbf16, #tpu.memory_space<vmem>>, vector<1x1x64x96xbf16>
    %12 = vector.shape_cast %11 : vector<1x1x64x96xbf16> to vector<64x96xbf16>
    %c0_19 = arith.constant 0 : index
    %c1_20 = arith.constant 1 : index
    %c0_21 = arith.constant 0 : index
    %c0_22 = arith.constant 0 : index
    %13 = vector.load %arg5[%c0_19, %c1_20, %c0_21, %c0_22] : memref<1x2x16x64xf32, #tpu.memory_space<vmem>>, vector<1x1x16x64xf32>
    %14 = vector.shape_cast %13 : vector<1x1x16x64xf32> to vector<16x64xf32>
    %c0_23 = arith.constant 0 : index
    %c1_24 = arith.constant 1 : index
    %c0_25 = arith.constant 0 : index
    %c0_26 = arith.constant 0 : index
    %15 = vector.load %arg4[%c0_23, %c1_24, %c0_25, %c0_26] : memref<1x2x1x64xf32, #tpu.memory_space<vmem>>, vector<1x1x1x64xf32>
    %16 = vector.shape_cast %15 : vector<1x1x1x64xf32> to vector<1x64xf32>
    %c0_27 = arith.constant 0 : index
    %c1_28 = arith.constant 1 : index
    %c0_29 = arith.constant 0 : index
    %c0_30 = arith.constant 0 : index
    %17 = vector.load %arg6[%c0_27, %c1_28, %c0_29, %c0_30] : memref<1x2x1x64xf32, #tpu.memory_space<vmem>>, vector<1x1x1x64xf32>
    %18 = vector.shape_cast %17 : vector<1x1x1x64xf32> to vector<1x64xf32>
    %cst_31 = arith.constant 0.000000e+00 : f32
    %19 = vector.broadcast %cst_31 : f32 to vector<16x64xf32>
    %c0_i32_32 = arith.constant 0 : i32
    %c8_i32_33 = arith.constant 8 : i32
    %20 = arith.addi %c0_i32_32, %c8_i32_33 : i32
    %c1_i32_34 = arith.constant 1 : i32
    %21 = scf.for %arg8 = %c0_i32_32 to %20 step %c1_i32_34 iter_args(%arg9 = %19) -> (vector<16x64xf32>)  : i32 {
      %c7_i32 = arith.constant 7 : i32
      %22 = arith.subi %c7_i32, %arg8 : i32
      %c16_i32 = arith.constant 16 : i32
      %23 = arith.muli %22, %c16_i32 : i32
      %24 = tpu.assume_multiple %23, 16 : i32
      %c0_36 = arith.constant 0 : index
      %c0_37 = arith.constant 0 : index
      %25 = arith.index_cast %24 : i32 to index
      %c0_38 = arith.constant 0 : index
      %26 = vector.load %arg2[%c0_36, %c0_37, %25, %c0_38] : memref<1x1x128x64xf32, #tpu.memory_space<vmem>>, vector<1x1x16x64xf32>
      %27 = vector.shape_cast %26 : vector<1x1x16x64xf32> to vector<16x64xf32>
      %28 = arith.truncf %27 : vector<16x64xf32> to vector<16x64xbf16>
      %cst_39 = arith.constant dense<0.000000e+00> : vector<16x96xf32>
      %29 = tpu.matmul %28, %12, %cst_39 {dimension_numbers = #tpu.dot_dimension_numbers<[1], [0], [0], [1], [0, 0, 1, 1], [], []>} : vector<16x64xbf16>, vector<64x96xbf16>, vector<16x96xf32> -> vector<16x96xf32>
      %30 = vector.extract_strided_slice %29 {offsets = [0, 0], sizes = [16, 64], strides = [1, 1]} : vector<16x96xf32> to vector<16x64xf32>
      %31 = vector.broadcast %16 : vector<1x64xf32> to vector<16x64xf32>
      %32 = arith.addf %30, %31 : vector<16x64xf32>
      %cst_40 = arith.constant 0.000000e+00 : f32
      %33 = vector.broadcast %cst_40 : f32 to vector<16x64xf32>
      %34 = arith.maximumf %32, %33 : vector<16x64xf32>
      %35 = vector.broadcast %cst_40 : f32 to vector<16x64xf32>
      %36 = arith.subf %32, %35 : vector<16x64xf32>
      %37 = arith.cmpf one, %36, %36 : vector<16x64xf32>
      %38 = vector.broadcast %cst_40 : f32 to vector<16x64xf32>
      %39 = arith.addf %32, %38 : vector<16x64xf32>
      %40 = math.absf %36 : vector<16x64xf32>
      %cst_41 = arith.constant 0.000000e+00 : f32
      %41 = vector.broadcast %cst_41 : f32 to vector<16x64xf32>
      %42 = arith.subf %41, %40 : vector<16x64xf32>
      %43 = math.exp %42 : vector<16x64xf32>
      %44 = math.log1p %43 : vector<16x64xf32>
      %45 = arith.addf %34, %44 : vector<16x64xf32>
      %46 = arith.select %37, %39, %45 : vector<16x64xi1>, vector<16x64xf32>
      %47 = vector.extract_strided_slice %29 {offsets = [0, 64], sizes = [16, 16], strides = [1, 1]} : vector<16x96xf32> to vector<16x16xf32>
      %48 = vector.shape_cast %47 : vector<16x16xf32> to vector<16x16x1xf32>
      %49 = vector.extract_strided_slice %29 {offsets = [0, 80], sizes = [16, 16], strides = [1, 1]} : vector<16x96xf32> to vector<16x16xf32>
      %50 = vector.shape_cast %49 : vector<16x16xf32> to vector<16x16x1xf32>
      %51 = vector.extract_strided_slice %46 {offsets = [15, 0], sizes = [1, 64], strides = [1, 1]} : vector<16x64xf32> to vector<1x64xf32>
      %52 = vector.broadcast %51 : vector<1x64xf32> to vector<16x64xf32>
      %53 = arith.mulf %52, %14 : vector<16x64xf32>
      %54 = math.exp %53 : vector<16x64xf32>
      %55 = vector.extract_strided_slice %46 {offsets = [15, 0], sizes = [1, 64], strides = [1, 1]} : vector<16x64xf32> to vector<1x64xf32>
      %56 = vector.extract_strided_slice %27 {offsets = [15, 0], sizes = [1, 64], strides = [1, 1]} : vector<16x64xf32> to vector<1x64xf32>
      %57 = arith.mulf %55, %56 : vector<1x64xf32>
      %58 = vector.extract_strided_slice %48 {offsets = [15, 0, 0], sizes = [1, 16, 1], strides = [1, 1, 1]} : vector<16x16x1xf32> to vector<1x16x1xf32>
      %59 = vector.shape_cast %58 : vector<1x16x1xf32> to vector<16x1xf32>
      %60 = vector.broadcast %57 : vector<1x64xf32> to vector<16x64xf32>
      %61 = vector.broadcast %59 : vector<16x1xf32> to vector<16x64xf32>
      %62 = arith.mulf %60, %61 : vector<16x64xf32>
      %63 = arith.mulf %54, %arg9 : vector<16x64xf32>
      %64 = arith.addf %63, %62 : vector<16x64xf32>
      %65 = vector.extract_strided_slice %50 {offsets = [15, 0, 0], sizes = [1, 16, 1], strides = [1, 1, 1]} : vector<16x16x1xf32> to vector<1x16x1xf32>
      %66 = vector.shape_cast %65 : vector<1x16x1xf32> to vector<16x1xf32>
      %67 = vector.broadcast %66 : vector<16x1xf32> to vector<16x64xf32>
      %68 = arith.mulf %64, %67 : vector<16x64xf32>
      %cst_42 = arith.constant dense<0.000000e+00> : vector<64xf32>
      %69 = vector.multi_reduction <add>, %68, %cst_42 [0] : vector<16x64xf32> to vector<64xf32>
      %70 = vector.shape_cast %69 : vector<64xf32> to vector<1x64xf32>
      %71 = vector.extract_strided_slice %46 {offsets = [14, 0], sizes = [1, 64], strides = [1, 1]} : vector<16x64xf32> to vector<1x64xf32>
      %72 = vector.broadcast %71 : vector<1x64xf32> to vector<16x64xf32>
      %73 = arith.mulf %72, %14 : vector<16x64xf32>
      %74 = math.exp %73 : vector<16x64xf32>
      %75 = vector.extract_strided_slice %46 {offsets = [14, 0], sizes = [1, 64], strides = [1, 1]} : vector<16x64xf32> to vector<1x64xf32>
      %76 = vector.extract_strided_slice %27 {offsets = [14, 0], sizes = [1, 64], strides = [1, 1]} : vector<16x64xf32> to vector<1x64xf32>
      %77 = arith.mulf %75, %76 : vector<1x64xf32>
      %78 = vector.extract_strided_slice %48 {offsets = [14, 0, 0], sizes = [1, 16, 1], strides = [1, 1, 1]} : vector<16x16x1xf32> to vector<1x16x1xf32>
      %79 = vector.shape_cast %78 : vector<1x16x1xf32> to vector<16x1xf32>
      %80 = vector.broadcast %77 : vector<1x64xf32> to vector<16x64xf32>
      %81 = vector.broadcast %79 : vector<16x1xf32> to vector<16x64xf32>
      %82 = arith.mulf %80, %81 : vector<16x64xf32>
      %83 = arith.mulf %74, %64 : vector<16x64xf32>
      %84 = arith.addf %83, %82 : vector<16x64xf32>
      %85 = vector.extract_strided_slice %50 {offsets = [14, 0, 0], sizes = [1, 16, 1], strides = [1, 1, 1]} : vector<16x16x1xf32> to vector<1x16x1xf32>
      %86 = vector.shape_cast %85 : vector<1x16x1xf32> to vector<16x1xf32>
      %87 = vector.broadcast %86 : vector<16x1xf32> to vector<16x64xf32>
      %88 = arith.mulf %84, %87 : vector<16x64xf32>
      %cst_43 = arith.constant dense<0.000000e+00> : vector<64xf32>
      %89 = vector.multi_reduction <add>, %88, %cst_43 [0] : vector<16x64xf32> to vector<64xf32>
      %90 = vector.shape_cast %89 : vector<64xf32> to vector<1x64xf32>
      %91 = vector.extract_strided_slice %46 {offsets = [13, 0], sizes = [1, 64], strides = [1, 1]} : vector<16x64xf32> to vector<1x64xf32>
      %92 = vector.broadcast %91 : vector<1x64xf32> to vector<16x64xf32>
      %93 = arith.mulf %92, %14 : vector<16x64xf32>
      %94 = math.exp %93 : vector<16x64xf32>
      %95 = vector.extract_strided_slice %46 {offsets = [13, 0], sizes = [1, 64], strides = [1, 1]} : vector<16x64xf32> to vector<1x64xf32>
      %96 = vector.extract_strided_slice %27 {offsets = [13, 0], sizes = [1, 64], strides = [1, 1]} : vector<16x64xf32> to vector<1x64xf32>
      %97 = arith.mulf %95, %96 : vector<1x64xf32>
      %98 = vector.extract_strided_slice %48 {offsets = [13, 0, 0], sizes = [1, 16, 1], strides = [1, 1, 1]} : vector<16x16x1xf32> to vector<1x16x1xf32>
      %99 = vector.shape_cast %98 : vector<1x16x1xf32> to vector<16x1xf32>
      %100 = vector.broadcast %97 : vector<1x64xf32> to vector<16x64xf32>
      %101 = vector.broadcast %99 : vector<16x1xf32> to vector<16x64xf32>
      %102 = arith.mulf %100, %101 : vector<16x64xf32>
      %103 = arith.mulf %94, %84 : vector<16x64xf32>
      %104 = arith.addf %103, %102 : vector<16x64xf32>
      %105 = vector.extract_strided_slice %50 {offsets = [13, 0, 0], sizes = [1, 16, 1], strides = [1, 1, 1]} : vector<16x16x1xf32> to vector<1x16x1xf32>
      %106 = vector.shape_cast %105 : vector<1x16x1xf32> to vector<16x1xf32>
      %107 = vector.broadcast %106 : vector<16x1xf32> to vector<16x64xf32>
      %108 = arith.mulf %104, %107 : vector<16x64xf32>
      %cst_44 = arith.constant dense<0.000000e+00> : vector<64xf32>
      %109 = vector.multi_reduction <add>, %108, %cst_44 [0] : vector<16x64xf32> to vector<64xf32>
      %110 = vector.shape_cast %109 : vector<64xf32> to vector<1x64xf32>
      %111 = vector.extract_strided_slice %46 {offsets = [12, 0], sizes = [1, 64], strides = [1, 1]} : vector<16x64xf32> to vector<1x64xf32>
      %112 = vector.broadcast %111 : vector<1x64xf32> to vector<16x64xf32>
      %113 = arith.mulf %112, %14 : vector<16x64xf32>
      %114 = math.exp %113 : vector<16x64xf32>
      %115 = vector.extract_strided_slice %46 {offsets = [12, 0], sizes = [1, 64], strides = [1, 1]} : vector<16x64xf32> to vector<1x64xf32>
      %116 = vector.extract_strided_slice %27 {offsets = [12, 0], sizes = [1, 64], strides = [1, 1]} : vector<16x64xf32> to vector<1x64xf32>
      %117 = arith.mulf %115, %116 : vector<1x64xf32>
      %118 = vector.extract_strided_slice %48 {offsets = [12, 0, 0], sizes = [1, 16, 1], strides = [1, 1, 1]} : vector<16x16x1xf32> to vector<1x16x1xf32>
      %119 = vector.shape_cast %118 : vector<1x16x1xf32> to vector<16x1xf32>
      %120 = vector.broadcast %117 : vector<1x64xf32> to vector<16x64xf32>
      %121 = vector.broadcast %119 : vector<16x1xf32> to vector<16x64xf32>
      %122 = arith.mulf %120, %121 : vector<16x64xf32>
      %123 = arith.mulf %114, %104 : vector<16x64xf32>
      %124 = arith.addf %123, %122 : vector<16x64xf32>
      %125 = vector.extract_strided_slice %50 {offsets = [12, 0, 0], sizes = [1, 16, 1], strides = [1, 1, 1]} : vector<16x16x1xf32> to vector<1x16x1xf32>
      %126 = vector.shape_cast %125 : vector<1x16x1xf32> to vector<16x1xf32>
      %127 = vector.broadcast %126 : vector<16x1xf32> to vector<16x64xf32>
      %128 = arith.mulf %124, %127 : vector<16x64xf32>
      %cst_45 = arith.constant dense<0.000000e+00> : vector<64xf32>
      %129 = vector.multi_reduction <add>, %128, %cst_45 [0] : vector<16x64xf32> to vector<64xf32>
      %130 = vector.shape_cast %129 : vector<64xf32> to vector<1x64xf32>
      %131 = vector.extract_strided_slice %46 {offsets = [11, 0], sizes = [1, 64], strides = [1, 1]} : vector<16x64xf32> to vector<1x64xf32>
      %132 = vector.broadcast %131 : vector<1x64xf32> to vector<16x64xf32>
      %133 = arith.mulf %132, %14 : vector<16x64xf32>
      %134 = math.exp %133 : vector<16x64xf32>
      %135 = vector.extract_strided_slice %46 {offsets = [11, 0], sizes = [1, 64], strides = [1, 1]} : vector<16x64xf32> to vector<1x64xf32>
      %136 = vector.extract_strided_slice %27 {offsets = [11, 0], sizes = [1, 64], strides = [1, 1]} : vector<16x64xf32> to vector<1x64xf32>
      %137 = arith.mulf %135, %136 : vector<1x64xf32>
      %138 = vector.extract_strided_slice %48 {offsets = [11, 0, 0], sizes = [1, 16, 1], strides = [1, 1, 1]} : vector<16x16x1xf32> to vector<1x16x1xf32>
      %139 = vector.shape_cast %138 : vector<1x16x1xf32> to vector<16x1xf32>
      %140 = vector.broadcast %137 : vector<1x64xf32> to vector<16x64xf32>
      %141 = vector.broadcast %139 : vector<16x1xf32> to vector<16x64xf32>
      %142 = arith.mulf %140, %141 : vector<16x64xf32>
      %143 = arith.mulf %134, %124 : vector<16x64xf32>
      %144 = arith.addf %143, %142 : vector<16x64xf32>
      %145 = vector.extract_strided_slice %50 {offsets = [11, 0, 0], sizes = [1, 16, 1], strides = [1, 1, 1]} : vector<16x16x1xf32> to vector<1x16x1xf32>
      %146 = vector.shape_cast %145 : vector<1x16x1xf32> to vector<16x1xf32>
      %147 = vector.broadcast %146 : vector<16x1xf32> to vector<16x64xf32>
      %148 = arith.mulf %144, %147 : vector<16x64xf32>
      %cst_46 = arith.constant dense<0.000000e+00> : vector<64xf32>
      %149 = vector.multi_reduction <add>, %148, %cst_46 [0] : vector<16x64xf32> to vector<64xf32>
      %150 = vector.shape_cast %149 : vector<64xf32> to vector<1x64xf32>
      %151 = vector.extract_strided_slice %46 {offsets = [10, 0], sizes = [1, 64], strides = [1, 1]} : vector<16x64xf32> to vector<1x64xf32>
      %152 = vector.broadcast %151 : vector<1x64xf32> to vector<16x64xf32>
      %153 = arith.mulf %152, %14 : vector<16x64xf32>
      %154 = math.exp %153 : vector<16x64xf32>
      %155 = vector.extract_strided_slice %46 {offsets = [10, 0], sizes = [1, 64], strides = [1, 1]} : vector<16x64xf32> to vector<1x64xf32>
      %156 = vector.extract_strided_slice %27 {offsets = [10, 0], sizes = [1, 64], strides = [1, 1]} : vector<16x64xf32> to vector<1x64xf32>
      %157 = arith.mulf %155, %156 : vector<1x64xf32>
      %158 = vector.extract_strided_slice %48 {offsets = [10, 0, 0], sizes = [1, 16, 1], strides = [1, 1, 1]} : vector<16x16x1xf32> to vector<1x16x1xf32>
      %159 = vector.shape_cast %158 : vector<1x16x1xf32> to vector<16x1xf32>
      %160 = vector.broadcast %157 : vector<1x64xf32> to vector<16x64xf32>
      %161 = vector.broadcast %159 : vector<16x1xf32> to vector<16x64xf32>
      %162 = arith.mulf %160, %161 : vector<16x64xf32>
      %163 = arith.mulf %154, %144 : vector<16x64xf32>
      %164 = arith.addf %163, %162 : vector<16x64xf32>
      %165 = vector.extract_strided_slice %50 {offsets = [10, 0, 0], sizes = [1, 16, 1], strides = [1, 1, 1]} : vector<16x16x1xf32> to vector<1x16x1xf32>
      %166 = vector.shape_cast %165 : vector<1x16x1xf32> to vector<16x1xf32>
      %167 = vector.broadcast %166 : vector<16x1xf32> to vector<16x64xf32>
      %168 = arith.mulf %164, %167 : vector<16x64xf32>
      %cst_47 = arith.constant dense<0.000000e+00> : vector<64xf32>
      %169 = vector.multi_reduction <add>, %168, %cst_47 [0] : vector<16x64xf32> to vector<64xf32>
      %170 = vector.shape_cast %169 : vector<64xf32> to vector<1x64xf32>
      %171 = vector.extract_strided_slice %46 {offsets = [9, 0], sizes = [1, 64], strides = [1, 1]} : vector<16x64xf32> to vector<1x64xf32>
      %172 = vector.broadcast %171 : vector<1x64xf32> to vector<16x64xf32>
      %173 = arith.mulf %172, %14 : vector<16x64xf32>
      %174 = math.exp %173 : vector<16x64xf32>
      %175 = vector.extract_strided_slice %46 {offsets = [9, 0], sizes = [1, 64], strides = [1, 1]} : vector<16x64xf32> to vector<1x64xf32>
      %176 = vector.extract_strided_slice %27 {offsets = [9, 0], sizes = [1, 64], strides = [1, 1]} : vector<16x64xf32> to vector<1x64xf32>
      %177 = arith.mulf %175, %176 : vector<1x64xf32>
      %178 = vector.extract_strided_slice %48 {offsets = [9, 0, 0], sizes = [1, 16, 1], strides = [1, 1, 1]} : vector<16x16x1xf32> to vector<1x16x1xf32>
      %179 = vector.shape_cast %178 : vector<1x16x1xf32> to vector<16x1xf32>
      %180 = vector.broadcast %177 : vector<1x64xf32> to vector<16x64xf32>
      %181 = vector.broadcast %179 : vector<16x1xf32> to vector<16x64xf32>
      %182 = arith.mulf %180, %181 : vector<16x64xf32>
      %183 = arith.mulf %174, %164 : vector<16x64xf32>
      %184 = arith.addf %183, %182 : vector<16x64xf32>
      %185 = vector.extract_strided_slice %50 {offsets = [9, 0, 0], sizes = [1, 16, 1], strides = [1, 1, 1]} : vector<16x16x1xf32> to vector<1x16x1xf32>
      %186 = vector.shape_cast %185 : vector<1x16x1xf32> to vector<16x1xf32>
      %187 = vector.broadcast %186 : vector<16x1xf32> to vector<16x64xf32>
      %188 = arith.mulf %184, %187 : vector<16x64xf32>
      %cst_48 = arith.constant dense<0.000000e+00> : vector<64xf32>
      %189 = vector.multi_reduction <add>, %188, %cst_48 [0] : vector<16x64xf32> to vector<64xf32>
      %190 = vector.shape_cast %189 : vector<64xf32> to vector<1x64xf32>
      %191 = vector.extract_strided_slice %46 {offsets = [8, 0], sizes = [1, 64], strides = [1, 1]} : vector<16x64xf32> to vector<1x64xf32>
      %192 = vector.broadcast %191 : vector<1x64xf32> to vector<16x64xf32>
      %193 = arith.mulf %192, %14 : vector<16x64xf32>
      %194 = math.exp %193 : vector<16x64xf32>
      %195 = vector.extract_strided_slice %46 {offsets = [8, 0], sizes = [1, 64], strides = [1, 1]} : vector<16x64xf32> to vector<1x64xf32>
      %196 = vector.extract_strided_slice %27 {offsets = [8, 0], sizes = [1, 64], strides = [1, 1]} : vector<16x64xf32> to vector<1x64xf32>
      %197 = arith.mulf %195, %196 : vector<1x64xf32>
      %198 = vector.extract_strided_slice %48 {offsets = [8, 0, 0], sizes = [1, 16, 1], strides = [1, 1, 1]} : vector<16x16x1xf32> to vector<1x16x1xf32>
      %199 = vector.shape_cast %198 : vector<1x16x1xf32> to vector<16x1xf32>
      %200 = vector.broadcast %197 : vector<1x64xf32> to vector<16x64xf32>
      %201 = vector.broadcast %199 : vector<16x1xf32> to vector<16x64xf32>
      %202 = arith.mulf %200, %201 : vector<16x64xf32>
      %203 = arith.mulf %194, %184 : vector<16x64xf32>
      %204 = arith.addf %203, %202 : vector<16x64xf32>
      %205 = vector.extract_strided_slice %50 {offsets = [8, 0, 0], sizes = [1, 16, 1], strides = [1, 1, 1]} : vector<16x16x1xf32> to vector<1x16x1xf32>
      %206 = vector.shape_cast %205 : vector<1x16x1xf32> to vector<16x1xf32>
      %207 = vector.broadcast %206 : vector<16x1xf32> to vector<16x64xf32>
      %208 = arith.mulf %204, %207 : vector<16x64xf32>
      %cst_49 = arith.constant dense<0.000000e+00> : vector<64xf32>
      %209 = vector.multi_reduction <add>, %208, %cst_49 [0] : vector<16x64xf32> to vector<64xf32>
      %210 = vector.shape_cast %209 : vector<64xf32> to vector<1x64xf32>
      %211 = vector.extract_strided_slice %46 {offsets = [7, 0], sizes = [1, 64], strides = [1, 1]} : vector<16x64xf32> to vector<1x64xf32>
      %212 = vector.broadcast %211 : vector<1x64xf32> to vector<16x64xf32>
      %213 = arith.mulf %212, %14 : vector<16x64xf32>
      %214 = math.exp %213 : vector<16x64xf32>
      %215 = vector.extract_strided_slice %46 {offsets = [7, 0], sizes = [1, 64], strides = [1, 1]} : vector<16x64xf32> to vector<1x64xf32>
      %216 = vector.extract_strided_slice %27 {offsets = [7, 0], sizes = [1, 64], strides = [1, 1]} : vector<16x64xf32> to vector<1x64xf32>
      %217 = arith.mulf %215, %216 : vector<1x64xf32>
      %218 = vector.extract_strided_slice %48 {offsets = [7, 0, 0], sizes = [1, 16, 1], strides = [1, 1, 1]} : vector<16x16x1xf32> to vector<1x16x1xf32>
      %219 = vector.shape_cast %218 : vector<1x16x1xf32> to vector<16x1xf32>
      %220 = vector.broadcast %217 : vector<1x64xf32> to vector<16x64xf32>
      %221 = vector.broadcast %219 : vector<16x1xf32> to vector<16x64xf32>
      %222 = arith.mulf %220, %221 : vector<16x64xf32>
      %223 = arith.mulf %214, %204 : vector<16x64xf32>
      %224 = arith.addf %223, %222 : vector<16x64xf32>
      %225 = vector.extract_strided_slice %50 {offsets = [7, 0, 0], sizes = [1, 16, 1], strides = [1, 1, 1]} : vector<16x16x1xf32> to vector<1x16x1xf32>
      %226 = vector.shape_cast %225 : vector<1x16x1xf32> to vector<16x1xf32>
      %227 = vector.broadcast %226 : vector<16x1xf32> to vector<16x64xf32>
      %228 = arith.mulf %224, %227 : vector<16x64xf32>
      %cst_50 = arith.constant dense<0.000000e+00> : vector<64xf32>
      %229 = vector.multi_reduction <add>, %228, %cst_50 [0] : vector<16x64xf32> to vector<64xf32>
      %230 = vector.shape_cast %229 : vector<64xf32> to vector<1x64xf32>
      %231 = vector.extract_strided_slice %46 {offsets = [6, 0], sizes = [1, 64], strides = [1, 1]} : vector<16x64xf32> to vector<1x64xf32>
      %232 = vector.broadcast %231 : vector<1x64xf32> to vector<16x64xf32>
      %233 = arith.mulf %232, %14 : vector<16x64xf32>
      %234 = math.exp %233 : vector<16x64xf32>
      %235 = vector.extract_strided_slice %46 {offsets = [6, 0], sizes = [1, 64], strides = [1, 1]} : vector<16x64xf32> to vector<1x64xf32>
      %236 = vector.extract_strided_slice %27 {offsets = [6, 0], sizes = [1, 64], strides = [1, 1]} : vector<16x64xf32> to vector<1x64xf32>
      %237 = arith.mulf %235, %236 : vector<1x64xf32>
      %238 = vector.extract_strided_slice %48 {offsets = [6, 0, 0], sizes = [1, 16, 1], strides = [1, 1, 1]} : vector<16x16x1xf32> to vector<1x16x1xf32>
      %239 = vector.shape_cast %238 : vector<1x16x1xf32> to vector<16x1xf32>
      %240 = vector.broadcast %237 : vector<1x64xf32> to vector<16x64xf32>
      %241 = vector.broadcast %239 : vector<16x1xf32> to vector<16x64xf32>
      %242 = arith.mulf %240, %241 : vector<16x64xf32>
      %243 = arith.mulf %234, %224 : vector<16x64xf32>
      %244 = arith.addf %243, %242 : vector<16x64xf32>
      %245 = vector.extract_strided_slice %50 {offsets = [6, 0, 0], sizes = [1, 16, 1], strides = [1, 1, 1]} : vector<16x16x1xf32> to vector<1x16x1xf32>
      %246 = vector.shape_cast %245 : vector<1x16x1xf32> to vector<16x1xf32>
      %247 = vector.broadcast %246 : vector<16x1xf32> to vector<16x64xf32>
      %248 = arith.mulf %244, %247 : vector<16x64xf32>
      %cst_51 = arith.constant dense<0.000000e+00> : vector<64xf32>
      %249 = vector.multi_reduction <add>, %248, %cst_51 [0] : vector<16x64xf32> to vector<64xf32>
      %250 = vector.shape_cast %249 : vector<64xf32> to vector<1x64xf32>
      %251 = vector.extract_strided_slice %46 {offsets = [5, 0], sizes = [1, 64], strides = [1, 1]} : vector<16x64xf32> to vector<1x64xf32>
      %252 = vector.broadcast %251 : vector<1x64xf32> to vector<16x64xf32>
      %253 = arith.mulf %252, %14 : vector<16x64xf32>
      %254 = math.exp %253 : vector<16x64xf32>
      %255 = vector.extract_strided_slice %46 {offsets = [5, 0], sizes = [1, 64], strides = [1, 1]} : vector<16x64xf32> to vector<1x64xf32>
      %256 = vector.extract_strided_slice %27 {offsets = [5, 0], sizes = [1, 64], strides = [1, 1]} : vector<16x64xf32> to vector<1x64xf32>
      %257 = arith.mulf %255, %256 : vector<1x64xf32>
      %258 = vector.extract_strided_slice %48 {offsets = [5, 0, 0], sizes = [1, 16, 1], strides = [1, 1, 1]} : vector<16x16x1xf32> to vector<1x16x1xf32>
      %259 = vector.shape_cast %258 : vector<1x16x1xf32> to vector<16x1xf32>
      %260 = vector.broadcast %257 : vector<1x64xf32> to vector<16x64xf32>
      %261 = vector.broadcast %259 : vector<16x1xf32> to vector<16x64xf32>
      %262 = arith.mulf %260, %261 : vector<16x64xf32>
      %263 = arith.mulf %254, %244 : vector<16x64xf32>
      %264 = arith.addf %263, %262 : vector<16x64xf32>
      %265 = vector.extract_strided_slice %50 {offsets = [5, 0, 0], sizes = [1, 16, 1], strides = [1, 1, 1]} : vector<16x16x1xf32> to vector<1x16x1xf32>
      %266 = vector.shape_cast %265 : vector<1x16x1xf32> to vector<16x1xf32>
      %267 = vector.broadcast %266 : vector<16x1xf32> to vector<16x64xf32>
      %268 = arith.mulf %264, %267 : vector<16x64xf32>
      %cst_52 = arith.constant dense<0.000000e+00> : vector<64xf32>
      %269 = vector.multi_reduction <add>, %268, %cst_52 [0] : vector<16x64xf32> to vector<64xf32>
      %270 = vector.shape_cast %269 : vector<64xf32> to vector<1x64xf32>
      %271 = vector.extract_strided_slice %46 {offsets = [4, 0], sizes = [1, 64], strides = [1, 1]} : vector<16x64xf32> to vector<1x64xf32>
      %272 = vector.broadcast %271 : vector<1x64xf32> to vector<16x64xf32>
      %273 = arith.mulf %272, %14 : vector<16x64xf32>
      %274 = math.exp %273 : vector<16x64xf32>
      %275 = vector.extract_strided_slice %46 {offsets = [4, 0], sizes = [1, 64], strides = [1, 1]} : vector<16x64xf32> to vector<1x64xf32>
      %276 = vector.extract_strided_slice %27 {offsets = [4, 0], sizes = [1, 64], strides = [1, 1]} : vector<16x64xf32> to vector<1x64xf32>
      %277 = arith.mulf %275, %276 : vector<1x64xf32>
      %278 = vector.extract_strided_slice %48 {offsets = [4, 0, 0], sizes = [1, 16, 1], strides = [1, 1, 1]} : vector<16x16x1xf32> to vector<1x16x1xf32>
      %279 = vector.shape_cast %278 : vector<1x16x1xf32> to vector<16x1xf32>
      %280 = vector.broadcast %277 : vector<1x64xf32> to vector<16x64xf32>
      %281 = vector.broadcast %279 : vector<16x1xf32> to vector<16x64xf32>
      %282 = arith.mulf %280, %281 : vector<16x64xf32>
      %283 = arith.mulf %274, %264 : vector<16x64xf32>
      %284 = arith.addf %283, %282 : vector<16x64xf32>
      %285 = vector.extract_strided_slice %50 {offsets = [4, 0, 0], sizes = [1, 16, 1], strides = [1, 1, 1]} : vector<16x16x1xf32> to vector<1x16x1xf32>
      %286 = vector.shape_cast %285 : vector<1x16x1xf32> to vector<16x1xf32>
      %287 = vector.broadcast %286 : vector<16x1xf32> to vector<16x64xf32>
      %288 = arith.mulf %284, %287 : vector<16x64xf32>
      %cst_53 = arith.constant dense<0.000000e+00> : vector<64xf32>
      %289 = vector.multi_reduction <add>, %288, %cst_53 [0] : vector<16x64xf32> to vector<64xf32>
      %290 = vector.shape_cast %289 : vector<64xf32> to vector<1x64xf32>
      %291 = vector.extract_strided_slice %46 {offsets = [3, 0], sizes = [1, 64], strides = [1, 1]} : vector<16x64xf32> to vector<1x64xf32>
      %292 = vector.broadcast %291 : vector<1x64xf32> to vector<16x64xf32>
      %293 = arith.mulf %292, %14 : vector<16x64xf32>
      %294 = math.exp %293 : vector<16x64xf32>
      %295 = vector.extract_strided_slice %46 {offsets = [3, 0], sizes = [1, 64], strides = [1, 1]} : vector<16x64xf32> to vector<1x64xf32>
      %296 = vector.extract_strided_slice %27 {offsets = [3, 0], sizes = [1, 64], strides = [1, 1]} : vector<16x64xf32> to vector<1x64xf32>
      %297 = arith.mulf %295, %296 : vector<1x64xf32>
      %298 = vector.extract_strided_slice %48 {offsets = [3, 0, 0], sizes = [1, 16, 1], strides = [1, 1, 1]} : vector<16x16x1xf32> to vector<1x16x1xf32>
      %299 = vector.shape_cast %298 : vector<1x16x1xf32> to vector<16x1xf32>
      %300 = vector.broadcast %297 : vector<1x64xf32> to vector<16x64xf32>
      %301 = vector.broadcast %299 : vector<16x1xf32> to vector<16x64xf32>
      %302 = arith.mulf %300, %301 : vector<16x64xf32>
      %303 = arith.mulf %294, %284 : vector<16x64xf32>
      %304 = arith.addf %303, %302 : vector<16x64xf32>
      %305 = vector.extract_strided_slice %50 {offsets = [3, 0, 0], sizes = [1, 16, 1], strides = [1, 1, 1]} : vector<16x16x1xf32> to vector<1x16x1xf32>
      %306 = vector.shape_cast %305 : vector<1x16x1xf32> to vector<16x1xf32>
      %307 = vector.broadcast %306 : vector<16x1xf32> to vector<16x64xf32>
      %308 = arith.mulf %304, %307 : vector<16x64xf32>
      %cst_54 = arith.constant dense<0.000000e+00> : vector<64xf32>
      %309 = vector.multi_reduction <add>, %308, %cst_54 [0] : vector<16x64xf32> to vector<64xf32>
      %310 = vector.shape_cast %309 : vector<64xf32> to vector<1x64xf32>
      %311 = vector.extract_strided_slice %46 {offsets = [2, 0], sizes = [1, 64], strides = [1, 1]} : vector<16x64xf32> to vector<1x64xf32>
      %312 = vector.broadcast %311 : vector<1x64xf32> to vector<16x64xf32>
      %313 = arith.mulf %312, %14 : vector<16x64xf32>
      %314 = math.exp %313 : vector<16x64xf32>
      %315 = vector.extract_strided_slice %46 {offsets = [2, 0], sizes = [1, 64], strides = [1, 1]} : vector<16x64xf32> to vector<1x64xf32>
      %316 = vector.extract_strided_slice %27 {offsets = [2, 0], sizes = [1, 64], strides = [1, 1]} : vector<16x64xf32> to vector<1x64xf32>
      %317 = arith.mulf %315, %316 : vector<1x64xf32>
      %318 = vector.extract_strided_slice %48 {offsets = [2, 0, 0], sizes = [1, 16, 1], strides = [1, 1, 1]} : vector<16x16x1xf32> to vector<1x16x1xf32>
      %319 = vector.shape_cast %318 : vector<1x16x1xf32> to vector<16x1xf32>
      %320 = vector.broadcast %317 : vector<1x64xf32> to vector<16x64xf32>
      %321 = vector.broadcast %319 : vector<16x1xf32> to vector<16x64xf32>
      %322 = arith.mulf %320, %321 : vector<16x64xf32>
      %323 = arith.mulf %314, %304 : vector<16x64xf32>
      %324 = arith.addf %323, %322 : vector<16x64xf32>
      %325 = vector.extract_strided_slice %50 {offsets = [2, 0, 0], sizes = [1, 16, 1], strides = [1, 1, 1]} : vector<16x16x1xf32> to vector<1x16x1xf32>
      %326 = vector.shape_cast %325 : vector<1x16x1xf32> to vector<16x1xf32>
      %327 = vector.broadcast %326 : vector<16x1xf32> to vector<16x64xf32>
      %328 = arith.mulf %324, %327 : vector<16x64xf32>
      %cst_55 = arith.constant dense<0.000000e+00> : vector<64xf32>
      %329 = vector.multi_reduction <add>, %328, %cst_55 [0] : vector<16x64xf32> to vector<64xf32>
      %330 = vector.shape_cast %329 : vector<64xf32> to vector<1x64xf32>
      %331 = vector.extract_strided_slice %46 {offsets = [1, 0], sizes = [1, 64], strides = [1, 1]} : vector<16x64xf32> to vector<1x64xf32>
      %332 = vector.broadcast %331 : vector<1x64xf32> to vector<16x64xf32>
      %333 = arith.mulf %332, %14 : vector<16x64xf32>
      %334 = math.exp %333 : vector<16x64xf32>
      %335 = vector.extract_strided_slice %46 {offsets = [1, 0], sizes = [1, 64], strides = [1, 1]} : vector<16x64xf32> to vector<1x64xf32>
      %336 = vector.extract_strided_slice %27 {offsets = [1, 0], sizes = [1, 64], strides = [1, 1]} : vector<16x64xf32> to vector<1x64xf32>
      %337 = arith.mulf %335, %336 : vector<1x64xf32>
      %338 = vector.extract_strided_slice %48 {offsets = [1, 0, 0], sizes = [1, 16, 1], strides = [1, 1, 1]} : vector<16x16x1xf32> to vector<1x16x1xf32>
      %339 = vector.shape_cast %338 : vector<1x16x1xf32> to vector<16x1xf32>
      %340 = vector.broadcast %337 : vector<1x64xf32> to vector<16x64xf32>
      %341 = vector.broadcast %339 : vector<16x1xf32> to vector<16x64xf32>
      %342 = arith.mulf %340, %341 : vector<16x64xf32>
      %343 = arith.mulf %334, %324 : vector<16x64xf32>
      %344 = arith.addf %343, %342 : vector<16x64xf32>
      %345 = vector.extract_strided_slice %50 {offsets = [1, 0, 0], sizes = [1, 16, 1], strides = [1, 1, 1]} : vector<16x16x1xf32> to vector<1x16x1xf32>
      %346 = vector.shape_cast %345 : vector<1x16x1xf32> to vector<16x1xf32>
      %347 = vector.broadcast %346 : vector<16x1xf32> to vector<16x64xf32>
      %348 = arith.mulf %344, %347 : vector<16x64xf32>
      %cst_56 = arith.constant dense<0.000000e+00> : vector<64xf32>
      %349 = vector.multi_reduction <add>, %348, %cst_56 [0] : vector<16x64xf32> to vector<64xf32>
      %350 = vector.shape_cast %349 : vector<64xf32> to vector<1x64xf32>
      %351 = vector.extract_strided_slice %46 {offsets = [0, 0], sizes = [1, 64], strides = [1, 1]} : vector<16x64xf32> to vector<1x64xf32>
      %352 = vector.broadcast %351 : vector<1x64xf32> to vector<16x64xf32>
      %353 = arith.mulf %352, %14 : vector<16x64xf32>
      %354 = math.exp %353 : vector<16x64xf32>
      %355 = vector.extract_strided_slice %46 {offsets = [0, 0], sizes = [1, 64], strides = [1, 1]} : vector<16x64xf32> to vector<1x64xf32>
      %356 = vector.extract_strided_slice %27 {offsets = [0, 0], sizes = [1, 64], strides = [1, 1]} : vector<16x64xf32> to vector<1x64xf32>
      %357 = arith.mulf %355, %356 : vector<1x64xf32>
      %358 = vector.extract_strided_slice %48 {offsets = [0, 0, 0], sizes = [1, 16, 1], strides = [1, 1, 1]} : vector<16x16x1xf32> to vector<1x16x1xf32>
      %359 = vector.shape_cast %358 : vector<1x16x1xf32> to vector<16x1xf32>
      %360 = vector.broadcast %357 : vector<1x64xf32> to vector<16x64xf32>
      %361 = vector.broadcast %359 : vector<16x1xf32> to vector<16x64xf32>
      %362 = arith.mulf %360, %361 : vector<16x64xf32>
      %363 = arith.mulf %354, %344 : vector<16x64xf32>
      %364 = arith.addf %363, %362 : vector<16x64xf32>
      %365 = vector.extract_strided_slice %50 {offsets = [0, 0, 0], sizes = [1, 16, 1], strides = [1, 1, 1]} : vector<16x16x1xf32> to vector<1x16x1xf32>
      %366 = vector.shape_cast %365 : vector<1x16x1xf32> to vector<16x1xf32>
      %367 = vector.broadcast %366 : vector<16x1xf32> to vector<16x64xf32>
      %368 = arith.mulf %364, %367 : vector<16x64xf32>
      %cst_57 = arith.constant dense<0.000000e+00> : vector<64xf32>
      %369 = vector.multi_reduction <add>, %368, %cst_57 [0] : vector<16x64xf32> to vector<64xf32>
      %370 = vector.shape_cast %369 : vector<64xf32> to vector<1x64xf32>
      %371 = tpu.concatenate %370, %350, %330, %310, %290, %270, %250, %230, %210, %190, %170, %150, %130, %110, %90, %70 in 0 : vector<1x64xf32>, vector<1x64xf32>, vector<1x64xf32>, vector<1x64xf32>, vector<1x64xf32>, vector<1x64xf32>, vector<1x64xf32>, vector<1x64xf32>, vector<1x64xf32>, vector<1x64xf32>, vector<1x64xf32>, vector<1x64xf32>, vector<1x64xf32>, vector<1x64xf32>, vector<1x64xf32>, vector<1x64xf32> -> vector<16x64xf32>
      %372 = vector.broadcast %18 : vector<1x64xf32> to vector<16x64xf32>
      %373 = arith.mulf %27, %372 : vector<16x64xf32>
      %374 = arith.addf %371, %373 : vector<16x64xf32>
      %c0_58 = arith.constant 0 : index
      %c0_59 = arith.constant 0 : index
      %375 = arith.index_cast %24 : i32 to index
      %c0_60 = arith.constant 0 : index
      %376 = vector.load %arg7[%c0_58, %c0_59, %375, %c0_60] : memref<1x1x128x64xf32, #tpu.memory_space<vmem>>, vector<1x1x16x64xf32>
      %377 = vector.shape_cast %376 : vector<1x1x16x64xf32> to vector<16x64xf32>
      %378 = arith.addf %377, %374 : vector<16x64xf32>
      %c0_61 = arith.constant 0 : index
      %c0_62 = arith.constant 0 : index
      %379 = arith.index_cast %24 : i32 to index
      %c0_63 = arith.constant 0 : index
      %380 = vector.load %arg7[%c0_61, %c0_62, %379, %c0_63] : memref<1x1x128x64xf32, #tpu.memory_space<vmem>>, vector<1x1x16x64xf32>
      %381 = vector.shape_cast %380 : vector<1x1x16x64xf32> to vector<16x64xf32>
      %382 = vector.shape_cast %378 : vector<16x64xf32> to vector<1x1x16x64xf32>
      tpu.vector_store %arg7[%c0_61, %c0_62, %379, %c0_63], %382 {strides = array<i32>} : memref<1x1x128x64xf32, #tpu.memory_space<vmem>>, vector<1x1x16x64xf32>,
      scf.yield %364 : vector<16x64xf32>
    }
    %c8_i32_35 = arith.constant 8 : i32
    return
  }
  func.func @transform_0(%arg0: i32, %arg1: i32) -> (i32, i32, i32, i32) {
    %c0_i32 = arith.constant 0 : i32
    %c0_i32_0 = arith.constant 0 : i32
    %c0_i32_1 = arith.constant 0 : i32
    return %arg0, %arg1, %c0_i32, %c0_i32_0 : i32, i32, i32, i32
  }
  func.func @transform_1(%arg0: i32, %arg1: i32) -> (i32, i32, i32, i32) {
    %c0_i32 = arith.constant 0 : i32
    %c0_i32_0 = arith.constant 0 : i32
    %c0_i32_1 = arith.constant 0 : i32
    %c0_i32_2 = arith.constant 0 : i32
    return %arg1, %c0_i32, %c0_i32_0, %c0_i32_1 : i32, i32, i32, i32
  }
  func.func @transform_2(%arg0: i32, %arg1: i32) -> (i32, i32, i32, i32) {
    %c0_i32 = arith.constant 0 : i32
    %c0_i32_0 = arith.constant 0 : i32
    %c0_i32_1 = arith.constant 0 : i32
    %c0_i32_2 = arith.constant 0 : i32
    return %arg1, %c0_i32, %c0_i32_0, %c0_i32_1 : i32, i32, i32, i32
  }
  func.func @transform_3(%arg0: i32, %arg1: i32) -> (i32, i32, i32, i32) {
    %c0_i32 = arith.constant 0 : i32
    %c0_i32_0 = arith.constant 0 : i32
    %c0_i32_1 = arith.constant 0 : i32
    %c0_i32_2 = arith.constant 0 : i32
    return %arg1, %c0_i32, %c0_i32_0, %c0_i32_1 : i32, i32, i32, i32
  }
  func.func @transform_4(%arg0: i32, %arg1: i32) -> (i32, i32, i32, i32) {
    %c0_i32 = arith.constant 0 : i32
    %c0_i32_0 = arith.constant 0 : i32
    %c0_i32_1 = arith.constant 0 : i32
    %c0_i32_2 = arith.constant 0 : i32
    return %arg1, %c0_i32, %c0_i32_0, %c0_i32_1 : i32, i32, i32, i32
  }
  func.func @transform_5(%arg0: i32, %arg1: i32) -> (i32, i32, i32, i32) {
    %c0_i32 = arith.constant 0 : i32
    %c0_i32_0 = arith.constant 0 : i32
    %c0_i32_1 = arith.constant 0 : i32
    return %arg0, %arg1, %c0_i32, %c0_i32_0 : i32, i32, i32, i32
  }
}

module attributes {stable_mosaic.version = 11 : i64} {
  func.func @_norm_gate_proj_kernel(%arg0: i32, %arg1: memref<128x64xf32, #tpu.memory_space<vmem>>, %arg2: memref<128x64xf32, #tpu.memory_space<vmem>>, %arg3: memref<1x64xf32, #tpu.memory_space<vmem>>, %arg4: memref<1x64xf32, #tpu.memory_space<vmem>>, %arg5: memref<64x32xbf16, #tpu.memory_space<vmem>>, %arg6: memref<128x32xf32, #tpu.memory_space<vmem>>) attributes {dimension_semantics = [#tpu.dimension_semantics<parallel>], iteration_bounds = array<i64: 1>, scalar_prefetch = 0 : i64, scratch_operands = 0 : i64, tpu.core_type = #tpu.core_type<tc>, window_params = [{transform_indices = @transform_0, window_bounds = array<i64: 128, 64>}, {transform_indices = @transform_1, window_bounds = array<i64: 128, 64>}, {pipeline_mode = #tpu.pipeline_mode<synchronous>, transform_indices = @transform_2, window_bounds = array<i64: 1, 64>}, {pipeline_mode = #tpu.pipeline_mode<synchronous>, transform_indices = @transform_3, window_bounds = array<i64: 1, 64>}, {pipeline_mode = #tpu.pipeline_mode<synchronous>, transform_indices = @transform_4, window_bounds = array<i64: 64, 32>}, {transform_indices = @transform_5, window_bounds = array<i64: 128, 32>}]} {
    %c0 = arith.constant 0 : index
    %c0_0 = arith.constant 0 : index
    %0 = vector.load %arg1[%c0, %c0_0] : memref<128x64xf32, #tpu.memory_space<vmem>>, vector<128x64xf32>
    %cst = arith.constant dense<0.000000e+00> : vector<128xf32>
    %1 = vector.multi_reduction <add>, %0, %cst [1] : vector<128x64xf32> to vector<128xf32>
    %2 = vector.shape_cast %1 : vector<128xf32> to vector<128x1xf32>
    %cst_1 = arith.constant 6.400000e+01 : f32
    %3 = vector.broadcast %cst_1 : f32 to vector<128x1xf32>
    %4 = arith.divf %2, %3 : vector<128x1xf32>
    %5 = vector.broadcast %4 : vector<128x1xf32> to vector<128x64xf32>
    %6 = arith.subf %0, %5 : vector<128x64xf32>
    %7 = arith.mulf %6, %6 : vector<128x64xf32>
    %cst_2 = arith.constant dense<0.000000e+00> : vector<128xf32>
    %8 = vector.multi_reduction <add>, %7, %cst_2 [1] : vector<128x64xf32> to vector<128xf32>
    %9 = vector.shape_cast %8 : vector<128xf32> to vector<128x1xf32>
    %cst_3 = arith.constant 6.400000e+01 : f32
    %10 = vector.broadcast %cst_3 : f32 to vector<128x1xf32>
    %11 = arith.divf %9, %10 : vector<128x1xf32>
    %12 = vector.broadcast %4 : vector<128x1xf32> to vector<128x64xf32>
    %13 = arith.subf %0, %12 : vector<128x64xf32>
    %cst_4 = arith.constant 9.99999974E-6 : f32
    %14 = vector.broadcast %cst_4 : f32 to vector<128x1xf32>
    %15 = arith.addf %11, %14 : vector<128x1xf32>
    %16 = math.rsqrt %15 : vector<128x1xf32>
    %17 = vector.broadcast %16 : vector<128x1xf32> to vector<128x64xf32>
    %18 = arith.mulf %13, %17 : vector<128x64xf32>
    %c0_5 = arith.constant 0 : index
    %c0_6 = arith.constant 0 : index
    %19 = vector.load %arg3[%c0_5, %c0_6] : memref<1x64xf32, #tpu.memory_space<vmem>>, vector<1x64xf32>
    %20 = vector.broadcast %19 : vector<1x64xf32> to vector<128x64xf32>
    %21 = arith.mulf %18, %20 : vector<128x64xf32>
    %c0_7 = arith.constant 0 : index
    %c0_8 = arith.constant 0 : index
    %22 = vector.load %arg4[%c0_7, %c0_8] : memref<1x64xf32, #tpu.memory_space<vmem>>, vector<1x64xf32>
    %23 = vector.broadcast %22 : vector<1x64xf32> to vector<128x64xf32>
    %24 = arith.addf %21, %23 : vector<128x64xf32>
    %c0_9 = arith.constant 0 : index
    %c0_10 = arith.constant 0 : index
    %25 = vector.load %arg2[%c0_9, %c0_10] : memref<128x64xf32, #tpu.memory_space<vmem>>, vector<128x64xf32>
    %26 = arith.negf %25 : vector<128x64xf32>
    %27 = math.exp %26 : vector<128x64xf32>
    %cst_11 = arith.constant 1.000000e+00 : f32
    %28 = vector.broadcast %cst_11 : f32 to vector<128x64xf32>
    %29 = arith.addf %28, %27 : vector<128x64xf32>
    %30 = arith.divf %28, %29 : vector<128x64xf32>
    %31 = arith.mulf %25, %30 : vector<128x64xf32>
    %32 = arith.mulf %24, %31 : vector<128x64xf32>
    %33 = arith.truncf %32 : vector<128x64xf32> to vector<128x64xbf16>
    %c0_12 = arith.constant 0 : index
    %c0_13 = arith.constant 0 : index
    %34 = vector.load %arg5[%c0_12, %c0_13] : memref<64x32xbf16, #tpu.memory_space<vmem>>, vector<64x32xbf16>
    %cst_14 = arith.constant dense<0.000000e+00> : vector<128x32xf32>
    %35 = tpu.matmul %33, %34, %cst_14 {dimension_numbers = #tpu.dot_dimension_numbers<[1], [0], [0], [1], [0, 0, 1, 1], [], []>} : vector<128x64xbf16>, vector<64x32xbf16>, vector<128x32xf32> -> vector<128x32xf32>
    %c0_15 = arith.constant 0 : index
    %c0_16 = arith.constant 0 : index
    %36 = vector.load %arg6[%c0_15, %c0_16] : memref<128x32xf32, #tpu.memory_space<vmem>>, vector<128x32xf32>
    tpu.vector_store %arg6[%c0_15, %c0_16], %35 {strides = array<i32>} : memref<128x32xf32, #tpu.memory_space<vmem>>, vector<128x32xf32>,
    return
  }
  func.func @transform_0(%arg0: i32) -> (i32, i32) {
    %c0_i32 = arith.constant 0 : i32
    %c0_i32_0 = arith.constant 0 : i32
    return %arg0, %c0_i32 : i32, i32
  }
  func.func @transform_1(%arg0: i32) -> (i32, i32) {
    %c0_i32 = arith.constant 0 : i32
    %c0_i32_0 = arith.constant 0 : i32
    return %arg0, %c0_i32 : i32, i32
  }
  func.func @transform_2(%arg0: i32) -> (i32, i32) {
    %c0_i32 = arith.constant 0 : i32
    %c0_i32_0 = arith.constant 0 : i32
    %c0_i32_1 = arith.constant 0 : i32
    return %c0_i32, %c0_i32_0 : i32, i32
  }
  func.func @transform_3(%arg0: i32) -> (i32, i32) {
    %c0_i32 = arith.constant 0 : i32
    %c0_i32_0 = arith.constant 0 : i32
    %c0_i32_1 = arith.constant 0 : i32
    return %c0_i32, %c0_i32_0 : i32, i32
  }
  func.func @transform_4(%arg0: i32) -> (i32, i32) {
    %c0_i32 = arith.constant 0 : i32
    %c0_i32_0 = arith.constant 0 : i32
    %c0_i32_1 = arith.constant 0 : i32
    return %c0_i32, %c0_i32_0 : i32, i32
  }
  func.func @transform_5(%arg0: i32) -> (i32, i32) {
    %c0_i32 = arith.constant 0 : i32
    %c0_i32_0 = arith.constant 0 : i32
    return %arg0, %c0_i32 : i32, i32
  }
}

</mosaic_0001>

<llo_original>
// kernel: _lambda_.4
$region0: #{_lambda_.4}
  #allocation0 [shape = 'u32[]', space=smem, size = 0x4, offset = 0x4, fixed_abs, tag = 'smem constant byte address 0x4 - core index']
  #allocation1 [shape = 'u32[144,128]{1,0:T(1,128)}', space=vmem, size = 0x12000, scoped, tag = 'internal scratch']
  #allocation2 [shape = 'f32[256,128]{1,0:T(8,128)}', space=vmem, size = 0x20000, scoped, tag = 'scratch operand']
  %s0 = inlined_call_operand.vmem [shape: bf16[256,32], index: 0, kind: input, shape index: {}]
  %s1 = inlined_call_operand.vmem [shape: bf16[32,128], index: 1, kind: input, shape index: {}]
  %s2 = inlined_call_operand.vmem [shape: f32[256,128], index: 2, kind: output, shape index: {}]
  %s3 = sld [smem:[#allocation0]]
  $region26: #{_lambda_.4} parent=0
    _
  %s5 = ssub.s32 1, %s3
  %s6 = scalar_select 0, %s5, %s3
  // Predicated region
  $region2: #{_lambda_.4} parent=0 // pred_check
    _
  $region3: #{_lambda_.4} parent=0 // pred_check_branch
    %8 = sbr.rel (0) target = $region5
  $region4: #{_lambda_.4} parent=0 // pred_region
    _
  $region5: #{_lambda_.4} parent=0 // pred_fallthru
    _
  // Predicated region
  $region6: #{_lambda_.4} parent=0 // pred_check
    _
  $region7: #{_lambda_.4} parent=0 // pred_check_branch
    %10 = sbr.rel (0) target = $region9
  $region8: #{_lambda_.4} parent=0 // pred_region
    _
  $region9: #{_lambda_.4} parent=0 // pred_fallthru
    _
  %p12 = scmp.eq.s32.totalorder 0, 0
  // Predicated region
  $region10: #{_lambda_.4} parent=0 // pred_check
    %p13 = pneg %p12
  $region11: #{_lambda_.4} parent=0 // pred_check_branch
    %15 = sbr.rel (%p13) target = $region13
  $region12: #{_lambda_.4} parent=0 // pred_region
    %16 = vst [vmem:[#allocation2] sm:$0xff] 0.0
    %17 = vst [vmem:[#allocation2 + $0x8] sm:$0xff] 0.0
    %18 = vst [vmem:[#allocation2 + $0x10] sm:$0xff] 0.0
    %19 = vst [vmem:[#allocation2 + $0x18] sm:$0xff] 0.0
    %20 = vst [vmem:[#allocation2 + $0x20] sm:$0xff] 0.0
    %21 = vst [vmem:[#allocation2 + $0x28] sm:$0xff] 0.0
    %22 = vst [vmem:[#allocation2 + $0x30] sm:$0xff] 0.0
    %23 = vst [vmem:[#allocation2 + $0x38] sm:$0xff] 0.0
    %24 = vst [vmem:[#allocation2 + $0x40] sm:$0xff] 0.0
    %25 = vst [vmem:[#allocation2 + $0x48] sm:$0xff] 0.0
    %26 = vst [vmem:[#allocation2 + $0x50] sm:$0xff] 0.0
    %27 = vst [vmem:[#allocation2 + $0x58] sm:$0xff] 0.0
    %28 = vst [vmem:[#allocation2 + $0x60] sm:$0xff] 0.0
    %29 = vst [vmem:[#allocation2 + $0x68] sm:$0xff] 0.0
    %30 = vst [vmem:[#allocation2 + $0x70] sm:$0xff] 0.0
    %31 = vst [vmem:[#allocation2 + $0x78] sm:$0xff] 0.0
    %32 = vst [vmem:[#allocation2 + $0x80] sm:$0xff] 0.0
    %33 = vst [vmem:[#allocation2 + $0x88] sm:$0xff] 0.0
    %34 = vst [vmem:[#allocation2 + $0x90] sm:$0xff] 0.0
    %35 = vst [vmem:[#allocation2 + $0x98] sm:$0xff] 0.0
    %36 = vst [vmem:[#allocation2 + $0xa0] sm:$0xff] 0.0
    %37 = vst [vmem:[#allocation2 + $0xa8] sm:$0xff] 0.0
    %38 = vst [vmem:[#allocation2 + $0xb0] sm:$0xff] 0.0
    %39 = vst [vmem:[#allocation2 + $0xb8] sm:$0xff] 0.0
    %40 = vst [vmem:[#allocation2 + $0xc0] sm:$0xff] 0.0
    %41 = vst [vmem:[#allocation2 + $0xc8] sm:$0xff] 0.0
    %42 = vst [vmem:[#allocation2 + $0xd0] sm:$0xff] 0.0
    %43 = vst [vmem:[#allocation2 + $0xd8] sm:$0xff] 0.0
    %44 = vst [vmem:[#allocation2 + $0xe0] sm:$0xff] 0.0
    %45 = vst [vmem:[#allocation2 + $0xe8] sm:$0xff] 0.0
    %46 = vst [vmem:[#allocation2 + $0xf0] sm:$0xff] 0.0
    %47 = vst [vmem:[#allocation2 + $0xf8] sm:$0xff] 0.0
  $region13: #{_lambda_.4} parent=0 // pred_fallthru
    _
  %v48 = vld [vmem:[#allocation2] sm:$0xff]
  %v49 = vld [vmem:[#allocation2 + $0x8] sm:$0xff]
  %v50 = vld [vmem:[#allocation2 + $0x10] sm:$0xff]
  %v51 = vld [vmem:[#allocation2 + $0x18] sm:$0xff]
  %v52 = vld [vmem:[#allocation2 + $0x20] sm:$0xff]
  %v53 = vld [vmem:[#allocation2 + $0x28] sm:$0xff]
  %v54 = vld [vmem:[#allocation2 + $0x30] sm:$0xff]
  %v55 = vld [vmem:[#allocation2 + $0x38] sm:$0xff]
  %v56 = vld [vmem:[#allocation2 + $0x40] sm:$0xff]
  %v57 = vld [vmem:[#allocation2 + $0x48] sm:$0xff]
  %v58 = vld [vmem:[#allocation2 + $0x50] sm:$0xff]
  %v59 = vld [vmem:[#allocation2 + $0x58] sm:$0xff]
  %v60 = vld [vmem:[#allocation2 + $0x60] sm:$0xff]
  %v61 = vld [vmem:[#allocation2 + $0x68] sm:$0xff]
  %v62 = vld [vmem:[#allocation2 + $0x70] sm:$0xff]
  %v63 = vld [vmem:[#allocation2 + $0x78] sm:$0xff]
  %v64 = vld [vmem:[#allocation2 + $0x80] sm:$0xff]
  %v65 = vld [vmem:[#allocation2 + $0x88] sm:$0xff]
  %v66 = vld [vmem:[#allocation2 + $0x90] sm:$0xff]
  %v67 = vld [vmem:[#allocation2 + $0x98] sm:$0xff]
  %v68 = vld [vmem:[#allocation2 + $0xa0] sm:$0xff]
  %v69 = vld [vmem:[#allocation2 + $0xa8] sm:$0xff]
  %v70 = vld [vmem:[#allocation2 + $0xb0] sm:$0xff]
  %v71 = vld [vmem:[#allocation2 + $0xb8] sm:$0xff]
  %v72 = vld [vmem:[#allocation2 + $0xc0] sm:$0xff]
  %v73 = vld [vmem:[#allocation2 + $0xc8] sm:$0xff]
  %v74 = vld [vmem:[#allocation2 + $0xd0] sm:$0xff]
  %v75 = vld [vmem:[#allocation2 + $0xd8] sm:$0xff]
  %v76 = vld [vmem:[#allocation2 + $0xe0] sm:$0xff]
  %v77 = vld [vmem:[#allocation2 + $0xe8] sm:$0xff]
  %v78 = vld [vmem:[#allocation2 + $0xf0] sm:$0xff]
  %v79 = vld [vmem:[#allocation2 + $0xf8] sm:$0xff]
  %v80 = vld [vmem:[%s0] sm:$0xf]
  %v81 = vld [vmem:[%s0 + $0x4] sm:$0xf]
  %v82 = vld [vmem:[%s0 + $0x8] sm:$0xf]
  %v83 = vld [vmem:[%s0 + $0xc] sm:$0xf]
  %v84 = vld [vmem:[%s0 + $0x10] sm:$0xf]
  %v85 = vld [vmem:[%s0 + $0x14] sm:$0xf]
  %v86 = vld [vmem:[%s0 + $0x18] sm:$0xf]
  %v87 = vld [vmem:[%s0 + $0x1c] sm:$0xf]
  %v88 = vld [vmem:[%s0 + $0x20] sm:$0xf]
  %v89 = vld [vmem:[%s0 + $0x24] sm:$0xf]
  %v90 = vld [vmem:[%s0 + $0x28] sm:$0xf]
  %v91 = vld [vmem:[%s0 + $0x2c] sm:$0xf]
  %v92 = vld [vmem:[%s0 + $0x30] sm:$0xf]
  %v93 = vld [vmem:[%s0 + $0x34] sm:$0xf]
  %v94 = vld [vmem:[%s0 + $0x38] sm:$0xf]
  %v95 = vld [vmem:[%s0 + $0x3c] sm:$0xf]
  %v96 = vld [vmem:[%s0 + $0x40] sm:$0xf]
  %v97 = vld [vmem:[%s0 + $0x44] sm:$0xf]
  %v98 = vld [vmem:[%s0 + $0x48] sm:$0xf]
  %v99 = vld [vmem:[%s0 + $0x4c] sm:$0xf]
  %v100 = vld [vmem:[%s0 + $0x50] sm:$0xf]
  %v101 = vld [vmem:[%s0 + $0x54] sm:$0xf]
  %v102 = vld [vmem:[%s0 + $0x58] sm:$0xf]
  %v103 = vld [vmem:[%s0 + $0x5c] sm:$0xf]
  %v104 = vld [vmem:[%s0 + $0x60] sm:$0xf]
  %v105 = vld [vmem:[%s0 + $0x64] sm:$0xf]
  %v106 = vld [vmem:[%s0 + $0x68] sm:$0xf]
  %v107 = vld [vmem:[%s0 + $0x6c] sm:$0xf]
  %v108 = vld [vmem:[%s0 + $0x70] sm:$0xf]
  %v109 = vld [vmem:[%s0 + $0x74] sm:$0xf]
  %v110 = vld [vmem:[%s0 + $0x78] sm:$0xf]
  %v111 = vld [vmem:[%s0 + $0x7c] sm:$0xf]
  %v112 = vld [vmem:[%s1] sm:$0xf]
  %v113 = vld [vmem:[%s1 + $0x4] sm:$0xf]
  %v114 = vld [vmem:[%s1 + $0x8] sm:$0xf]
  %v115 = vld [vmem:[%s1 + $0xc] sm:$0xf]
  %v148 = vunpack.c.l.b16 %v80
  %v149 = vunpack.c.l.b16 %v81
  %v150 = vunpack.c.l.b16 %v82
  %v151 = vunpack.c.l.b16 %v83
  %v152 = vunpack.c.l.b16 %v84
  %v153 = vunpack.c.l.b16 %v85
  %v154 = vunpack.c.l.b16 %v86
  %v155 = vunpack.c.l.b16 %v87
  %v156 = vunpack.c.l.b16 %v88
  %v157 = vunpack.c.l.b16 %v89
  %v158 = vunpack.c.l.b16 %v90
  %v159 = vunpack.c.l.b16 %v91
  %v160 = vunpack.c.l.b16 %v92
  %v161 = vunpack.c.l.b16 %v93
  %v162 = vunpack.c.l.b16 %v94
  %v163 = vunpack.c.l.b16 %v95
  %v164 = vunpack.c.l.b16 %v96
  %v165 = vunpack.c.l.b16 %v97
  %v166 = vunpack.c.l.b16 %v98
  %v167 = vunpack.c.l.b16 %v99
  %v168 = vunpack.c.l.b16 %v100
  %v169 = vunpack.c.l.b16 %v101
  %v170 = vunpack.c.l.b16 %v102
  %v171 = vunpack.c.l.b16 %v103
  %v172 = vunpack.c.l.b16 %v104
  %v173 = vunpack.c.l.b16 %v105
  %v174 = vunpack.c.l.b16 %v106
  %v175 = vunpack.c.l.b16 %v107
  %v176 = vunpack.c.l.b16 %v108
  %v177 = vunpack.c.l.b16 %v109
  %v178 = vunpack.c.l.b16 %v110
  %v179 = vunpack.c.l.b16 %v111
  %v180 = vpack.c.b16 %v149, %v148
  %v181 = vpack.c.b16 %v151, %v150
  %v182 = vpack.c.b16 %v153, %v152
  %v183 = vpack.c.b16 %v155, %v154
  %v184 = vpack.c.b16 %v157, %v156
  %v185 = vpack.c.b16 %v159, %v158
  %v186 = vpack.c.b16 %v161, %v160
  %v187 = vpack.c.b16 %v163, %v162
  %v188 = vpack.c.b16 %v165, %v164
  %v189 = vpack.c.b16 %v167, %v166
  %v190 = vpack.c.b16 %v169, %v168
  %v191 = vpack.c.b16 %v171, %v170
  %v192 = vpack.c.b16 %v173, %v172
  %v193 = vpack.c.b16 %v175, %v174
  %v194 = vpack.c.b16 %v177, %v176
  %v195 = vpack.c.b16 %v179, %v178
  %v200 = vunpack.c.l.b16 %v112
  %v201 = vunpack.c.l.b16 %v113
  %v202 = vunpack.c.l.b16 %v114
  %v203 = vunpack.c.l.b16 %v115
  %v204 = vpack.c.b16 %v201, %v200
  %v205 = vpack.c.b16 %v203, %v202
  %vm208 = vcmask 261120
  %v210 = vsel %vm208, %v180, 0
  %v213 = vsel %vm208, %v181, 0
  %v216 = vsel %vm208, %v182, 0
  %v219 = vsel %vm208, %v183, 0
  %v222 = vsel %vm208, %v184, 0
  %v225 = vsel %vm208, %v185, 0
  %v228 = vsel %vm208, %v186, 0
  %v231 = vsel %vm208, %v187, 0
  %v234 = vsel %vm208, %v188, 0
  %v237 = vsel %vm208, %v189, 0
  %v240 = vsel %vm208, %v190, 0
  %v243 = vsel %vm208, %v191, 0
  %v246 = vsel %vm208, %v192, 0
  %v249 = vsel %vm208, %v193, 0
  %v252 = vsel %vm208, %v194, 0
  %v255 = vsel %vm208, %v195, 0
  %257 = vmatprep.subr.bf16.mxu0 0
  %258 = vmatpush1.bf16.msra.mxu0 %v204
  %259 = vmatprep.subr.bf16.mxu0 0
  %260 = vmatpush1.bf16.msra.mxu0 %v205
  %261 = vmatprep.subr.bf16.mxu0 0
  %262 = vmatpush1.bf16.msra.mxu0 0
  %263 = vmatprep.subr.bf16.mxu0 0
  %264 = vmatpush1.bf16.msra.mxu0 0
  %265 = vmatprep.subr.bf16.mxu0 0
  %266 = vmatpush1.bf16.msra.mxu0 0
  %267 = vmatprep.subr.bf16.mxu0 0
  %268 = vmatpush1.bf16.msra.mxu0 0
  %269 = vmatprep.subr.bf16.mxu0 0
  %270 = vmatpush1.bf16.msra.mxu0 0
  %271 = vmatprep.subr.bf16.mxu0 0
  %272 = vmatpush1.bf16.msra.mxu0 0
  %273 = vmatprep.subr.bf16.mxu0 0
  %274 = vmatpush1.bf16.msra.mxu0 0
  %275 = vmatprep.subr.bf16.mxu0 0
  %276 = vmatpush1.bf16.msra.mxu0 0
  %277 = vmatprep.subr.bf16.mxu0 0
  %278 = vmatpush1.bf16.msra.mxu0 0
  %279 = vmatprep.subr.bf16.mxu0 0
  %280 = vmatpush1.bf16.msra.mxu0 0
  %281 = vmatprep.subr.bf16.mxu0 0
  %282 = vmatpush1.bf16.msra.mxu0 0
  %283 = vmatprep.subr.bf16.mxu0 0
  %284 = vmatpush1.bf16.msra.mxu0 0
  %285 = vmatprep.subr.bf16.mxu0 0
  %286 = vmatpush1.bf16.msra.mxu0 0
  %287 = vmatprep.subr.bf16.mxu0 0
  %288 = vmatpush1.bf16.msra.mxu0 0
  %289 = vmatprep.mubr.bf16.mxu0 0
  %290 = vmatmul.mubr.bf16.gmra.mrb[0].mxu0 %v210
  %v291 = vpop.f32.mrb[0].mxu0
  %v292 = vadd.f32 0.0, %v291
  %v293 = vpop.f32.mrb[0].mxu0
  %v294 = vpop.f32.mrb[0].mxu0
  %v295 = vadd.f32 0.0, %v294
  %v296 = vpop.f32.mrb[0].mxu0
  %297 = vmatprep.mubr.bf16.mxu0 0
  %298 = vmatmul.mubr.bf16.gmra.mrb[0].mxu0 %v213
  %v299 = vpop.f32.mrb[0].mxu0
  %v300 = vadd.f32 0.0, %v299
  %v301 = vpop.f32.mrb[0].mxu0
  %v302 = vpop.f32.mrb[0].mxu0
  %v303 = vadd.f32 0.0, %v302
  %v304 = vpop.f32.mrb[0].mxu0
  %305 = vmatprep.mubr.bf16.mxu0 0
  %306 = vmatmul.mubr.bf16.gmra.mrb[0].mxu0 %v216
  %v307 = vpop.f32.mrb[0].mxu0
  %v308 = vadd.f32 0.0, %v307
  %v309 = vpop.f32.mrb[0].mxu0
  %v310 = vpop.f32.mrb[0].mxu0
  %v311 = vadd.f32 0.0, %v310
  %v312 = vpop.f32.mrb[0].mxu0
  %313 = vmatprep.mubr.bf16.mxu0 0
  %314 = vmatmul.mubr.bf16.gmra.mrb[0].mxu0 %v219
  %v315 = vpop.f32.mrb[0].mxu0
  %v316 = vadd.f32 0.0, %v315
  %v317 = vpop.f32.mrb[0].mxu0
  %v318 = vpop.f32.mrb[0].mxu0
  %v319 = vadd.f32 0.0, %v318
  %v320 = vpop.f32.mrb[0].mxu0
  %321 = vmatprep.mubr.bf16.mxu0 0
  %322 = vmatmul.mubr.bf16.gmra.mrb[0].mxu0 %v222
  %v323 = vpop.f32.mrb[0].mxu0
  %v324 = vadd.f32 0.0, %v323
  %v325 = vpop.f32.mrb[0].mxu0
  %v326 = vpop.f32.mrb[0].mxu0
  %v327 = vadd.f32 0.0, %v326
  %v328 = vpop.f32.mrb[0].mxu0
  %329 = vmatprep.mubr.bf16.mxu0 0
  %330 = vmatmul.mubr.bf16.gmra.mrb[0].mxu0 %v225
  %v331 = vpop.f32.mrb[0].mxu0
  %v332 = vadd.f32 0.0, %v331
  %v333 = vpop.f32.mrb[0].mxu0
  %v334 = vpop.f32.mrb[0].mxu0
  %v335 = vadd.f32 0.0, %v334
  %v336 = vpop.f32.mrb[0].mxu0
  %337 = vmatprep.mubr.bf16.mxu0 0
  %338 = vmatmul.mubr.bf16.gmra.mrb[0].mxu0 %v228
  %v339 = vpop.f32.mrb[0].mxu0
  %v340 = vadd.f32 0.0, %v339
  %v341 = vpop.f32.mrb[0].mxu0
  %v342 = vpop.f32.mrb[0].mxu0
  %v343 = vadd.f32 0.0, %v342
  %v344 = vpop.f32.mrb[0].mxu0
  %345 = vmatprep.mubr.bf16.mxu0 0
  %346 = vmatmul.mubr.bf16.gmra.mrb[0].mxu0 %v231
  %v347 = vpop.f32.mrb[0].mxu0
  %v348 = vadd.f32 0.0, %v347
  %v349 = vpop.f32.mrb[0].mxu0
  %v350 = vpop.f32.mrb[0].mxu0
  %v351 = vadd.f32 0.0, %v350
  %v352 = vpop.f32.mrb[0].mxu0
  %353 = vmatprep.mubr.bf16.mxu0 0
  %354 = vmatmul.mubr.bf16.gmra.mrb[0].mxu0 %v234
  %v355 = vpop.f32.mrb[0].mxu0
  %v356 = vadd.f32 0.0, %v355
  %v357 = vpop.f32.mrb[0].mxu0
  %v358 = vpop.f32.mrb[0].mxu0
  %v359 = vadd.f32 0.0, %v358
  %v360 = vpop.f32.mrb[0].mxu0
  %361 = vmatprep.mubr.bf16.mxu0 0
  %362 = vmatmul.mubr.bf16.gmra.mrb[0].mxu0 %v237
  %v363 = vpop.f32.mrb[0].mxu0
  %v364 = vadd.f32 0.0, %v363
  %v365 = vpop.f32.mrb[0].mxu0
  %v366 = vpop.f32.mrb[0].mxu0
  %v367 = vadd.f32 0.0, %v366
  %v368 = vpop.f32.mrb[0].mxu0
  %369 = vmatprep.mubr.bf16.mxu0 0
  %370 = vmatmul.mubr.bf16.gmra.mrb[0].mxu0 %v240
  %v371 = vpop.f32.mrb[0].mxu0
  %v372 = vadd.f32 0.0, %v371
  %v373 = vpop.f32.mrb[0].mxu0
  %v374 = vpop.f32.mrb[0].mxu0
  %v375 = vadd.f32 0.0, %v374
  %v376 = vpop.f32.mrb[0].mxu0
  %377 = vmatprep.mubr.bf16.mxu0 0
  %378 = vmatmul.mubr.bf16.gmra.mrb[0].mxu0 %v243
  %v379 = vpop.f32.mrb[0].mxu0
  %v380 = vadd.f32 0.0, %v379
  %v381 = vpop.f32.mrb[0].mxu0
  %v382 = vpop.f32.mrb[0].mxu0
  %v383 = vadd.f32 0.0, %v382
  %v384 = vpop.f32.mrb[0].mxu0
  %385 = vmatprep.mubr.bf16.mxu0 0
  %386 = vmatmul.mubr.bf16.gmra.mrb[0].mxu0 %v246
  %v387 = vpop.f32.mrb[0].mxu0
  %v388 = vadd.f32 0.0, %v387
  %v389 = vpop.f32.mrb[0].mxu0
  %v390 = vpop.f32.mrb[0].mxu0
  %v391 = vadd.f32 0.0, %v390
  %v392 = vpop.f32.mrb[0].mxu0
  %393 = vmatprep.mubr.bf16.mxu0 0
  %394 = vmatmul.mubr.bf16.gmra.mrb[0].mxu0 %v249
  %v395 = vpop.f32.mrb[0].mxu0
  %v396 = vadd.f32 0.0, %v395
  %v397 = vpop.f32.mrb[0].mxu0
  %v398 = vpop.f32.mrb[0].mxu0
  %v399 = vadd.f32 0.0, %v398
  %v400 = vpop.f32.mrb[0].mxu0
  %401 = vmatprep.mubr.bf16.mxu0 0
  %402 = vmatmul.mubr.bf16.gmra.mrb[0].mxu0 %v252
  %v403 = vpop.f32.mrb[0].mxu0
  %v404 = vadd.f32 0.0, %v403
  %v405 = vpop.f32.mrb[0].mxu0
  %v406 = vpop.f32.mrb[0].mxu0
  %v407 = vadd.f32 0.0, %v406
  %v408 = vpop.f32.mrb[0].mxu0
  %409 = vmatprep.mubr.bf16.mxu0 0
  %410 = vmatmul.mubr.bf16.gmra.mrb[0].mxu0 %v255
  %v411 = vpop.f32.mrb[0].mxu0
  %v412 = vadd.f32 0.0, %v411
  %v413 = vpop.f32.mrb[0].mxu0
  %v414 = vpop.f32.mrb[0].mxu0
  %v415 = vadd.f32 0.0, %v414
  %v416 = vpop.f32.mrb[0].mxu0
  %417 = vdwg.mxu0
  %v418 = vadd.f32 %v48, %v292
  %v419 = vadd.f32 %v49, %v295
  %v420 = vadd.f32 %v50, %v300
  %v421 = vadd.f32 %v51, %v303
  %v422 = vadd.f32 %v52, %v308
  %v423 = vadd.f32 %v53, %v311
  %v424 = vadd.f32 %v54, %v316
  %v425 = vadd.f32 %v55, %v319
  %v426 = vadd.f32 %v56, %v324
  %v427 = vadd.f32 %v57, %v327
  %v428 = vadd.f32 %v58, %v332
  %v429 = vadd.f32 %v59, %v335
  %v430 = vadd.f32 %v60, %v340
  %v431 = vadd.f32 %v61, %v343
  %v432 = vadd.f32 %v62, %v348
  %v433 = vadd.f32 %v63, %v351
  %v434 = vadd.f32 %v64, %v356
  %v435 = vadd.f32 %v65, %v359
  %v436 = vadd.f32 %v66, %v364
  %v437 = vadd.f32 %v67, %v367
  %v438 = vadd.f32 %v68, %v372
  %v439 = vadd.f32 %v69, %v375
  %v440 = vadd.f32 %v70, %v380
  %v441 = vadd.f32 %v71, %v383
  %v442 = vadd.f32 %v72, %v388
  %v443 = vadd.f32 %v73, %v391
  %v444 = vadd.f32 %v74, %v396
  %v445 = vadd.f32 %v75, %v399
  %v446 = vadd.f32 %v76, %v404
  %v447 = vadd.f32 %v77, %v407
  %v448 = vadd.f32 %v78, %v412
  %v449 = vadd.f32 %v79, %v415
  %450 = vst [vmem:[#allocation2] sm:$0xff] %v418
  %451 = vst [vmem:[#allocation2 + $0x8] sm:$0xff] %v419
  %452 = vst [vmem:[#allocation2 + $0x10] sm:$0xff] %v420
  %453 = vst [vmem:[#allocation2 + $0x18] sm:$0xff] %v421
  %454 = vst [vmem:[#allocation2 + $0x20] sm:$0xff] %v422
  %455 = vst [vmem:[#allocation2 + $0x28] sm:$0xff] %v423
  %456 = vst [vmem:[#allocation2 + $0x30] sm:$0xff] %v424
  %457 = vst [vmem:[#allocation2 + $0x38] sm:$0xff] %v425
  %458 = vst [vmem:[#allocation2 + $0x40] sm:$0xff] %v426
  %459 = vst [vmem:[#allocation2 + $0x48] sm:$0xff] %v427
  %460 = vst [vmem:[#allocation2 + $0x50] sm:$0xff] %v428
  %461 = vst [vmem:[#allocation2 + $0x58] sm:$0xff] %v429
  %462 = vst [vmem:[#allocation2 + $0x60] sm:$0xff] %v430
  %463 = vst [vmem:[#allocation2 + $0x68] sm:$0xff] %v431
  %464 = vst [vmem:[#allocation2 + $0x70] sm:$0xff] %v432
  %465 = vst [vmem:[#allocation2 + $0x78] sm:$0xff] %v433
  %466 = vst [vmem:[#allocation2 + $0x80] sm:$0xff] %v434
  %467 = vst [vmem:[#allocation2 + $0x88] sm:$0xff] %v435
  %468 = vst [vmem:[#allocation2 + $0x90] sm:$0xff] %v436
  %469 = vst [vmem:[#allocation2 + $0x98] sm:$0xff] %v437
  %470 = vst [vmem:[#allocation2 + $0xa0] sm:$0xff] %v438
  %471 = vst [vmem:[#allocation2 + $0xa8] sm:$0xff] %v439
  %472 = vst [vmem:[#allocation2 + $0xb0] sm:$0xff] %v440
  %473 = vst [vmem:[#allocation2 + $0xb8] sm:$0xff] %v441
  %474 = vst [vmem:[#allocation2 + $0xc0] sm:$0xff] %v442
  %475 = vst [vmem:[#allocation2 + $0xc8] sm:$0xff] %v443
  %476 = vst [vmem:[#allocation2 + $0xd0] sm:$0xff] %v444
  %477 = vst [vmem:[#allocation2 + $0xd8] sm:$0xff] %v445
  %478 = vst [vmem:[#allocation2 + $0xe0] sm:$0xff] %v446
  %479 = vst [vmem:[#allocation2 + $0xe8] sm:$0xff] %v447
  %480 = vst [vmem:[#allocation2 + $0xf0] sm:$0xff] %v448
  %481 = vst [vmem:[#allocation2 + $0xf8] sm:$0xff] %v449
  // Predicated region
  $region14: #{_lambda_.4} parent=0 // pred_check
    %p482 = pneg %p12
  $region15: #{_lambda_.4} parent=0 // pred_check_branch
    %484 = sbr.rel (%p482) target = $region17
  $region16: #{_lambda_.4} parent=0 // pred_region
    %v485 = vld [vmem:[#allocation2] sm:$0xff]
    %v486 = vld [vmem:[#allocation2 + $0x8] sm:$0xff]
    %v487 = vld [vmem:[#allocation2 + $0x10] sm:$0xff]
    %v488 = vld [vmem:[#allocation2 + $0x18] sm:$0xff]
    %v489 = vld [vmem:[#allocation2 + $0x20] sm:$0xff]
    %v490 = vld [vmem:[#allocation2 + $0x28] sm:$0xff]
    %v491 = vld [vmem:[#allocation2 + $0x30] sm:$0xff]
    %v492 = vld [vmem:[#allocation2 + $0x38] sm:$0xff]
    %v493 = vld [vmem:[#allocation2 + $0x40] sm:$0xff]
    %v494 = vld [vmem:[#allocation2 + $0x48] sm:$0xff]
    %v495 = vld [vmem:[#allocation2 + $0x50] sm:$0xff]
    %v496 = vld [vmem:[#allocation2 + $0x58] sm:$0xff]
    %v497 = vld [vmem:[#allocation2 + $0x60] sm:$0xff]
    %v498 = vld [vmem:[#allocation2 + $0x68] sm:$0xff]
    %v499 = vld [vmem:[#allocation2 + $0x70] sm:$0xff]
    %v500 = vld [vmem:[#allocation2 + $0x78] sm:$0xff]
    %v501 = vld [vmem:[#allocation2 + $0x80] sm:$0xff]
    %v502 = vld [vmem:[#allocation2 + $0x88] sm:$0xff]
    %v503 = vld [vmem:[#allocation2 + $0x90] sm:$0xff]
    %v504 = vld [vmem:[#allocation2 + $0x98] sm:$0xff]
    %v505 = vld [vmem:[#allocation2 + $0xa0] sm:$0xff]
    %v506 = vld [vmem:[#allocation2 + $0xa8] sm:$0xff]
    %v507 = vld [vmem:[#allocation2 + $0xb0] sm:$0xff]
    %v508 = vld [vmem:[#allocation2 + $0xb8] sm:$0xff]
    %v509 = vld [vmem:[#allocation2 + $0xc0] sm:$0xff]
    %v510 = vld [vmem:[#allocation2 + $0xc8] sm:$0xff]
    %v511 = vld [vmem:[#allocation2 + $0xd0] sm:$0xff]
    %v512 = vld [vmem:[#allocation2 + $0xd8] sm:$0xff]
    %v513 = vld [vmem:[#allocation2 + $0xe0] sm:$0xff]
    %v514 = vld [vmem:[#allocation2 + $0xe8] sm:$0xff]
    %v515 = vld [vmem:[#allocation2 + $0xf0] sm:$0xff]
    %v516 = vld [vmem:[#allocation2 + $0xf8] sm:$0xff]
    %517 = vst [vmem:[%s2] sm:$0xff] %v485
    %518 = vst [vmem:[%s2 + $0x8] sm:$0xff] %v486
    %519 = vst [vmem:[%s2 + $0x10] sm:$0xff] %v487
    %520 = vst [vmem:[%s2 + $0x18] sm:$0xff] %v488
    %521 = vst [vmem:[%s2 + $0x20] sm:$0xff] %v489
    %522 = vst [vmem:[%s2 + $0x28] sm:$0xff] %v490
    %523 = vst [vmem:[%s2 + $0x30] sm:$0xff] %v491
    %524 = vst [vmem:[%s2 + $0x38] sm:$0xff] %v492
    %525 = vst [vmem:[%s2 + $0x40] sm:$0xff] %v493
    %526 = vst [vmem:[%s2 + $0x48] sm:$0xff] %v494
    %527 = vst [vmem:[%s2 + $0x50] sm:$0xff] %v495
    %528 = vst [vmem:[%s2 + $0x58] sm:$0xff] %v496
    %529 = vst [vmem:[%s2 + $0x60] sm:$0xff] %v497
    %530 = vst [vmem:[%s2 + $0x68] sm:$0xff] %v498
    %531 = vst [vmem:[%s2 + $0x70] sm:$0xff] %v499
    %532 = vst [vmem:[%s2 + $0x78] sm:$0xff] %v500
    %533 = vst [vmem:[%s2 + $0x80] sm:$0xff] %v501
    %534 = vst [vmem:[%s2 + $0x88] sm:$0xff] %v502
    %535 = vst [vmem:[%s2 + $0x90] sm:$0xff] %v503
    %536 = vst [vmem:[%s2 + $0x98] sm:$0xff] %v504
    %537 = vst [vmem:[%s2 + $0xa0] sm:$0xff] %v505
    %538 = vst [vmem:[%s2 + $0xa8] sm:$0xff] %v506
    %539 = vst [vmem:[%s2 + $0xb0] sm:$0xff] %v507
    %540 = vst [vmem:[%s2 + $0xb8] sm:$0xff] %v508
    %541 = vst [vmem:[%s2 + $0xc0] sm:$0xff] %v509
    %542 = vst [vmem:[%s2 + $0xc8] sm:$0xff] %v510
    %543 = vst [vmem:[%s2 + $0xd0] sm:$0xff] %v511
    %544 = vst [vmem:[%s2 + $0xd8] sm:$0xff] %v512
    %545 = vst [vmem:[%s2 + $0xe0] sm:$0xff] %v513
    %546 = vst [vmem:[%s2 + $0xe8] sm:$0xff] %v514
    %547 = vst [vmem:[%s2 + $0xf0] sm:$0xff] %v515
    %548 = vst [vmem:[%s2 + $0xf8] sm:$0xff] %v516
  $region17: #{_lambda_.4} parent=0 // pred_fallthru
    _
  // Predicated region
  $region18: #{_lambda_.4} parent=0 // pred_check
    _
  $region19: #{_lambda_.4} parent=0 // pred_check_branch
    %550 = sbr.rel (0) target = $region21
  $region20: #{_lambda_.4} parent=0 // pred_region
    _
  $region21: #{_lambda_.4} parent=0 // pred_fallthru
    _
  // Predicated region
  $region22: #{_lambda_.4} parent=0 // pred_check
    _
  $region23: #{_lambda_.4} parent=0 // pred_check_branch
    %552 = sbr.rel (0) target = $region25
  $region24: #{_lambda_.4} parent=0 // pred_region
    _
  $region25: #{_lambda_.4} parent=0 // pred_fallthru
    _

// kernel: _lambda_.5
$region0: #{_lambda_.5}
  #allocation0 [shape = 'u32[]', space=smem, size = 0x4, offset = 0x4, fixed_abs, tag = 'smem constant byte address 0x4 - core index']
  #allocation1 [shape = 'u32[144,128]{1,0:T(1,128)}', space=vmem, size = 0x12000, scoped, tag = 'internal scratch']
  %s0 = inlined_call_operand.vmem [shape: f32[2,8,16,64], index: 0, kind: input, shape index: {}]
  %s1 = inlined_call_operand.vmem [shape: f32[3,3,64], index: 1, kind: input, shape index: {}]
  %s2 = inlined_call_operand.vmem [shape: f32[1,1,64], index: 2, kind: input, shape index: {}]
  %s3 = inlined_call_operand.vmem [shape: f32[2,8,16,64], index: 3, kind: output, shape index: {}]
  %s4 = sld [smem:[#allocation0]]
  $region45: #{_lambda_.5} parent=0
    _
  %s6 = ssub.s32 1, %s4
  %s7 = scalar_select 0, %s6, %s4
  loop: start=0, step=1, limit=4
  $region2: #{_lambda_.5} parent=0 // loop_pre_header
    _
  $region3: #{_lambda_.5} parent=0 // loop_header
    %s9 = sphi 0, %s13
    %p10 = scmp.ge.s32.totalorder %s9, 4
    %s19 = sphi 0, %s21
    %s22 = sphi 0, %s19
    %s23 = sphi 0, %s22
    %s39 = sphi 0, %s23
    %s43 = sphi 0, %s43
    %s45 = sphi 0, %s43
    %s46 = sphi 0, %s45
    %s60 = sphi 0, %s46
    %s64 = sphi 0, %s64
    %s66 = sphi 0, %s64
    %s67 = sphi 0, %s66
    %s81 = sphi 0, %s67
    %s87 = sphi 0, %s89
    %s90 = sphi 0, %s87
    %s91 = sphi 0, %s90
    %s107 = sphi 0, %s91
  $region4: #{_lambda_.5} parent=0 // loop_header_branch
    %12 = sbr.rel (%p10) target = $region8
  $region5: #{_lambda_.5} parent=0 // loop_body
    %s14 = ssub.s32 %s9, 1
    %s15 = ssub.s32 %s9, 2
    %s16 = sadd.s32 %s9, 1
    %s17 = ssub.s32 %s9, %s16
    %p18 = scmp.eq.s32.totalorder %s17, 0
    %s20 = sadd.s32 %s19, 1
    %s21 = scalar_select %p18, %s19, %s20
    %p24 = pneg %p18
    %p25 = scmp.eq.s32.totalorder %s9, 1
    %p26 = por %p24, %p25
    %p27 = scmp.ne.s32.totalorder %s19, %s22
    %p28 = scmp.eq.s32.totalorder %s9, 0
    %p29 = por %p27, %p28
    %p30 = scmp.ne.s32.totalorder %s19, %s22
    %p31 = scmp.eq.s32.totalorder %s14, 1
    %p32 = por %p30, %p31
    %p33 = scmp.ne.s32.totalorder %s22, %s23
    %p34 = scmp.eq.s32.totalorder %s14, 0
    %p35 = por %p33, %p34
    %p36 = scmp.ne.s32.totalorder %s22, %s23
    %p37 = scmp.eq.s32.totalorder %s15, 1
    %p38 = por %p36, %p37
    %p40 = scmp.ne.s32.totalorder %s23, %s39
    %p41 = scmp.eq.s32.totalorder %s15, 0
    %p42 = por %p40, %p41
    %s44 = sadd.s32 %s43, 1
    %p47 = scmp.eq.s32.totalorder %s9, 1
    %p48 = scmp.ne.s32.totalorder %s43, %s45
    %p49 = scmp.eq.s32.totalorder %s9, 0
    %p50 = por %p48, %p49
    %p51 = scmp.ne.s32.totalorder %s43, %s45
    %p52 = scmp.eq.s32.totalorder %s14, 1
    %p53 = por %p51, %p52
    %p54 = scmp.ne.s32.totalorder %s45, %s46
    %p55 = scmp.eq.s32.totalorder %s14, 0
    %p56 = por %p54, %p55
    %p57 = scmp.ne.s32.totalorder %s45, %s46
    %p58 = scmp.eq.s32.totalorder %s15, 1
    %p59 = por %p57, %p58
    %p61 = scmp.ne.s32.totalorder %s46, %s60
    %p62 = scmp.eq.s32.totalorder %s15, 0
    %p63 = por %p61, %p62
    %s65 = sadd.s32 %s64, 1
    %p68 = scmp.eq.s32.totalorder %s9, 1
    %p69 = scmp.ne.s32.totalorder %s64, %s66
    %p70 = scmp.eq.s32.totalorder %s9, 0
    %p71 = por %p69, %p70
    %p72 = scmp.ne.s32.totalorder %s64, %s66
    %p73 = scmp.eq.s32.totalorder %s14, 1
    %p74 = por %p72, %p73
    %p75 = scmp.ne.s32.totalorder %s66, %s67
    %p76 = scmp.eq.s32.totalorder %s14, 0
    %p77 = por %p75, %p76
    %p78 = scmp.ne.s32.totalorder %s66, %s67
    %p79 = scmp.eq.s32.totalorder %s15, 1
    %p80 = por %p78, %p79
    %p82 = scmp.ne.s32.totalorder %s67, %s81
    %p83 = scmp.eq.s32.totalorder %s15, 0
    %p84 = por %p82, %p83
    %s85 = ssub.s32 %s9, %s16
    %p86 = scmp.eq.s32.totalorder %s85, 0
    %s88 = sadd.s32 %s87, 1
    %s89 = scalar_select %p86, %s87, %s88
    %p92 = pneg %p86
    %p93 = scmp.eq.s32.totalorder %s9, 1
    %p94 = por %p92, %p93
    %p95 = scmp.ne.s32.totalorder %s87, %s90
    %p96 = scmp.eq.s32.totalorder %s9, 0
    %p97 = por %p95, %p96
    %p98 = scmp.ne.s32.totalorder %s87, %s90
    %p99 = scmp.eq.s32.totalorder %s14, 1
    %p100 = por %p98, %p99
    %p101 = scmp.ne.s32.totalorder %s90, %s91
    %p102 = scmp.eq.s32.totalorder %s14, 0
    %p103 = por %p101, %p102
    %p104 = scmp.ne.s32.totalorder %s90, %s91
    %p105 = scmp.eq.s32.totalorder %s15, 1
    %p106 = por %p104, %p105
    %p108 = scmp.ne.s32.totalorder %s91, %s107
    %p109 = scmp.eq.s32.totalorder %s15, 0
    %p110 = por %p108, %p109
    %p111 = scmp.le.s32.totalorder 1, %s9
    %p112 = scmp.lt.s32.totalorder %s9, 3
    %p113 = pnand %p111, %p112
    %p114 = pneg %p113
    // Predicated region
    $region9: #{_lambda_.5} parent=5 // pred_check
      _
    $region10: #{_lambda_.5} parent=5 // pred_check_branch
      %116 = sbr.rel (%p113) target = $region12
    $region11: #{_lambda_.5} parent=5 // pred_region
      %s117 = ssub.s32 %s9, 1
      // Predicated region
      $region13: #{_lambda_.5} parent=11 // pred_check
        %p118 = pneg %p56
      $region14: #{_lambda_.5} parent=11 // pred_check_branch
        %120 = sbr.rel (%p118) target = $region16
      $region15: #{_lambda_.5} parent=11 // pred_region
        _
      $region16: #{_lambda_.5} parent=11 // pred_fallthru
        _
      // Predicated region
      $region17: #{_lambda_.5} parent=11 // pred_check
        %p121 = pneg %p77
      $region18: #{_lambda_.5} parent=11 // pred_check_branch
        %123 = sbr.rel (%p121) target = $region20
      $region19: #{_lambda_.5} parent=11 // pred_region
        _
      $region20: #{_lambda_.5} parent=11 // pred_fallthru
        _
    $region12: #{_lambda_.5} parent=5 // pred_fallthru
      _
    %p124 = scmp.lt.s32.totalorder %s9, 2
    // Predicated region
    $region21: #{_lambda_.5} parent=5 // pred_check
      %p125 = pneg %p124
    $region22: #{_lambda_.5} parent=5 // pred_check_branch
      %127 = sbr.rel (%p125) target = $region24
    $region23: #{_lambda_.5} parent=5 // pred_region
      // Predicated region
      $region25: #{_lambda_.5} parent=23 // pred_check
        %p128 = pneg %p29
      $region26: #{_lambda_.5} parent=23 // pred_check_branch
        %130 = sbr.rel (%p128) target = $region28
      $region27: #{_lambda_.5} parent=23 // pred_region
        %p131 = scmp.lt.s32.totalorder %s9, 1
        %s132 = scalar_select %p131, %s9, 1
        %s133 = smul.addr %s132, 16
        %s134 = smul.addr %s133, 8
        %s135 = scalar_lea.vmem %s0, %s134
      $region28: #{_lambda_.5} parent=23 // pred_fallthru
        _
    $region24: #{_lambda_.5} parent=5 // pred_fallthru
      _
    %p136 = scmp.le.s32.totalorder 1, %s9
    %p137 = scmp.lt.s32.totalorder %s9, 3
    %p138 = pnand %p136, %p137
    %p139 = pneg %p138
    // Predicated region
    $region29: #{_lambda_.5} parent=5 // pred_check
      _
    $region30: #{_lambda_.5} parent=5 // pred_check_branch
      %141 = sbr.rel (%p138) target = $region32
    $region31: #{_lambda_.5} parent=5 // pred_region
      %s142 = ssub.s32 %s9, 1
      %p143 = scmp.lt.s32.totalorder %s14, 1
      %s144 = scalar_select %p143, %s14, 1
      %s145 = smul.addr %s144, 16
      %s146 = smul.addr %s145, 8
      %s147 = scalar_lea.vmem %s0, %s146
      %p148 = pneg %p35
      %p149 = pneg %p32
      %p150 = pneg %p56
      %p151 = pneg %p53
      %p152 = pneg %p77
      %p153 = pneg %p74
      %p154 = pneg %p103
      %p155 = pneg %p100
      %p156 = scmp.lt.s32.totalorder %s14, 1
      %s157 = scalar_select %p156, %s14, 1
      %s158 = smul.addr %s157, 16
      %s159 = smul.addr %s158, 8
      %s160 = scalar_lea.vmem %s3, %s159
      %p161 = scmp.lt.s32.totalorder %s14, 1
      %s162 = scalar_select %p161, %s14, 1
      %s163 = smul.addr %s162, 16
      %s164 = smul.addr %s163, 8
      %s165 = scalar_lea.vmem %s0, %s164
      %p166 = scmp.lt.s32.totalorder %s14, 1
      %s167 = scalar_select %p166, %s14, 1
      %s168 = smul.addr %s167, 16
      %s169 = smul.addr %s168, 8
      %s170 = scalar_lea.vmem %s3, %s169
      %v171 = vld [vmem:[%s165] sm:$0xff]
      %v172 = vld [vmem:[%s165 + $0x8] sm:$0xff]
      %v173 = vld [vmem:[%s165 + $0x10] sm:$0xff]
      %v174 = vld [vmem:[%s165 + $0x18] sm:$0xff]
      %v175 = vld [vmem:[%s165 + $0x20] sm:$0xff]
      %v176 = vld [vmem:[%s165 + $0x28] sm:$0xff]
      %v177 = vld [vmem:[%s165 + $0x30] sm:$0xff]
      %v178 = vld [vmem:[%s165 + $0x38] sm:$0xff]
      %v179 = vld [vmem:[%s165 + $0x40] sm:$0xff]
      %v180 = vld [vmem:[%s165 + $0x48] sm:$0xff]
      %v181 = vld [vmem:[%s165 + $0x50] sm:$0xff]
      %v182 = vld [vmem:[%s165 + $0x58] sm:$0xff]
      %v183 = vld [vmem:[%s165 + $0x60] sm:$0xff]
      %v184 = vld [vmem:[%s165 + $0x68] sm:$0xff]
      %v185 = vld [vmem:[%s165 + $0x70] sm:$0xff]
      %v186 = vld [vmem:[%s165 + $0x78] sm:$0xff]
      %vm203 = vcmask 1040384
      %v204 = vrot.slane %v171, 7
      %v205 = vrot.slane %v172, 7
      %v206 = vsel %vm203, %v204, %v205
      %v207 = vrot.slane %v173, 7
      %v208 = vrot.slane %v174, 7
      %v209 = vsel %vm203, %v207, %v208
      %v210 = vrot.slane %v175, 7
      %v211 = vrot.slane %v176, 7
      %v212 = vsel %vm203, %v210, %v211
      %v213 = vrot.slane %v177, 7
      %v214 = vrot.slane %v178, 7
      %v215 = vsel %vm203, %v213, %v214
      %v216 = vrot.slane %v179, 7
      %v217 = vrot.slane %v180, 7
      %v218 = vsel %vm203, %v216, %v217
      %v219 = vrot.slane %v181, 7
      %v220 = vrot.slane %v182, 7
      %v221 = vsel %vm203, %v219, %v220
      %v222 = vrot.slane %v183, 7
      %v223 = vrot.slane %v184, 7
      %v224 = vsel %vm203, %v222, %v223
      %v225 = vrot.slane %v185, 7
      %v226 = vrot.slane %v186, 7
      %v227 = vsel %vm203, %v225, %v226
      %v244 = vsel %vm203, 0.0, %v204
      %v245 = vsel %vm203, 0.0, %v207
      %v246 = vsel %vm203, 0.0, %v210
      %v247 = vsel %vm203, 0.0, %v213
      %v248 = vsel %vm203, 0.0, %v216
      %v249 = vsel %vm203, 0.0, %v219
      %v250 = vsel %vm203, 0.0, %v222
      %v251 = vsel %vm203, 0.0, %v225
      %vm252 = vcmask 1046528
      %v253 = vrot.slane %v171, 1
      %v254 = vrot.slane %v172, 1
      %v255 = vsel %vm252, %v253, %v254
      %v256 = vrot.slane %v173, 1
      %v257 = vrot.slane %v174, 1
      %v258 = vsel %vm252, %v256, %v257
      %v259 = vrot.slane %v175, 1
      %v260 = vrot.slane %v176, 1
      %v261 = vsel %vm252, %v259, %v260
      %v262 = vrot.slane %v177, 1
      %v263 = vrot.slane %v178, 1
      %v264 = vsel %vm252, %v262, %v263
      %v265 = vrot.slane %v179, 1
      %v266 = vrot.slane %v180, 1
      %v267 = vsel %vm252, %v265, %v266
      %v268 = vrot.slane %v181, 1
      %v269 = vrot.slane %v182, 1
      %v270 = vsel %vm252, %v268, %v269
      %v271 = vrot.slane %v183, 1
      %v272 = vrot.slane %v184, 1
      %v273 = vsel %vm252, %v271, %v272
      %v274 = vrot.slane %v185, 1
      %v275 = vrot.slane %v186, 1
      %v276 = vsel %vm252, %v274, %v275
      %v293 = vsel %vm252, %v254, 0.0
      %v294 = vsel %vm252, %v257, 0.0
      %v295 = vsel %vm252, %v260, 0.0
      %v296 = vsel %vm252, %v263, 0.0
      %v297 = vsel %vm252, %v266, 0.0
      %v298 = vsel %vm252, %v269, 0.0
      %v299 = vsel %vm252, %v272, 0.0
      %v300 = vsel %vm252, %v275, 0.0
      %v301 = vld [vmem:[%s1] sm:$0x1]
      %v302 = vlaneseq
      %v303 = vshrl.u32 %v302, 7
      %v304 = vsub.s32 0, %v303
      %v305 = vrot.slane %v301, %v304
      %v306 = vmul.f32 %v244, %v305
      %v307 = vmul.f32 %v206, %v305
      %v308 = vmul.f32 %v245, %v305
      %v309 = vmul.f32 %v209, %v305
      %v310 = vmul.f32 %v246, %v305
      %v311 = vmul.f32 %v212, %v305
      %v312 = vmul.f32 %v247, %v305
      %v313 = vmul.f32 %v215, %v305
      %v314 = vmul.f32 %v248, %v305
      %v315 = vmul.f32 %v218, %v305
      %v316 = vmul.f32 %v249, %v305
      %v317 = vmul.f32 %v221, %v305
      %v318 = vmul.f32 %v250, %v305
      %v319 = vmul.f32 %v224, %v305
      %v320 = vld [vmem:[%s1 + $0x1] sm:$0x1]
      %v321 = vlaneseq
      %v322 = vshrl.u32 %v321, 7
      %v323 = vsub.s32 0, %v322
      %v324 = vrot.slane %v320, %v323
      %v325 = vmul.f32 %v171, %v324
      %v326 = vmul.f32 %v172, %v324
      %v327 = vmul.f32 %v173, %v324
      %v328 = vmul.f32 %v174, %v324
      %v329 = vmul.f32 %v175, %v324
      %v330 = vmul.f32 %v176, %v324
      %v331 = vmul.f32 %v177, %v324
      %v332 = vmul.f32 %v178, %v324
      %v333 = vmul.f32 %v179, %v324
      %v334 = vmul.f32 %v180, %v324
      %v335 = vmul.f32 %v181, %v324
      %v336 = vmul.f32 %v182, %v324
      %v337 = vmul.f32 %v183, %v324
      %v338 = vmul.f32 %v184, %v324
      %v339 = vadd.f32 %v306, %v325
      %v340 = vadd.f32 %v307, %v326
      %v341 = vadd.f32 %v308, %v327
      %v342 = vadd.f32 %v309, %v328
      %v343 = vadd.f32 %v310, %v329
      %v344 = vadd.f32 %v311, %v330
      %v345 = vadd.f32 %v312, %v331
      %v346 = vadd.f32 %v313, %v332
      %v347 = vadd.f32 %v314, %v333
      %v348 = vadd.f32 %v315, %v334
      %v349 = vadd.f32 %v316, %v335
      %v350 = vadd.f32 %v317, %v336
      %v351 = vadd.f32 %v318, %v337
      %v352 = vadd.f32 %v319, %v338
      %v353 = vld [vmem:[%s1 + $0x2] sm:$0x1]
      %v354 = vlaneseq
      %v355 = vshrl.u32 %v354, 7
      %v356 = vsub.s32 0, %v355
      %v357 = vrot.slane %v353, %v356
      %v358 = vmul.f32 %v255, %v357
      %v359 = vmul.f32 %v293, %v357
      %v360 = vmul.f32 %v258, %v357
      %v361 = vmul.f32 %v294, %v357
      %v362 = vmul.f32 %v261, %v357
      %v363 = vmul.f32 %v295, %v357
      %v364 = vmul.f32 %v264, %v357
      %v365 = vmul.f32 %v296, %v357
      %v366 = vmul.f32 %v267, %v357
      %v367 = vmul.f32 %v297, %v357
      %v368 = vmul.f32 %v270, %v357
      %v369 = vmul.f32 %v298, %v357
      %v370 = vmul.f32 %v273, %v357
      %v371 = vmul.f32 %v299, %v357
      %v372 = vadd.f32 %v339, %v358
      %v373 = vadd.f32 %v340, %v359
      %v374 = vadd.f32 %v341, %v360
      %v375 = vadd.f32 %v342, %v361
      %v376 = vadd.f32 %v343, %v362
      %v377 = vadd.f32 %v344, %v363
      %v378 = vadd.f32 %v345, %v364
      %v379 = vadd.f32 %v346, %v365
      %v380 = vadd.f32 %v347, %v366
      %v381 = vadd.f32 %v348, %v367
      %v382 = vadd.f32 %v349, %v368
      %v383 = vadd.f32 %v350, %v369
      %v384 = vadd.f32 %v351, %v370
      %v385 = vadd.f32 %v352, %v371
      %s386 = scalar_lea.vmem %s1, 4
      %v387 = vld [vmem:[%s386] sm:$0x1]
      %v388 = vlaneseq
      %v389 = vshrl.u32 %v388, 7
      %v390 = vsub.s32 0, %v389
      %v391 = vrot.slane %v387, %v390
      %v392 = vmul.f32 %v244, %v391
      %v393 = vmul.f32 %v206, %v391
      %v394 = vmul.f32 %v245, %v391
      %v395 = vmul.f32 %v209, %v391
      %v396 = vmul.f32 %v246, %v391
      %v397 = vmul.f32 %v212, %v391
      %v398 = vmul.f32 %v247, %v391
      %v399 = vmul.f32 %v215, %v391
      %v400 = vmul.f32 %v248, %v391
      %v401 = vmul.f32 %v218, %v391
      %v402 = vmul.f32 %v249, %v391
      %v403 = vmul.f32 %v221, %v391
      %v404 = vmul.f32 %v250, %v391
      %v405 = vmul.f32 %v224, %v391
      %v406 = vmul.f32 %v251, %v391
      %v407 = vmul.f32 %v227, %v391
      %v408 = vld [vmem:[%s386 + $0x1] sm:$0x1]
      %v409 = vlaneseq
      %v410 = vshrl.u32 %v409, 7
      %v411 = vsub.s32 0, %v410
      %v412 = vrot.slane %v408, %v411
      %v413 = vmul.f32 %v171, %v412
      %v414 = vmul.f32 %v172, %v412
      %v415 = vmul.f32 %v173, %v412
      %v416 = vmul.f32 %v174, %v412
      %v417 = vmul.f32 %v175, %v412
      %v418 = vmul.f32 %v176, %v412
      %v419 = vmul.f32 %v177, %v412
      %v420 = vmul.f32 %v178, %v412
      %v421 = vmul.f32 %v179, %v412
      %v422 = vmul.f32 %v180, %v412
      %v423 = vmul.f32 %v181, %v412
      %v424 = vmul.f32 %v182, %v412
      %v425 = vmul.f32 %v183, %v412
      %v426 = vmul.f32 %v184, %v412
      %v427 = vmul.f32 %v185, %v412
      %v428 = vmul.f32 %v186, %v412
      %v429 = vadd.f32 %v392, %v413
      %v430 = vadd.f32 %v393, %v414
      %v431 = vadd.f32 %v394, %v415
      %v432 = vadd.f32 %v395, %v416
      %v433 = vadd.f32 %v396, %v417
      %v434 = vadd.f32 %v397, %v418
      %v435 = vadd.f32 %v398, %v419
      %v436 = vadd.f32 %v399, %v420
      %v437 = vadd.f32 %v400, %v421
      %v438 = vadd.f32 %v401, %v422
      %v439 = vadd.f32 %v402, %v423
      %v440 = vadd.f32 %v403, %v424
      %v441 = vadd.f32 %v404, %v425
      %v442 = vadd.f32 %v405, %v426
      %v443 = vadd.f32 %v406, %v427
      %v444 = vadd.f32 %v407, %v428
      %v445 = vld [vmem:[%s386 + $0x2] sm:$0x1]
      %v446 = vlaneseq
      %v447 = vshrl.u32 %v446, 7
      %v448 = vsub.s32 0, %v447
      %v449 = vrot.slane %v445, %v448
      %v450 = vmul.f32 %v255, %v449
      %v451 = vmul.f32 %v293, %v449
      %v452 = vmul.f32 %v258, %v449
      %v453 = vmul.f32 %v294, %v449
      %v454 = vmul.f32 %v261, %v449
      %v455 = vmul.f32 %v295, %v449
      %v456 = vmul.f32 %v264, %v449
      %v457 = vmul.f32 %v296, %v449
      %v458 = vmul.f32 %v267, %v449
      %v459 = vmul.f32 %v297, %v449
      %v460 = vmul.f32 %v270, %v449
      %v461 = vmul.f32 %v298, %v449
      %v462 = vmul.f32 %v273, %v449
      %v463 = vmul.f32 %v299, %v449
      %v464 = vmul.f32 %v276, %v449
      %v465 = vmul.f32 %v300, %v449
      %v466 = vadd.f32 %v429, %v450
      %v467 = vadd.f32 %v430, %v451
      %v468 = vadd.f32 %v431, %v452
      %v469 = vadd.f32 %v432, %v453
      %v470 = vadd.f32 %v433, %v454
      %v471 = vadd.f32 %v434, %v455
      %v472 = vadd.f32 %v435, %v456
      %v473 = vadd.f32 %v436, %v457
      %v474 = vadd.f32 %v437, %v458
      %v475 = vadd.f32 %v438, %v459
      %v476 = vadd.f32 %v439, %v460
      %v477 = vadd.f32 %v440, %v461
      %v478 = vadd.f32 %v441, %v462
      %v479 = vadd.f32 %v442, %v463
      %v480 = vadd.f32 %v443, %v464
      %v481 = vadd.f32 %v444, %v465
      %s482 = scalar_lea.vmem %s1, 8
      %v483 = vld [vmem:[%s482] sm:$0x1]
      %v484 = vlaneseq
      %v485 = vshrl.u32 %v484, 7
      %v486 = vsub.s32 0, %v485
      %v487 = vrot.slane %v483, %v486
      %v488 = vmul.f32 %v245, %v487
      %v489 = vmul.f32 %v209, %v487
      %v490 = vmul.f32 %v246, %v487
      %v491 = vmul.f32 %v212, %v487
      %v492 = vmul.f32 %v247, %v487
      %v493 = vmul.f32 %v215, %v487
      %v494 = vmul.f32 %v248, %v487
      %v495 = vmul.f32 %v218, %v487
      %v496 = vmul.f32 %v249, %v487
      %v497 = vmul.f32 %v221, %v487
      %v498 = vmul.f32 %v250, %v487
      %v499 = vmul.f32 %v224, %v487
      %v500 = vmul.f32 %v251, %v487
      %v501 = vmul.f32 %v227, %v487
      %v502 = vld [vmem:[%s482 + $0x1] sm:$0x1]
      %v503 = vlaneseq
      %v504 = vshrl.u32 %v503, 7
      %v505 = vsub.s32 0, %v504
      %v506 = vrot.slane %v502, %v505
      %v507 = vmul.f32 %v173, %v506
      %v508 = vmul.f32 %v174, %v506
      %v509 = vmul.f32 %v175, %v506
      %v510 = vmul.f32 %v176, %v506
      %v511 = vmul.f32 %v177, %v506
      %v512 = vmul.f32 %v178, %v506
      %v513 = vmul.f32 %v179, %v506
      %v514 = vmul.f32 %v180, %v506
      %v515 = vmul.f32 %v181, %v506
      %v516 = vmul.f32 %v182, %v506
      %v517 = vmul.f32 %v183, %v506
      %v518 = vmul.f32 %v184, %v506
      %v519 = vmul.f32 %v185, %v506
      %v520 = vmul.f32 %v186, %v506
      %v521 = vadd.f32 %v488, %v507
      %v522 = vadd.f32 %v489, %v508
      %v523 = vadd.f32 %v490, %v509
      %v524 = vadd.f32 %v491, %v510
      %v525 = vadd.f32 %v492, %v511
      %v526 = vadd.f32 %v493, %v512
      %v527 = vadd.f32 %v494, %v513
      %v528 = vadd.f32 %v495, %v514
      %v529 = vadd.f32 %v496, %v515
      %v530 = vadd.f32 %v497, %v516
      %v531 = vadd.f32 %v498, %v517
      %v532 = vadd.f32 %v499, %v518
      %v533 = vadd.f32 %v500, %v519
      %v534 = vadd.f32 %v501, %v520
      %v535 = vld [vmem:[%s482 + $0x2] sm:$0x1]
      %v536 = vlaneseq
      %v537 = vshrl.u32 %v536, 7
      %v538 = vsub.s32 0, %v537
      %v539 = vrot.slane %v535, %v538
      %v540 = vmul.f32 %v258, %v539
      %v541 = vmul.f32 %v294, %v539
      %v542 = vmul.f32 %v261, %v539
      %v543 = vmul.f32 %v295, %v539
      %v544 = vmul.f32 %v264, %v539
      %v545 = vmul.f32 %v296, %v539
      %v546 = vmul.f32 %v267, %v539
      %v547 = vmul.f32 %v297, %v539
      %v548 = vmul.f32 %v270, %v539
      %v549 = vmul.f32 %v298, %v539
      %v550 = vmul.f32 %v273, %v539
      %v551 = vmul.f32 %v299, %v539
      %v552 = vmul.f32 %v276, %v539
      %v553 = vmul.f32 %v300, %v539
      %v554 = vadd.f32 %v521, %v540
      %v555 = vadd.f32 %v522, %v541
      %v556 = vadd.f32 %v523, %v542
      %v557 = vadd.f32 %v524, %v543
      %v558 = vadd.f32 %v525, %v544
      %v559 = vadd.f32 %v526, %v545
      %v560 = vadd.f32 %v527, %v546
      %v561 = vadd.f32 %v528, %v547
      %v562 = vadd.f32 %v529, %v548
      %v563 = vadd.f32 %v530, %v549
      %v564 = vadd.f32 %v531, %v550
      %v565 = vadd.f32 %v532, %v551
      %v566 = vadd.f32 %v533, %v552
      %v567 = vadd.f32 %v534, %v553
      %v568 = vadd.f32 %v466, 0.0
      %v569 = vadd.f32 %v467, 0.0
      %v570 = vadd.f32 %v372, %v468
      %v571 = vadd.f32 %v373, %v469
      %v572 = vadd.f32 %v374, %v470
      %v573 = vadd.f32 %v375, %v471
      %v574 = vadd.f32 %v376, %v472
      %v575 = vadd.f32 %v377, %v473
      %v576 = vadd.f32 %v378, %v474
      %v577 = vadd.f32 %v379, %v475
      %v578 = vadd.f32 %v380, %v476
      %v579 = vadd.f32 %v381, %v477
      %v580 = vadd.f32 %v382, %v478
      %v581 = vadd.f32 %v383, %v479
      %v582 = vadd.f32 %v384, %v480
      %v583 = vadd.f32 %v385, %v481
      %v584 = vadd.f32 %v568, %v554
      %v585 = vadd.f32 %v569, %v555
      %v586 = vadd.f32 %v570, %v556
      %v587 = vadd.f32 %v571, %v557
      %v588 = vadd.f32 %v572, %v558
      %v589 = vadd.f32 %v573, %v559
      %v590 = vadd.f32 %v574, %v560
      %v591 = vadd.f32 %v575, %v561
      %v592 = vadd.f32 %v576, %v562
      %v593 = vadd.f32 %v577, %v563
      %v594 = vadd.f32 %v578, %v564
      %v595 = vadd.f32 %v579, %v565
      %v596 = vadd.f32 %v580, %v566
      %v597 = vadd.f32 %v581, %v567
      %v598 = vadd.f32 %v582, 0.0
      %v599 = vadd.f32 %v583, 0.0
      %v600 = vld [vmem:[%s2] sm:$0x1]
      %v602 = vlaneseq
      %v603 = vshrl.u32 %v602, 7
      %v604 = vsub.s32 0, %v603
      %v605 = vrot.slane %v600, %v604
      %v607 = vadd.f32 %v584, %v605
      %v608 = vadd.f32 %v585, %v605
      %v609 = vadd.f32 %v586, %v605
      %v610 = vadd.f32 %v587, %v605
      %v611 = vadd.f32 %v588, %v605
      %v612 = vadd.f32 %v589, %v605
      %v613 = vadd.f32 %v590, %v605
      %v614 = vadd.f32 %v591, %v605
      %v615 = vadd.f32 %v592, %v605
      %v616 = vadd.f32 %v593, %v605
      %v617 = vadd.f32 %v594, %v605
      %v618 = vadd.f32 %v595, %v605
      %v619 = vadd.f32 %v596, %v605
      %v620 = vadd.f32 %v597, %v605
      %v621 = vadd.f32 %v598, %v605
      %v622 = vadd.f32 %v599, %v605
      %v623 = vxor.u32 %v607, 2147483648
      %v624 = vxor.u32 %v608, 2147483648
      %v625 = vxor.u32 %v609, 2147483648
      %v626 = vxor.u32 %v610, 2147483648
      %v627 = vxor.u32 %v611, 2147483648
      %v628 = vxor.u32 %v612, 2147483648
      %v629 = vxor.u32 %v613, 2147483648
      %v630 = vxor.u32 %v614, 2147483648
      %v631 = vxor.u32 %v615, 2147483648
      %v632 = vxor.u32 %v616, 2147483648
      %v633 = vxor.u32 %v617, 2147483648
      %v634 = vxor.u32 %v618, 2147483648
      %v635 = vxor.u32 %v619, 2147483648
      %v636 = vxor.u32 %v620, 2147483648
      %v637 = vxor.u32 %v621, 2147483648
      %v638 = vxor.u32 %v622, 2147483648
      %v639 = vmul.f32 %v623, 1.442695
      %v640 = vpow.pop %v639
      %v641 = vmul.f32 %v624, 1.442695
      %v642 = vpow.pop %v641
      %v643 = vmul.f32 %v625, 1.442695
      %v644 = vpow.pop %v643
      %v645 = vmul.f32 %v626, 1.442695
      %v646 = vpow.pop %v645
      %v647 = vmul.f32 %v627, 1.442695
      %v648 = vpow.pop %v647
      %v649 = vmul.f32 %v628, 1.442695
      %v650 = vpow.pop %v649
      %v651 = vmul.f32 %v629, 1.442695
      %v652 = vpow.pop %v651
      %v653 = vmul.f32 %v630, 1.442695
      %v654 = vpow.pop %v653
      %v655 = vmul.f32 %v631, 1.442695
      %v656 = vpow.pop %v655
      %v657 = vmul.f32 %v632, 1.442695
      %v658 = vpow.pop %v657
      %v659 = vmul.f32 %v633, 1.442695
      %v660 = vpow.pop %v659
      %v661 = vmul.f32 %v634, 1.442695
      %v662 = vpow.pop %v661
      %v663 = vmul.f32 %v635, 1.442695
      %v664 = vpow.pop %v663
      %v665 = vmul.f32 %v636, 1.442695
      %v666 = vpow.pop %v665
      %v667 = vmul.f32 %v637, 1.442695
      %v668 = vpow.pop %v667
      %v669 = vmul.f32 %v638, 1.442695
      %v670 = vpow.pop %v669
      %v671 = vadd.f32 %v640, 1.0
      %v672 = vadd.f32 %v642, 1.0
      %v673 = vadd.f32 %v644, 1.0
      %v674 = vadd.f32 %v646, 1.0
      %v675 = vadd.f32 %v648, 1.0
      %v676 = vadd.f32 %v650, 1.0
      %v677 = vadd.f32 %v652, 1.0
      %v678 = vadd.f32 %v654, 1.0
      %v679 = vadd.f32 %v656, 1.0
      %v680 = vadd.f32 %v658, 1.0
      %v681 = vadd.f32 %v660, 1.0
      %v682 = vadd.f32 %v662, 1.0
      %v683 = vadd.f32 %v664, 1.0
      %v684 = vadd.f32 %v666, 1.0
      %v685 = vadd.f32 %v668, 1.0
      %v686 = vadd.f32 %v670, 1.0
      %v687 = vrcp.pop %v671
      %v688 = vmul.f32 1.0, %v687
      %v689 = vrcp.pop %v672
      %v690 = vmul.f32 1.0, %v689
      %v691 = vrcp.pop %v673
      %v692 = vmul.f32 1.0, %v691
      %v693 = vrcp.pop %v674
      %v694 = vmul.f32 1.0, %v693
      %v695 = vrcp.pop %v675
      %v696 = vmul.f32 1.0, %v695
      %v697 = vrcp.pop %v676
      %v698 = vmul.f32 1.0, %v697
      %v699 = vrcp.pop %v677
      %v700 = vmul.f32 1.0, %v699
      %v701 = vrcp.pop %v678
      %v702 = vmul.f32 1.0, %v701
      %v703 = vrcp.pop %v679
      %v704 = vmul.f32 1.0, %v703
      %v705 = vrcp.pop %v680
      %v706 = vmul.f32 1.0, %v705
      %v707 = vrcp.pop %v681
      %v708 = vmul.f32 1.0, %v707
      %v709 = vrcp.pop %v682
      %v710 = vmul.f32 1.0, %v709
      %v711 = vrcp.pop %v683
      %v712 = vmul.f32 1.0, %v711
      %v713 = vrcp.pop %v684
      %v714 = vmul.f32 1.0, %v713
      %v715 = vrcp.pop %v685
      %v716 = vmul.f32 1.0, %v715
      %v717 = vrcp.pop %v686
      %v718 = vmul.f32 1.0, %v717
      %v719 = vmul.f32 %v607, %v688
      %v720 = vmul.f32 %v608, %v690
      %v721 = vmul.f32 %v609, %v692
      %v722 = vmul.f32 %v610, %v694
      %v723 = vmul.f32 %v611, %v696
      %v724 = vmul.f32 %v612, %v698
      %v725 = vmul.f32 %v613, %v700
      %v726 = vmul.f32 %v614, %v702
      %v727 = vmul.f32 %v615, %v704
      %v728 = vmul.f32 %v616, %v706
      %v729 = vmul.f32 %v617, %v708
      %v730 = vmul.f32 %v618, %v710
      %v731 = vmul.f32 %v619, %v712
      %v732 = vmul.f32 %v620, %v714
      %v733 = vmul.f32 %v621, %v716
      %v734 = vmul.f32 %v622, %v718
      %vm735 = vcmask 523264
      %736 = vst.msk [vmem:[%s170] sm:$0xff] %vm735, %v719
      %737 = vst.msk [vmem:[%s170 + $0x8] sm:$0xff] %vm735, %v720
      %738 = vst.msk [vmem:[%s170 + $0x10] sm:$0xff] %vm735, %v721
      %739 = vst.msk [vmem:[%s170 + $0x18] sm:$0xff] %vm735, %v722
      %740 = vst.msk [vmem:[%s170 + $0x20] sm:$0xff] %vm735, %v723
      %741 = vst.msk [vmem:[%s170 + $0x28] sm:$0xff] %vm735, %v724
      %742 = vst.msk [vmem:[%s170 + $0x30] sm:$0xff] %vm735, %v725
      %743 = vst.msk [vmem:[%s170 + $0x38] sm:$0xff] %vm735, %v726
      %744 = vst.msk [vmem:[%s170 + $0x40] sm:$0xff] %vm735, %v727
      %745 = vst.msk [vmem:[%s170 + $0x48] sm:$0xff] %vm735, %v728
      %746 = vst.msk [vmem:[%s170 + $0x50] sm:$0xff] %vm735, %v729
      %747 = vst.msk [vmem:[%s170 + $0x58] sm:$0xff] %vm735, %v730
      %748 = vst.msk [vmem:[%s170 + $0x60] sm:$0xff] %vm735, %v731
      %749 = vst.msk [vmem:[%s170 + $0x68] sm:$0xff] %vm735, %v732
      %750 = vst.msk [vmem:[%s170 + $0x70] sm:$0xff] %vm735, %v733
      %751 = vst.msk [vmem:[%s170 + $0x78] sm:$0xff] %vm735, %v734
      %p752 = scmp.lt.s32.totalorder %s14, 1
      %s753 = scalar_select %p752, %s14, 1
      %s754 = smul.addr %s753, 16
      %s755 = smul.addr %s754, 8
      %s756 = scalar_lea.vmem %s3, %s755
      // Predicated region
      $region33: #{_lambda_.5} parent=31 // pred_check
        %p757 = pneg %p100
      $region34: #{_lambda_.5} parent=31 // pred_check_branch
        %759 = sbr.rel (%p757) target = $region36
      $region35: #{_lambda_.5} parent=31 // pred_region
        _
      $region36: #{_lambda_.5} parent=31 // pred_fallthru
        _
    $region32: #{_lambda_.5} parent=5 // pred_fallthru
      _
    %p760 = scmp.le.s32.totalorder 2, %s9
    // Predicated region
    $region37: #{_lambda_.5} parent=5 // pred_check
      %p761 = pneg %p760
    $region38: #{_lambda_.5} parent=5 // pred_check_branch
      %763 = sbr.rel (%p761) target = $region40
    $region39: #{_lambda_.5} parent=5 // pred_region
      %s764 = ssub.s32 %s9, 2
      // Predicated region
      $region41: #{_lambda_.5} parent=39 // pred_check
        %p765 = pneg %p106
      $region42: #{_lambda_.5} parent=39 // pred_check_branch
        %767 = sbr.rel (%p765) target = $region44
      $region43: #{_lambda_.5} parent=39 // pred_region
        %p768 = scmp.lt.s32.totalorder %s15, 1
        %s769 = scalar_select %p768, %s15, 1
        %s770 = smul.addr %s769, 16
        %s771 = smul.addr %s770, 8
        %s772 = scalar_lea.vmem %s3, %s771
      $region44: #{_lambda_.5} parent=39 // pred_fallthru
        _
    $region40: #{_lambda_.5} parent=5 // pred_fallthru
      _
  $region6: #{_lambda_.5} parent=0 // loop_footer
    %s13 = sadd.s32 1, %s9
  $region7: #{_lambda_.5} parent=0 // loop_footer_branch
    %8 = sbr.rel target = $region3
  $region8: #{_lambda_.5} parent=0 // loop_exit
    _

// kernel: _lambda_.7
$region0: #{_lambda_.7}
  #allocation0 [shape = 'u32[]', space=smem, size = 0x4, offset = 0x4, fixed_abs, tag = 'smem constant byte address 0x4 - core index']
  #allocation1 [shape = 'u32[144,128]{1,0:T(1,128)}', space=vmem, size = 0x12000, scoped, tag = 'internal scratch']
  %s0 = inlined_call_operand.vmem [shape: f32[128,64], index: 0, kind: input, shape index: {}]
  %s1 = inlined_call_operand.vmem [shape: f32[128,64], index: 1, kind: input, shape index: {}]
  %s2 = inlined_call_operand.vmem [shape: f32[1,64], index: 2, kind: input, shape index: {}]
  %s3 = inlined_call_operand.vmem [shape: f32[1,64], index: 3, kind: input, shape index: {}]
  %s4 = inlined_call_operand.vmem [shape: bf16[64,32], index: 4, kind: input, shape index: {}]
  %s5 = inlined_call_operand.hbm [shape: f32[128,32], index: 5, kind: output, shape index: {}]
  %s6 = sld [smem:[#allocation0]]
  $region30: #{_lambda_.7} parent=0
    _
  %s8 = ssub.s32 1, %s6
  %s9 = scalar_select 0, %s8, %s6
  $region1: #{_lambda_.7} parent=0
    #allocation2 [shape = 'u8[65536]{0}', space=vmem, size = 0x10000, scoped, tag = 'output window, operand 0, single buffered']
    #allocation3 [shape = 's32[1]{0}', space=sflag, size = 0x4, scoped, tag = 'scoped memory for _lambda_.7']
    %10 = vsyncpa [#allocation3], 0
    // Predicated region
    $region2: #{_lambda_.7} parent=1 // pred_check
      _
    $region3: #{_lambda_.7} parent=1 // pred_check_branch
      %12 = sbr.rel (0) target = $region5
    $region4: #{_lambda_.7} parent=1 // pred_region
      _
    $region5: #{_lambda_.7} parent=1 // pred_fallthru
      _
    // Predicated region
    $region6: #{_lambda_.7} parent=1 // pred_check
      _
    $region7: #{_lambda_.7} parent=1 // pred_check_branch
      %14 = sbr.rel (0) target = $region9
    $region8: #{_lambda_.7} parent=1 // pred_region
      _
    $region9: #{_lambda_.7} parent=1 // pred_fallthru
      _
    // Predicated region
    $region10: #{_lambda_.7} parent=1 // pred_check
      _
    $region11: #{_lambda_.7} parent=1 // pred_check_branch
      %16 = sbr.rel (0) target = $region13
    $region12: #{_lambda_.7} parent=1 // pred_region
      _
    $region13: #{_lambda_.7} parent=1 // pred_fallthru
      _
    // Predicated region
    $region14: #{_lambda_.7} parent=1 // pred_check
      _
    $region15: #{_lambda_.7} parent=1 // pred_check_branch
      %18 = sbr.rel (0) target = $region17
    $region16: #{_lambda_.7} parent=1 // pred_region
      _
    $region17: #{_lambda_.7} parent=1 // pred_fallthru
      _
    // Predicated region
    $region18: #{_lambda_.7} parent=1 // pred_check
      _
    $region19: #{_lambda_.7} parent=1 // pred_check_branch
      %20 = sbr.rel (0) target = $region21
    $region20: #{_lambda_.7} parent=1 // pred_region
      _
    $region21: #{_lambda_.7} parent=1 // pred_fallthru
      _
    %v22 = vld [vmem:[%s0] sm:$0xff]
    %v23 = vld [vmem:[%s0 + $0x8] sm:$0xff]
    %v24 = vld [vmem:[%s0 + $0x10] sm:$0xff]
    %v25 = vld [vmem:[%s0 + $0x18] sm:$0xff]
    %v26 = vld [vmem:[%s0 + $0x20] sm:$0xff]
    %v27 = vld [vmem:[%s0 + $0x28] sm:$0xff]
    %v28 = vld [vmem:[%s0 + $0x30] sm:$0xff]
    %v29 = vld [vmem:[%s0 + $0x38] sm:$0xff]
    %v30 = vld [vmem:[%s0 + $0x40] sm:$0xff]
    %v31 = vld [vmem:[%s0 + $0x48] sm:$0xff]
    %v32 = vld [vmem:[%s0 + $0x50] sm:$0xff]
    %v33 = vld [vmem:[%s0 + $0x58] sm:$0xff]
    %v34 = vld [vmem:[%s0 + $0x60] sm:$0xff]
    %v35 = vld [vmem:[%s0 + $0x68] sm:$0xff]
    %v36 = vld [vmem:[%s0 + $0x70] sm:$0xff]
    %v37 = vld [vmem:[%s0 + $0x78] sm:$0xff]
    %vm38 = vcmask 523264
    %v39 = vsel %vm38, %v22, 0.0
    %40 = vadd.xlane.f32.xlu0 %v39
    %v41 = vpop.xlane.xlu0 %40
    %v42 = vsel %vm38, %v23, 0.0
    %43 = vadd.xlane.f32.xlu0 %v42
    %v44 = vpop.xlane.xlu0 %43
    %v45 = vsel %vm38, %v24, 0.0
    %46 = vadd.xlane.f32.xlu0 %v45
    %v47 = vpop.xlane.xlu0 %46
    %v48 = vsel %vm38, %v25, 0.0
    %49 = vadd.xlane.f32.xlu0 %v48
    %v50 = vpop.xlane.xlu0 %49
    %v51 = vsel %vm38, %v26, 0.0
    %52 = vadd.xlane.f32.xlu0 %v51
    %v53 = vpop.xlane.xlu0 %52
    %v54 = vsel %vm38, %v27, 0.0
    %55 = vadd.xlane.f32.xlu0 %v54
    %v56 = vpop.xlane.xlu0 %55
    %v57 = vsel %vm38, %v28, 0.0
    %58 = vadd.xlane.f32.xlu0 %v57
    %v59 = vpop.xlane.xlu0 %58
    %v60 = vsel %vm38, %v29, 0.0
    %61 = vadd.xlane.f32.xlu0 %v60
    %v62 = vpop.xlane.xlu0 %61
    %v63 = vsel %vm38, %v30, 0.0
    %64 = vadd.xlane.f32.xlu0 %v63
    %v65 = vpop.xlane.xlu0 %64
    %v66 = vsel %vm38, %v31, 0.0
    %67 = vadd.xlane.f32.xlu0 %v66
    %v68 = vpop.xlane.xlu0 %67
    %v69 = vsel %vm38, %v32, 0.0
    %70 = vadd.xlane.f32.xlu0 %v69
    %v71 = vpop.xlane.xlu0 %70
    %v72 = vsel %vm38, %v33, 0.0
    %73 = vadd.xlane.f32.xlu0 %v72
    %v74 = vpop.xlane.xlu0 %73
    %v75 = vsel %vm38, %v34, 0.0
    %76 = vadd.xlane.f32.xlu0 %v75
    %v77 = vpop.xlane.xlu0 %76
    %v78 = vsel %vm38, %v35, 0.0
    %79 = vadd.xlane.f32.xlu0 %v78
    %v80 = vpop.xlane.xlu0 %79
    %v81 = vsel %vm38, %v36, 0.0
    %82 = vadd.xlane.f32.xlu0 %v81
    %v83 = vpop.xlane.xlu0 %82
    %v84 = vsel %vm38, %v37, 0.0
    %85 = vadd.xlane.f32.xlu0 %v84
    %v86 = vpop.xlane.xlu0 %85
    %v87 = vrcp.pop 64.0
    %v88 = vmul.f32 %v41, %v87
    %v89 = vmul.f32 %v44, %v87
    %v90 = vmul.f32 %v47, %v87
    %v91 = vmul.f32 %v50, %v87
    %v92 = vmul.f32 %v53, %v87
    %v93 = vmul.f32 %v56, %v87
    %v94 = vmul.f32 %v59, %v87
    %v95 = vmul.f32 %v62, %v87
    %v96 = vmul.f32 %v65, %v87
    %v97 = vmul.f32 %v68, %v87
    %v98 = vmul.f32 %v71, %v87
    %v99 = vmul.f32 %v74, %v87
    %v100 = vmul.f32 %v77, %v87
    %v101 = vmul.f32 %v80, %v87
    %v102 = vmul.f32 %v83, %v87
    %v103 = vmul.f32 %v86, %v87
    %v104 = vsub.f32 %v22, %v88
    %v105 = vsub.f32 %v23, %v89
    %v106 = vsub.f32 %v24, %v90
    %v107 = vsub.f32 %v25, %v91
    %v108 = vsub.f32 %v26, %v92
    %v109 = vsub.f32 %v27, %v93
    %v110 = vsub.f32 %v28, %v94
    %v111 = vsub.f32 %v29, %v95
    %v112 = vsub.f32 %v30, %v96
    %v113 = vsub.f32 %v31, %v97
    %v114 = vsub.f32 %v32, %v98
    %v115 = vsub.f32 %v33, %v99
    %v116 = vsub.f32 %v34, %v100
    %v117 = vsub.f32 %v35, %v101
    %v118 = vsub.f32 %v36, %v102
    %v119 = vsub.f32 %v37, %v103
    %v120 = vmul.f32 %v104, %v104
    %v121 = vmul.f32 %v105, %v105
    %v122 = vmul.f32 %v106, %v106
    %v123 = vmul.f32 %v107, %v107
    %v124 = vmul.f32 %v108, %v108
    %v125 = vmul.f32 %v109, %v109
    %v126 = vmul.f32 %v110, %v110
    %v127 = vmul.f32 %v111, %v111
    %v128 = vmul.f32 %v112, %v112
    %v129 = vmul.f32 %v113, %v113
    %v130 = vmul.f32 %v114, %v114
    %v131 = vmul.f32 %v115, %v115
    %v132 = vmul.f32 %v116, %v116
    %v133 = vmul.f32 %v117, %v117
    %v134 = vmul.f32 %v118, %v118
    %v135 = vmul.f32 %v119, %v119
    %v136 = vsel %vm38, %v120, 0.0
    %137 = vadd.xlane.f32.xlu0 %v136
    %v138 = vpop.xlane.xlu0 %137
    %v139 = vsel %vm38, %v121, 0.0
    %140 = vadd.xlane.f32.xlu0 %v139
    %v141 = vpop.xlane.xlu0 %140
    %v142 = vsel %vm38, %v122, 0.0
    %143 = vadd.xlane.f32.xlu0 %v142
    %v144 = vpop.xlane.xlu0 %143
    %v145 = vsel %vm38, %v123, 0.0
    %146 = vadd.xlane.f32.xlu0 %v145
    %v147 = vpop.xlane.xlu0 %146
    %v148 = vsel %vm38, %v124, 0.0
    %149 = vadd.xlane.f32.xlu0 %v148
    %v150 = vpop.xlane.xlu0 %149
    %v151 = vsel %vm38, %v125, 0.0
    %152 = vadd.xlane.f32.xlu0 %v151
    %v153 = vpop.xlane.xlu0 %152
    %v154 = vsel %vm38, %v126, 0.0
    %155 = vadd.xlane.f32.xlu0 %v154
    %v156 = vpop.xlane.xlu0 %155
    %v157 = vsel %vm38, %v127, 0.0
    %158 = vadd.xlane.f32.xlu0 %v157
    %v159 = vpop.xlane.xlu0 %158
    %v160 = vsel %vm38, %v128, 0.0
    %161 = vadd.xlane.f32.xlu0 %v160
    %v162 = vpop.xlane.xlu0 %161
    %v163 = vsel %vm38, %v129, 0.0
    %164 = vadd.xlane.f32.xlu0 %v163
    %v165 = vpop.xlane.xlu0 %164
    %v166 = vsel %vm38, %v130, 0.0
    %167 = vadd.xlane.f32.xlu0 %v166
    %v168 = vpop.xlane.xlu0 %167
    %v169 = vsel %vm38, %v131, 0.0
    %170 = vadd.xlane.f32.xlu0 %v169
    %v171 = vpop.xlane.xlu0 %170
    %v172 = vsel %vm38, %v132, 0.0
    %173 = vadd.xlane.f32.xlu0 %v172
    %v174 = vpop.xlane.xlu0 %173
    %v175 = vsel %vm38, %v133, 0.0
    %176 = vadd.xlane.f32.xlu0 %v175
    %v177 = vpop.xlane.xlu0 %176
    %v178 = vsel %vm38, %v134, 0.0
    %179 = vadd.xlane.f32.xlu0 %v178
    %v180 = vpop.xlane.xlu0 %179
    %v181 = vsel %vm38, %v135, 0.0
    %182 = vadd.xlane.f32.xlu0 %v181
    %v183 = vpop.xlane.xlu0 %182
    %v184 = vmul.f32 %v138, %v87
    %v185 = vmul.f32 %v141, %v87
    %v186 = vmul.f32 %v144, %v87
    %v187 = vmul.f32 %v147, %v87
    %v188 = vmul.f32 %v150, %v87
    %v189 = vmul.f32 %v153, %v87
    %v190 = vmul.f32 %v156, %v87
    %v191 = vmul.f32 %v159, %v87
    %v192 = vmul.f32 %v162, %v87
    %v193 = vmul.f32 %v165, %v87
    %v194 = vmul.f32 %v168, %v87
    %v195 = vmul.f32 %v171, %v87
    %v196 = vmul.f32 %v174, %v87
    %v197 = vmul.f32 %v177, %v87
    %v198 = vmul.f32 %v180, %v87
    %v199 = vmul.f32 %v183, %v87
    %v200 = vadd.f32 %v184, 1e-05
    %v201 = vadd.f32 %v185, 1e-05
    %v202 = vadd.f32 %v186, 1e-05
    %v203 = vadd.f32 %v187, 1e-05
    %v204 = vadd.f32 %v188, 1e-05
    %v205 = vadd.f32 %v189, 1e-05
    %v206 = vadd.f32 %v190, 1e-05
    %v207 = vadd.f32 %v191, 1e-05
    %v208 = vadd.f32 %v192, 1e-05
    %v209 = vadd.f32 %v193, 1e-05
    %v210 = vadd.f32 %v194, 1e-05
    %v211 = vadd.f32 %v195, 1e-05
    %v212 = vadd.f32 %v196, 1e-05
    %v213 = vadd.f32 %v197, 1e-05
    %v214 = vadd.f32 %v198, 1e-05
    %v215 = vadd.f32 %v199, 1e-05
    %v216 = vrsqrt.pop %v200
    %v217 = vrsqrt.pop %v201
    %v218 = vrsqrt.pop %v202
    %v219 = vrsqrt.pop %v203
    %v220 = vrsqrt.pop %v204
    %v221 = vrsqrt.pop %v205
    %v222 = vrsqrt.pop %v206
    %v223 = vrsqrt.pop %v207
    %v224 = vrsqrt.pop %v208
    %v225 = vrsqrt.pop %v209
    %v226 = vrsqrt.pop %v210
    %v227 = vrsqrt.pop %v211
    %v228 = vrsqrt.pop %v212
    %v229 = vrsqrt.pop %v213
    %v230 = vrsqrt.pop %v214
    %v231 = vrsqrt.pop %v215
    %v232 = vmul.f32 %v104, %v216
    %v233 = vmul.f32 %v105, %v217
    %v234 = vmul.f32 %v106, %v218
    %v235 = vmul.f32 %v107, %v219
    %v236 = vmul.f32 %v108, %v220
    %v237 = vmul.f32 %v109, %v221
    %v238 = vmul.f32 %v110, %v222
    %v239 = vmul.f32 %v111, %v223
    %v240 = vmul.f32 %v112, %v224
    %v241 = vmul.f32 %v113, %v225
    %v242 = vmul.f32 %v114, %v226
    %v243 = vmul.f32 %v115, %v227
    %v244 = vmul.f32 %v116, %v228
    %v245 = vmul.f32 %v117, %v229
    %v246 = vmul.f32 %v118, %v230
    %v247 = vmul.f32 %v119, %v231
    %v248 = vld [vmem:[%s2] sm:$0x1]
    %v250 = vlaneseq
    %v251 = vshrl.u32 %v250, 7
    %v252 = vsub.s32 0, %v251
    %v253 = vrot.slane %v248, %v252
    %v255 = vmul.f32 %v232, %v253
    %v256 = vmul.f32 %v233, %v253
    %v257 = vmul.f32 %v234, %v253
    %v258 = vmul.f32 %v235, %v253
    %v259 = vmul.f32 %v236, %v253
    %v260 = vmul.f32 %v237, %v253
    %v261 = vmul.f32 %v238, %v253
    %v262 = vmul.f32 %v239, %v253
    %v263 = vmul.f32 %v240, %v253
    %v264 = vmul.f32 %v241, %v253
    %v265 = vmul.f32 %v242, %v253
    %v266 = vmul.f32 %v243, %v253
    %v267 = vmul.f32 %v244, %v253
    %v268 = vmul.f32 %v245, %v253
    %v269 = vmul.f32 %v246, %v253
    %v270 = vmul.f32 %v247, %v253
    %v271 = vld [vmem:[%s3] sm:$0x1]
    %v273 = vlaneseq
    %v274 = vshrl.u32 %v273, 7
    %v275 = vsub.s32 0, %v274
    %v276 = vrot.slane %v271, %v275
    %v278 = vadd.f32 %v255, %v276
    %v279 = vadd.f32 %v256, %v276
    %v280 = vadd.f32 %v257, %v276
    %v281 = vadd.f32 %v258, %v276
    %v282 = vadd.f32 %v259, %v276
    %v283 = vadd.f32 %v260, %v276
    %v284 = vadd.f32 %v261, %v276
    %v285 = vadd.f32 %v262, %v276
    %v286 = vadd.f32 %v263, %v276
    %v287 = vadd.f32 %v264, %v276
    %v288 = vadd.f32 %v265, %v276
    %v289 = vadd.f32 %v266, %v276
    %v290 = vadd.f32 %v267, %v276
    %v291 = vadd.f32 %v268, %v276
    %v292 = vadd.f32 %v269, %v276
    %v293 = vadd.f32 %v270, %v276
    %v294 = vld [vmem:[%s1] sm:$0xff]
    %v295 = vld [vmem:[%s1 + $0x8] sm:$0xff]
    %v296 = vld [vmem:[%s1 + $0x10] sm:$0xff]
    %v297 = vld [vmem:[%s1 + $0x18] sm:$0xff]
    %v298 = vld [vmem:[%s1 + $0x20] sm:$0xff]
    %v299 = vld [vmem:[%s1 + $0x28] sm:$0xff]
    %v300 = vld [vmem:[%s1 + $0x30] sm:$0xff]
    %v301 = vld [vmem:[%s1 + $0x38] sm:$0xff]
    %v302 = vld [vmem:[%s1 + $0x40] sm:$0xff]
    %v303 = vld [vmem:[%s1 + $0x48] sm:$0xff]
    %v304 = vld [vmem:[%s1 + $0x50] sm:$0xff]
    %v305 = vld [vmem:[%s1 + $0x58] sm:$0xff]
    %v306 = vld [vmem:[%s1 + $0x60] sm:$0xff]
    %v307 = vld [vmem:[%s1 + $0x68] sm:$0xff]
    %v308 = vld [vmem:[%s1 + $0x70] sm:$0xff]
    %v309 = vld [vmem:[%s1 + $0x78] sm:$0xff]
    %v310 = vxor.u32 %v294, 2147483648
    %v311 = vxor.u32 %v295, 2147483648
    %v312 = vxor.u32 %v296, 2147483648
    %v313 = vxor.u32 %v297, 2147483648
    %v314 = vxor.u32 %v298, 2147483648
    %v315 = vxor.u32 %v299, 2147483648
    %v316 = vxor.u32 %v300, 2147483648
    %v317 = vxor.u32 %v301, 2147483648
    %v318 = vxor.u32 %v302, 2147483648
    %v319 = vxor.u32 %v303, 2147483648
    %v320 = vxor.u32 %v304, 2147483648
    %v321 = vxor.u32 %v305, 2147483648
    %v322 = vxor.u32 %v306, 2147483648
    %v323 = vxor.u32 %v307, 2147483648
    %v324 = vxor.u32 %v308, 2147483648
    %v325 = vxor.u32 %v309, 2147483648
    %v326 = vmul.f32 %v310, 1.442695
    %v327 = vpow.pop %v326
    %v328 = vmul.f32 %v311, 1.442695
    %v329 = vpow.pop %v328
    %v330 = vmul.f32 %v312, 1.442695
    %v331 = vpow.pop %v330
    %v332 = vmul.f32 %v313, 1.442695
    %v333 = vpow.pop %v332
    %v334 = vmul.f32 %v314, 1.442695
    %v335 = vpow.pop %v334
    %v336 = vmul.f32 %v315, 1.442695
    %v337 = vpow.pop %v336
    %v338 = vmul.f32 %v316, 1.442695
    %v339 = vpow.pop %v338
    %v340 = vmul.f32 %v317, 1.442695
    %v341 = vpow.pop %v340
    %v342 = vmul.f32 %v318, 1.442695
    %v343 = vpow.pop %v342
    %v344 = vmul.f32 %v319, 1.442695
    %v345 = vpow.pop %v344
    %v346 = vmul.f32 %v320, 1.442695
    %v347 = vpow.pop %v346
    %v348 = vmul.f32 %v321, 1.442695
    %v349 = vpow.pop %v348
    %v350 = vmul.f32 %v322, 1.442695
    %v351 = vpow.pop %v350
    %v352 = vmul.f32 %v323, 1.442695
    %v353 = vpow.pop %v352
    %v354 = vmul.f32 %v324, 1.442695
    %v355 = vpow.pop %v354
    %v356 = vmul.f32 %v325, 1.442695
    %v357 = vpow.pop %v356
    %v358 = vadd.f32 %v327, 1.0
    %v359 = vadd.f32 %v329, 1.0
    %v360 = vadd.f32 %v331, 1.0
    %v361 = vadd.f32 %v333, 1.0
    %v362 = vadd.f32 %v335, 1.0
    %v363 = vadd.f32 %v337, 1.0
    %v364 = vadd.f32 %v339, 1.0
    %v365 = vadd.f32 %v341, 1.0
    %v366 = vadd.f32 %v343, 1.0
    %v367 = vadd.f32 %v345, 1.0
    %v368 = vadd.f32 %v347, 1.0
    %v369 = vadd.f32 %v349, 1.0
    %v370 = vadd.f32 %v351, 1.0
    %v371 = vadd.f32 %v353, 1.0
    %v372 = vadd.f32 %v355, 1.0
    %v373 = vadd.f32 %v357, 1.0
    %v374 = vrcp.pop %v358
    %v375 = vmul.f32 1.0, %v374
    %v376 = vrcp.pop %v359
    %v377 = vmul.f32 1.0, %v376
    %v378 = vrcp.pop %v360
    %v379 = vmul.f32 1.0, %v378
    %v380 = vrcp.pop %v361
    %v381 = vmul.f32 1.0, %v380
    %v382 = vrcp.pop %v362
    %v383 = vmul.f32 1.0, %v382
    %v384 = vrcp.pop %v363
    %v385 = vmul.f32 1.0, %v384
    %v386 = vrcp.pop %v364
    %v387 = vmul.f32 1.0, %v386
    %v388 = vrcp.pop %v365
    %v389 = vmul.f32 1.0, %v388
    %v390 = vrcp.pop %v366
    %v391 = vmul.f32 1.0, %v390
    %v392 = vrcp.pop %v367
    %v393 = vmul.f32 1.0, %v392
    %v394 = vrcp.pop %v368
    %v395 = vmul.f32 1.0, %v394
    %v396 = vrcp.pop %v369
    %v397 = vmul.f32 1.0, %v396
    %v398 = vrcp.pop %v370
    %v399 = vmul.f32 1.0, %v398
    %v400 = vrcp.pop %v371
    %v401 = vmul.f32 1.0, %v400
    %v402 = vrcp.pop %v372
    %v403 = vmul.f32 1.0, %v402
    %v404 = vrcp.pop %v373
    %v405 = vmul.f32 1.0, %v404
    %v406 = vmul.f32 %v294, %v375
    %v407 = vmul.f32 %v295, %v377
    %v408 = vmul.f32 %v296, %v379
    %v409 = vmul.f32 %v297, %v381
    %v410 = vmul.f32 %v298, %v383
    %v411 = vmul.f32 %v299, %v385
    %v412 = vmul.f32 %v300, %v387
    %v413 = vmul.f32 %v301, %v389
    %v414 = vmul.f32 %v302, %v391
    %v415 = vmul.f32 %v303, %v393
    %v416 = vmul.f32 %v304, %v395
    %v417 = vmul.f32 %v305, %v397
    %v418 = vmul.f32 %v306, %v399
    %v419 = vmul.f32 %v307, %v401
    %v420 = vmul.f32 %v308, %v403
    %v421 = vmul.f32 %v309, %v405
    %v422 = vmul.f32 %v278, %v406
    %v423 = vmul.f32 %v279, %v407
    %v424 = vmul.f32 %v280, %v408
    %v425 = vmul.f32 %v281, %v409
    %v426 = vmul.f32 %v282, %v410
    %v427 = vmul.f32 %v283, %v411
    %v428 = vmul.f32 %v284, %v412
    %v429 = vmul.f32 %v285, %v413
    %v430 = vmul.f32 %v286, %v414
    %v431 = vmul.f32 %v287, %v415
    %v432 = vmul.f32 %v288, %v416
    %v433 = vmul.f32 %v289, %v417
    %v434 = vmul.f32 %v290, %v418
    %v435 = vmul.f32 %v291, %v419
    %v436 = vmul.f32 %v292, %v420
    %v437 = vmul.f32 %v293, %v421
    %v438 = vpack.c.bf16 %v423, %v422
    %v439 = vpack.c.bf16 %v425, %v424
    %v440 = vpack.c.bf16 %v427, %v426
    %v441 = vpack.c.bf16 %v429, %v428
    %v442 = vpack.c.bf16 %v431, %v430
    %v443 = vpack.c.bf16 %v433, %v432
    %v444 = vpack.c.bf16 %v435, %v434
    %v445 = vpack.c.bf16 %v437, %v436
    %v446 = vld [vmem:[%s4] sm:$0xf]
    %v447 = vld [vmem:[%s4 + $0x4] sm:$0xf]
    %v448 = vld [vmem:[%s4 + $0x8] sm:$0xf]
    %v449 = vld [vmem:[%s4 + $0xc] sm:$0xf]
    %v450 = vld [vmem:[%s4 + $0x10] sm:$0xf]
    %v451 = vld [vmem:[%s4 + $0x14] sm:$0xf]
    %v452 = vld [vmem:[%s4 + $0x18] sm:$0xf]
    %v453 = vld [vmem:[%s4 + $0x1c] sm:$0xf]
    %v462 = vunpack.c.l.b16 %v446
    %v463 = vunpack.c.l.b16 %v447
    %v464 = vunpack.c.l.b16 %v448
    %v465 = vunpack.c.l.b16 %v449
    %v466 = vunpack.c.l.b16 %v450
    %v467 = vunpack.c.l.b16 %v451
    %v468 = vunpack.c.l.b16 %v452
    %v469 = vunpack.c.l.b16 %v453
    %v470 = vpack.c.b16 %v463, %v462
    %v471 = vpack.c.b16 %v465, %v464
    %v472 = vpack.c.b16 %v467, %v466
    %v473 = vpack.c.b16 %v469, %v468
    %v479 = vsel %vm38, %v438, 0
    %v482 = vsel %vm38, %v439, 0
    %v485 = vsel %vm38, %v440, 0
    %v488 = vsel %vm38, %v441, 0
    %v491 = vsel %vm38, %v442, 0
    %v494 = vsel %vm38, %v443, 0
    %v497 = vsel %vm38, %v444, 0
    %v500 = vsel %vm38, %v445, 0
    %502 = vmatprep.subr.bf16.mxu0 0
    %503 = vmatpush1.bf16.msra.mxu0 %v470
    %504 = vmatprep.subr.bf16.mxu0 0
    %505 = vmatpush1.bf16.msra.mxu0 %v471
    %506 = vmatprep.subr.bf16.mxu0 0
    %507 = vmatpush1.bf16.msra.mxu0 %v472
    %508 = vmatprep.subr.bf16.mxu0 0
    %509 = vmatpush1.bf16.msra.mxu0 %v473
    %510 = vmatprep.subr.bf16.mxu0 0
    %511 = vmatpush1.bf16.msra.mxu0 0
    %512 = vmatprep.subr.bf16.mxu0 0
    %513 = vmatpush1.bf16.msra.mxu0 0
    %514 = vmatprep.subr.bf16.mxu0 0
    %515 = vmatpush1.bf16.msra.mxu0 0
    %516 = vmatprep.subr.bf16.mxu0 0
    %517 = vmatpush1.bf16.msra.mxu0 0
    %518 = vmatprep.subr.bf16.mxu0 0
    %519 = vmatpush1.bf16.msra.mxu0 0
    %520 = vmatprep.subr.bf16.mxu0 0
    %521 = vmatpush1.bf16.msra.mxu0 0
    %522 = vmatprep.subr.bf16.mxu0 0
    %523 = vmatpush1.bf16.msra.mxu0 0
    %524 = vmatprep.subr.bf16.mxu0 0
    %525 = vmatpush1.bf16.msra.mxu0 0
    %526 = vmatprep.subr.bf16.mxu0 0
    %527 = vmatpush1.bf16.msra.mxu0 0
    %528 = vmatprep.subr.bf16.mxu0 0
    %529 = vmatpush1.bf16.msra.mxu0 0
    %530 = vmatprep.subr.bf16.mxu0 0
    %531 = vmatpush1.bf16.msra.mxu0 0
    %532 = vmatprep.subr.bf16.mxu0 0
    %533 = vmatpush1.bf16.msra.mxu0 0
    %534 = vmatprep.mubr.bf16.mxu0 0
    %535 = vmatmul.mubr.bf16.gmra.mrb[0].mxu0 %v479
    %v536 = vpop.f32.mrb[0].mxu0
    %v537 = vadd.f32 0.0, %v536
    %v538 = vpop.f32.mrb[0].mxu0
    %v539 = vpop.f32.mrb[0].mxu0
    %v540 = vadd.f32 0.0, %v539
    %v541 = vpop.f32.mrb[0].mxu0
    %542 = vmatprep.mubr.bf16.mxu0 0
    %543 = vmatmul.mubr.bf16.gmra.mrb[0].mxu0 %v482
    %v544 = vpop.f32.mrb[0].mxu0
    %v545 = vadd.f32 0.0, %v544
    %v546 = vpop.f32.mrb[0].mxu0
    %v547 = vpop.f32.mrb[0].mxu0
    %v548 = vadd.f32 0.0, %v547
    %v549 = vpop.f32.mrb[0].mxu0
    %550 = vmatprep.mubr.bf16.mxu0 0
    %551 = vmatmul.mubr.bf16.gmra.mrb[0].mxu0 %v485
    %v552 = vpop.f32.mrb[0].mxu0
    %v553 = vadd.f32 0.0, %v552
    %v554 = vpop.f32.mrb[0].mxu0
    %v555 = vpop.f32.mrb[0].mxu0
    %v556 = vadd.f32 0.0, %v555
    %v557 = vpop.f32.mrb[0].mxu0
    %558 = vmatprep.mubr.bf16.mxu0 0
    %559 = vmatmul.mubr.bf16.gmra.mrb[0].mxu0 %v488
    %v560 = vpop.f32.mrb[0].mxu0
    %v561 = vadd.f32 0.0, %v560
    %v562 = vpop.f32.mrb[0].mxu0
    %v563 = vpop.f32.mrb[0].mxu0
    %v564 = vadd.f32 0.0, %v563
    %v565 = vpop.f32.mrb[0].mxu0
    %566 = vmatprep.mubr.bf16.mxu0 0
    %567 = vmatmul.mubr.bf16.gmra.mrb[0].mxu0 %v491
    %v568 = vpop.f32.mrb[0].mxu0
    %v569 = vadd.f32 0.0, %v568
    %v570 = vpop.f32.mrb[0].mxu0
    %v571 = vpop.f32.mrb[0].mxu0
    %v572 = vadd.f32 0.0, %v571
    %v573 = vpop.f32.mrb[0].mxu0
    %574 = vmatprep.mubr.bf16.mxu0 0
    %575 = vmatmul.mubr.bf16.gmra.mrb[0].mxu0 %v494
    %v576 = vpop.f32.mrb[0].mxu0
    %v577 = vadd.f32 0.0, %v576
    %v578 = vpop.f32.mrb[0].mxu0
    %v579 = vpop.f32.mrb[0].mxu0
    %v580 = vadd.f32 0.0, %v579
    %v581 = vpop.f32.mrb[0].mxu0
    %582 = vmatprep.mubr.bf16.mxu0 0
    %583 = vmatmul.mubr.bf16.gmra.mrb[0].mxu0 %v497
    %v584 = vpop.f32.mrb[0].mxu0
    %v585 = vadd.f32 0.0, %v584
    %v586 = vpop.f32.mrb[0].mxu0
    %v587 = vpop.f32.mrb[0].mxu0
    %v588 = vadd.f32 0.0, %v587
    %v589 = vpop.f32.mrb[0].mxu0
    %590 = vmatprep.mubr.bf16.mxu0 0
    %591 = vmatmul.mubr.bf16.gmra.mrb[0].mxu0 %v500
    %v592 = vpop.f32.mrb[0].mxu0
    %v593 = vadd.f32 0.0, %v592
    %v594 = vpop.f32.mrb[0].mxu0
    %v595 = vpop.f32.mrb[0].mxu0
    %v596 = vadd.f32 0.0, %v595
    %v597 = vpop.f32.mrb[0].mxu0
    %598 = vdwg.mxu0
    %vm599 = vcmask 261120
    %600 = vst.msk [vmem:[#allocation2] sm:$0xff] %vm599, %v537
    %601 = vst.msk [vmem:[#allocation2 + $0x8] sm:$0xff] %vm599, %v540
    %602 = vst.msk [vmem:[#allocation2 + $0x10] sm:$0xff] %vm599, %v545
    %603 = vst.msk [vmem:[#allocation2 + $0x18] sm:$0xff] %vm599, %v548
    %604 = vst.msk [vmem:[#allocation2 + $0x20] sm:$0xff] %vm599, %v553
    %605 = vst.msk [vmem:[#allocation2 + $0x28] sm:$0xff] %vm599, %v556
    %606 = vst.msk [vmem:[#allocation2 + $0x30] sm:$0xff] %vm599, %v561
    %607 = vst.msk [vmem:[#allocation2 + $0x38] sm:$0xff] %vm599, %v564
    %608 = vst.msk [vmem:[#allocation2 + $0x40] sm:$0xff] %vm599, %v569
    %609 = vst.msk [vmem:[#allocation2 + $0x48] sm:$0xff] %vm599, %v572
    %610 = vst.msk [vmem:[#allocation2 + $0x50] sm:$0xff] %vm599, %v577
    %611 = vst.msk [vmem:[#allocation2 + $0x58] sm:$0xff] %vm599, %v580
    %612 = vst.msk [vmem:[#allocation2 + $0x60] sm:$0xff] %vm599, %v585
    %613 = vst.msk [vmem:[#allocation2 + $0x68] sm:$0xff] %vm599, %v588
    %614 = vst.msk [vmem:[#allocation2 + $0x70] sm:$0xff] %vm599, %v593
    %615 = vst.msk [vmem:[#allocation2 + $0x78] sm:$0xff] %vm599, %v596
    // Predicated region
    $region22: #{_lambda_.7} parent=1 // pred_check
      _
    $region23: #{_lambda_.7} parent=1 // pred_check_branch
      %617 = sbr.rel (0) target = $region25
    $region24: #{_lambda_.7} parent=1 // pred_region
      %s619 = ssub.s32 2048, 2048
      %620 = vsyncadd [#allocation3], %s619
      %s621 = sshll.u32 [#allocation2], 4
      %s622 = int_to_ptr.vmem [resolvable:$true] %s621
      %627 = dma.vmem_to_hbm [thread:$0]  %s622, 2048, %s5, [#allocation3], 128, 128, 8
    $region25: #{_lambda_.7} parent=1 // pred_fallthru
      _
    // Predicated region
    $region26: #{_lambda_.7} parent=1 // pred_check
      _
    $region27: #{_lambda_.7} parent=1 // pred_check_branch
      %629 = sbr.rel (0) target = $region29
    $region28: #{_lambda_.7} parent=1 // pred_region
      %630 = dma.done [#allocation3], 2048
    $region29: #{_lambda_.7} parent=1 // pred_fallthru
      _
    %631 = vsyncpa [#allocation3], 1

// kernel: _lambda_.6
$region0: #{_lambda_.6}
  #allocation0 [shape = 'u32[]', space=smem, size = 0x4, offset = 0x4, fixed_abs, tag = 'smem constant byte address 0x4 - core index']
  #allocation1 [shape = 'u32[144,128]{1,0:T(1,128)}', space=vmem, size = 0x12000, scoped, tag = 'internal scratch']
  %s0 = inlined_call_operand.vmem [shape: f32[2,2,128,64], index: 0, kind: input, shape index: {}]
  %s1 = inlined_call_operand.vmem [shape: bf16[2,2,64,96], index: 1, kind: input, shape index: {}]
  %s2 = inlined_call_operand.vmem [shape: f32[2,2,1,64], index: 2, kind: input, shape index: {}]
  %s3 = inlined_call_operand.vmem [shape: f32[2,2,16,64], index: 3, kind: input, shape index: {}]
  %s4 = inlined_call_operand.vmem [shape: f32[2,2,1,64], index: 4, kind: input, shape index: {}]
  %s5 = inlined_call_operand.vmem [shape: f32[2,2,128,64], index: 5, kind: output, shape index: {}]
  %s6 = sld [smem:[#allocation0]]
  $region67: #{_lambda_.6} parent=0
    _
  %s8 = ssub.s32 1, %s6
  %s9 = scalar_select 0, %s8, %s6
  loop: start=0, step=1, limit=6
  $region2: #{_lambda_.6} parent=0 // loop_pre_header
    _
  $region3: #{_lambda_.6} parent=0 // loop_header
    %s11 = sphi 0, %s15
    %p12 = scmp.ge.s32.totalorder %s11, 6
    %s18 = sphi 0, %s30
    %s19 = sphi 0, %s26
    %s20 = sphi 0, %s18
    %s21 = sphi 0, %s19
    %s22 = sphi 0, %s20
    %s23 = sphi 0, %s21
    %s35 = sphi 0, %s37
    %s38 = sphi 0, %s35
    %s39 = sphi 0, %s38
    %s55 = sphi 0, %s39
    %s61 = sphi 0, %s63
    %s64 = sphi 0, %s61
    %s65 = sphi 0, %s64
    %s81 = sphi 0, %s65
    %s87 = sphi 0, %s89
    %s90 = sphi 0, %s87
    %s91 = sphi 0, %s90
    %s107 = sphi 0, %s91
    %s113 = sphi 0, %s115
    %s116 = sphi 0, %s113
    %s117 = sphi 0, %s116
    %s133 = sphi 0, %s117
    %s139 = sphi 0, %s141
    %s142 = sphi 0, %s139
    %s143 = sphi 0, %s142
    %s159 = sphi 0, %s143
    %s167 = sphi 0, %s169
    %s170 = sphi 0, %s167
    %s171 = sphi 0, %s170
    %s187 = sphi 0, %s171
  $region4: #{_lambda_.6} parent=0 // loop_header_branch
    %14 = sbr.rel (%p12) target = $region8
  $region5: #{_lambda_.6} parent=0 // loop_body
    %s16 = ssub.s32 %s11, 1
    %s17 = ssub.s32 %s11, 2
    %s24 = sadd.s32 1, %s19
    %p25 = scmp.ge.s32.totalorder %s24, 2
    %s26 = scalar_select %p25, 0, %s24
    %s27 = sadd.s32 1, %s18
    %s28 = scalar_select %p25, %s27, %s18
    %p29 = scmp.ge.s32.totalorder %s28, 2
    %s30 = scalar_select %p29, 0, %s28
    %s31 = ssub.s32 %s18, %s30
    %s32 = ssub.s32 %s19, %s26
    %s33 = sor.u32 %s31, %s32
    %p34 = scmp.eq.s32.totalorder %s33, 0
    %s36 = sadd.s32 %s35, 1
    %s37 = scalar_select %p34, %s35, %s36
    %p40 = pneg %p34
    %p41 = scmp.eq.s32.totalorder %s11, 3
    %p42 = por %p40, %p41
    %p43 = scmp.ne.s32.totalorder %s35, %s38
    %p44 = scmp.eq.s32.totalorder %s11, 0
    %p45 = por %p43, %p44
    %p46 = scmp.ne.s32.totalorder %s35, %s38
    %p47 = scmp.eq.s32.totalorder %s16, 3
    %p48 = por %p46, %p47
    %p49 = scmp.ne.s32.totalorder %s38, %s39
    %p50 = scmp.eq.s32.totalorder %s16, 0
    %p51 = por %p49, %p50
    %p52 = scmp.ne.s32.totalorder %s38, %s39
    %p53 = scmp.eq.s32.totalorder %s17, 3
    %p54 = por %p52, %p53
    %p56 = scmp.ne.s32.totalorder %s39, %s55
    %p57 = scmp.eq.s32.totalorder %s17, 0
    %p58 = por %p56, %p57
    %s59 = ssub.s32 %s19, %s26
    %p60 = scmp.eq.s32.totalorder %s59, 0
    %s62 = sadd.s32 %s61, 1
    %s63 = scalar_select %p60, %s61, %s62
    %p66 = pneg %p60
    %p67 = scmp.eq.s32.totalorder %s11, 3
    %p68 = por %p66, %p67
    %p69 = scmp.ne.s32.totalorder %s61, %s64
    %p70 = scmp.eq.s32.totalorder %s11, 0
    %p71 = por %p69, %p70
    %p72 = scmp.ne.s32.totalorder %s61, %s64
    %p73 = scmp.eq.s32.totalorder %s16, 3
    %p74 = por %p72, %p73
    %p75 = scmp.ne.s32.totalorder %s64, %s65
    %p76 = scmp.eq.s32.totalorder %s16, 0
    %p77 = por %p75, %p76
    %p78 = scmp.ne.s32.totalorder %s64, %s65
    %p79 = scmp.eq.s32.totalorder %s17, 3
    %p80 = por %p78, %p79
    %p82 = scmp.ne.s32.totalorder %s65, %s81
    %p83 = scmp.eq.s32.totalorder %s17, 0
    %p84 = por %p82, %p83
    %s85 = ssub.s32 %s19, %s26
    %p86 = scmp.eq.s32.totalorder %s85, 0
    %s88 = sadd.s32 %s87, 1
    %s89 = scalar_select %p86, %s87, %s88
    %p92 = pneg %p86
    %p93 = scmp.eq.s32.totalorder %s11, 3
    %p94 = por %p92, %p93
    %p95 = scmp.ne.s32.totalorder %s87, %s90
    %p96 = scmp.eq.s32.totalorder %s11, 0
    %p97 = por %p95, %p96
    %p98 = scmp.ne.s32.totalorder %s87, %s90
    %p99 = scmp.eq.s32.totalorder %s16, 3
    %p100 = por %p98, %p99
    %p101 = scmp.ne.s32.totalorder %s90, %s91
    %p102 = scmp.eq.s32.totalorder %s16, 0
    %p103 = por %p101, %p102
    %p104 = scmp.ne.s32.totalorder %s90, %s91
    %p105 = scmp.eq.s32.totalorder %s17, 3
    %p106 = por %p104, %p105
    %p108 = scmp.ne.s32.totalorder %s91, %s107
    %p109 = scmp.eq.s32.totalorder %s17, 0
    %p110 = por %p108, %p109
    %s111 = ssub.s32 %s19, %s26
    %p112 = scmp.eq.s32.totalorder %s111, 0
    %s114 = sadd.s32 %s113, 1
    %s115 = scalar_select %p112, %s113, %s114
    %p118 = pneg %p112
    %p119 = scmp.eq.s32.totalorder %s11, 3
    %p120 = por %p118, %p119
    %p121 = scmp.ne.s32.totalorder %s113, %s116
    %p122 = scmp.eq.s32.totalorder %s11, 0
    %p123 = por %p121, %p122
    %p124 = scmp.ne.s32.totalorder %s113, %s116
    %p125 = scmp.eq.s32.totalorder %s16, 3
    %p126 = por %p124, %p125
    %p127 = scmp.ne.s32.totalorder %s116, %s117
    %p128 = scmp.eq.s32.totalorder %s16, 0
    %p129 = por %p127, %p128
    %p130 = scmp.ne.s32.totalorder %s116, %s117
    %p131 = scmp.eq.s32.totalorder %s17, 3
    %p132 = por %p130, %p131
    %p134 = scmp.ne.s32.totalorder %s117, %s133
    %p135 = scmp.eq.s32.totalorder %s17, 0
    %p136 = por %p134, %p135
    %s137 = ssub.s32 %s19, %s26
    %p138 = scmp.eq.s32.totalorder %s137, 0
    %s140 = sadd.s32 %s139, 1
    %s141 = scalar_select %p138, %s139, %s140
    %p144 = pneg %p138
    %p145 = scmp.eq.s32.totalorder %s11, 3
    %p146 = por %p144, %p145
    %p147 = scmp.ne.s32.totalorder %s139, %s142
    %p148 = scmp.eq.s32.totalorder %s11, 0
    %p149 = por %p147, %p148
    %p150 = scmp.ne.s32.totalorder %s139, %s142
    %p151 = scmp.eq.s32.totalorder %s16, 3
    %p152 = por %p150, %p151
    %p153 = scmp.ne.s32.totalorder %s142, %s143
    %p154 = scmp.eq.s32.totalorder %s16, 0
    %p155 = por %p153, %p154
    %p156 = scmp.ne.s32.totalorder %s142, %s143
    %p157 = scmp.eq.s32.totalorder %s17, 3
    %p158 = por %p156, %p157
    %p160 = scmp.ne.s32.totalorder %s143, %s159
    %p161 = scmp.eq.s32.totalorder %s17, 0
    %p162 = por %p160, %p161
    %s163 = ssub.s32 %s18, %s30
    %s164 = ssub.s32 %s19, %s26
    %s165 = sor.u32 %s163, %s164
    %p166 = scmp.eq.s32.totalorder %s165, 0
    %s168 = sadd.s32 %s167, 1
    %s169 = scalar_select %p166, %s167, %s168
    %p172 = pneg %p166
    %p173 = scmp.eq.s32.totalorder %s11, 3
    %p174 = por %p172, %p173
    %p175 = scmp.ne.s32.totalorder %s167, %s170
    %p176 = scmp.eq.s32.totalorder %s11, 0
    %p177 = por %p175, %p176
    %p178 = scmp.ne.s32.totalorder %s167, %s170
    %p179 = scmp.eq.s32.totalorder %s16, 3
    %p180 = por %p178, %p179
    %p181 = scmp.ne.s32.totalorder %s170, %s171
    %p182 = scmp.eq.s32.totalorder %s16, 0
    %p183 = por %p181, %p182
    %p184 = scmp.ne.s32.totalorder %s170, %s171
    %p185 = scmp.eq.s32.totalorder %s17, 3
    %p186 = por %p184, %p185
    %p188 = scmp.ne.s32.totalorder %s171, %s187
    %p189 = scmp.eq.s32.totalorder %s17, 0
    %p190 = por %p188, %p189
    %p191 = scmp.le.s32.totalorder 1, %s11
    %p192 = scmp.lt.s32.totalorder %s11, 5
    %p193 = pnand %p191, %p192
    %p194 = pneg %p193
    // Predicated region
    $region9: #{_lambda_.6} parent=5 // pred_check
      _
    $region10: #{_lambda_.6} parent=5 // pred_check_branch
      %196 = sbr.rel (%p193) target = $region12
    $region11: #{_lambda_.6} parent=5 // pred_region
      %s197 = ssub.s32 %s11, 1
    $region12: #{_lambda_.6} parent=5 // pred_fallthru
      _
    %p198 = scmp.lt.s32.totalorder %s11, 4
    // Predicated region
    $region13: #{_lambda_.6} parent=5 // pred_check
      %p199 = pneg %p198
    $region14: #{_lambda_.6} parent=5 // pred_check_branch
      %201 = sbr.rel (%p199) target = $region16
    $region15: #{_lambda_.6} parent=5 // pred_region
      // Predicated region
      $region17: #{_lambda_.6} parent=15 // pred_check
        %p202 = pneg %p45
      $region18: #{_lambda_.6} parent=15 // pred_check_branch
        %204 = sbr.rel (%p202) target = $region20
      $region19: #{_lambda_.6} parent=15 // pred_region
        %p205 = scmp.lt.s32.totalorder %s18, 1
        %s206 = scalar_select %p205, %s18, 1
        %p207 = scmp.lt.s32.totalorder %s19, 1
        %s208 = scalar_select %p207, %s19, 1
        %s209 = smul.addr %s208, 16
        %s210 = smul.addr %s206, 32
        %s211 = sadd.s32 %s209, %s210
        %s212 = smul.addr %s211, 8
        %s213 = scalar_lea.vmem %s0, %s212
      $region20: #{_lambda_.6} parent=15 // pred_fallthru
        _
      // Predicated region
      $region21: #{_lambda_.6} parent=15 // pred_check
        %p214 = pneg %p71
      $region22: #{_lambda_.6} parent=15 // pred_check_branch
        %216 = sbr.rel (%p214) target = $region24
      $region23: #{_lambda_.6} parent=15 // pred_region
        %p217 = scmp.lt.s32.totalorder %s19, 1
        %s218 = scalar_select %p217, %s19, 1
        %s219 = smul.addr %s218, 16
        %s220 = smul.addr %s219, 4
        %s221 = scalar_lea.vmem %s1, %s220
      $region24: #{_lambda_.6} parent=15 // pred_fallthru
        _
      // Predicated region
      $region25: #{_lambda_.6} parent=15 // pred_check
        %p222 = pneg %p97
      $region26: #{_lambda_.6} parent=15 // pred_check_branch
        %224 = sbr.rel (%p222) target = $region28
      $region27: #{_lambda_.6} parent=15 // pred_region
        %p225 = scmp.lt.s32.totalorder %s19, 1
        %s226 = scalar_select %p225, %s19, 1
        %s227 = smul.addr %s226, 2
        %s228 = scalar_lea.vmem %s2, %s227
      $region28: #{_lambda_.6} parent=15 // pred_fallthru
        _
      // Predicated region
      $region29: #{_lambda_.6} parent=15 // pred_check
        %p229 = pneg %p123
      $region30: #{_lambda_.6} parent=15 // pred_check_branch
        %231 = sbr.rel (%p229) target = $region32
      $region31: #{_lambda_.6} parent=15 // pred_region
        %p232 = scmp.lt.s32.totalorder %s19, 1
        %s233 = scalar_select %p232, %s19, 1
        %s234 = smul.addr %s233, 4
        %s235 = smul.addr %s234, 8
        %s236 = scalar_lea.vmem %s3, %s235
      $region32: #{_lambda_.6} parent=15 // pred_fallthru
        _
      // Predicated region
      $region33: #{_lambda_.6} parent=15 // pred_check
        %p237 = pneg %p149
      $region34: #{_lambda_.6} parent=15 // pred_check_branch
        %239 = sbr.rel (%p237) target = $region36
      $region35: #{_lambda_.6} parent=15 // pred_region
        %p240 = scmp.lt.s32.totalorder %s19, 1
        %s241 = scalar_select %p240, %s19, 1
        %s242 = smul.addr %s241, 2
        %s243 = scalar_lea.vmem %s4, %s242
      $region36: #{_lambda_.6} parent=15 // pred_fallthru
        _
    $region16: #{_lambda_.6} parent=5 // pred_fallthru
      _
    %p244 = scmp.le.s32.totalorder 1, %s11
    %p245 = scmp.lt.s32.totalorder %s11, 5
    %p246 = pnand %p244, %p245
    %p247 = pneg %p246
    // Predicated region
    $region37: #{_lambda_.6} parent=5 // pred_check
      _
    $region38: #{_lambda_.6} parent=5 // pred_check_branch
      %249 = sbr.rel (%p246) target = $region40
    $region39: #{_lambda_.6} parent=5 // pred_region
      %s250 = ssub.s32 %s11, 1
      %p251 = scmp.lt.s32.totalorder %s20, 1
      %s252 = scalar_select %p251, %s20, 1
      %p253 = scmp.lt.s32.totalorder %s21, 1
      %s254 = scalar_select %p253, %s21, 1
      %s255 = smul.addr %s254, 16
      %s256 = smul.addr %s252, 32
      %s257 = sadd.s32 %s255, %s256
      %s258 = smul.addr %s257, 8
      %s259 = scalar_lea.vmem %s0, %s258
      %p260 = pneg %p51
      %p261 = pneg %p48
      %p262 = scmp.lt.s32.totalorder %s21, 1
      %s263 = scalar_select %p262, %s21, 1
      %s264 = smul.addr %s263, 16
      %s265 = smul.addr %s264, 4
      %s266 = scalar_lea.vmem %s1, %s265
      %p267 = pneg %p77
      %p268 = pneg %p74
      %p269 = scmp.lt.s32.totalorder %s21, 1
      %s270 = scalar_select %p269, %s21, 1
      %s271 = smul.addr %s270, 2
      %s272 = scalar_lea.vmem %s2, %s271
      %p273 = pneg %p103
      %p274 = pneg %p100
      %p275 = scmp.lt.s32.totalorder %s21, 1
      %s276 = scalar_select %p275, %s21, 1
      %s277 = smul.addr %s276, 4
      %s278 = smul.addr %s277, 8
      %s279 = scalar_lea.vmem %s3, %s278
      %p280 = pneg %p129
      %p281 = pneg %p126
      %p282 = scmp.lt.s32.totalorder %s21, 1
      %s283 = scalar_select %p282, %s21, 1
      %s284 = smul.addr %s283, 2
      %s285 = scalar_lea.vmem %s4, %s284
      %p286 = pneg %p155
      %p287 = pneg %p152
      %p288 = pneg %p183
      %p289 = pneg %p180
      %p290 = scmp.lt.s32.totalorder %s20, 1
      %s291 = scalar_select %p290, %s20, 1
      %p292 = scmp.lt.s32.totalorder %s21, 1
      %s293 = scalar_select %p292, %s21, 1
      %s294 = smul.addr %s293, 16
      %s295 = smul.addr %s291, 32
      %s296 = sadd.s32 %s294, %s295
      %s297 = smul.addr %s296, 8
      %s298 = scalar_lea.vmem %s5, %s297
      %p299 = scmp.lt.s32.totalorder %s20, 1
      %s300 = scalar_select %p299, %s20, 1
      %p301 = scmp.lt.s32.totalorder %s21, 1
      %s302 = scalar_select %p301, %s21, 1
      %s303 = smul.addr %s302, 16
      %s304 = smul.addr %s300, 32
      %s305 = sadd.s32 %s303, %s304
      %s306 = smul.addr %s305, 8
      %s307 = scalar_lea.vmem %s0, %s306
      %p308 = scmp.lt.s32.totalorder %s21, 1
      %s309 = scalar_select %p308, %s21, 1
      %s310 = smul.addr %s309, 16
      %s311 = smul.addr %s310, 4
      %s312 = scalar_lea.vmem %s1, %s311
      %p313 = scmp.lt.s32.totalorder %s21, 1
      %s314 = scalar_select %p313, %s21, 1
      %s315 = smul.addr %s314, 2
      %s316 = scalar_lea.vmem %s2, %s315
      %p317 = scmp.lt.s32.totalorder %s21, 1
      %s318 = scalar_select %p317, %s21, 1
      %s319 = smul.addr %s318, 4
      %s320 = smul.addr %s319, 8
      %s321 = scalar_lea.vmem %s3, %s320
      %p322 = scmp.lt.s32.totalorder %s21, 1
      %s323 = scalar_select %p322, %s21, 1
      %s324 = smul.addr %s323, 2
      %s325 = scalar_lea.vmem %s4, %s324
      %p326 = scmp.lt.s32.totalorder %s20, 1
      %s327 = scalar_select %p326, %s20, 1
      %p328 = scmp.lt.s32.totalorder %s21, 1
      %s329 = scalar_select %p328, %s21, 1
      %s330 = smul.addr %s329, 16
      %s331 = smul.addr %s327, 32
      %s332 = sadd.s32 %s330, %s331
      %s333 = smul.addr %s332, 8
      %s334 = scalar_lea.vmem %s5, %s333
      %v336 = vld [vmem:[%s312] sm:$0xf]
      %v337 = vld [vmem:[%s312 + $0x4] sm:$0xf]
      %v338 = vld [vmem:[%s312 + $0x8] sm:$0xf]
      %v339 = vld [vmem:[%s312 + $0xc] sm:$0xf]
      %v340 = vld [vmem:[%s312 + $0x10] sm:$0xf]
      %v341 = vld [vmem:[%s312 + $0x14] sm:$0xf]
      %v342 = vld [vmem:[%s312 + $0x18] sm:$0xf]
      %v343 = vld [vmem:[%s312 + $0x1c] sm:$0xf]
      %v344 = vld [vmem:[%s321] sm:$0xff]
      %v345 = vld [vmem:[%s321 + $0x8] sm:$0xff]
      %v346 = vld [vmem:[%s316] sm:$0x1]
      %v347 = vld [vmem:[%s325] sm:$0x1]
      loop: start=0, step=1, limit=8
      $region41: #{_lambda_.6} parent=39 // loop_pre_header
        _
      $region42: #{_lambda_.6} parent=39 // loop_header
        %s349 = sphi 0, %s353
        %p350 = scmp.ge.s32.totalorder %s349, 8
        %v354 = vphi 0.0, %v1279
        %v355 = vphi 0.0, %v1280
      $region43: #{_lambda_.6} parent=39 // loop_header_branch
        %352 = sbr.rel (%p350) target = $region47
      $region44: #{_lambda_.6} parent=39 // loop_body
        %s356 = smul.u32 %s349, 16
        %s357 = scalar_lea.vmem %s307, %s356
        %v358 = vld [vmem:[%s357] sm:$0xff]
        %v359 = vld [vmem:[%s357 + $0x8] sm:$0xff]
        %v360 = vpack.c.bf16 %v359, %v358
        %v369 = vunpack.c.l.b16 %v336
        %v370 = vunpack.c.l.b16 %v337
        %v371 = vunpack.c.l.b16 %v338
        %v372 = vunpack.c.l.b16 %v339
        %v373 = vunpack.c.l.b16 %v340
        %v374 = vunpack.c.l.b16 %v341
        %v375 = vunpack.c.l.b16 %v342
        %v376 = vunpack.c.l.b16 %v343
        %v377 = vpack.c.b16 %v370, %v369
        %v378 = vpack.c.b16 %v372, %v371
        %v379 = vpack.c.b16 %v374, %v373
        %v380 = vpack.c.b16 %v376, %v375
        %vm385 = vcmask 523264
        %v387 = vsel %vm385, %v360, 0
        %389 = vmatprep.subr.bf16.mxu0 0
        %390 = vmatpush1.bf16.msra.mxu0 %v377
        %391 = vmatprep.subr.bf16.mxu0 0
        %392 = vmatpush1.bf16.msra.mxu0 %v378
        %393 = vmatprep.subr.bf16.mxu0 0
        %394 = vmatpush1.bf16.msra.mxu0 %v379
        %395 = vmatprep.subr.bf16.mxu0 0
        %396 = vmatpush1.bf16.msra.mxu0 %v380
        %397 = vmatprep.subr.bf16.mxu0 0
        %398 = vmatpush1.bf16.msra.mxu0 0
        %399 = vmatprep.subr.bf16.mxu0 0
        %400 = vmatpush1.bf16.msra.mxu0 0
        %401 = vmatprep.subr.bf16.mxu0 0
        %402 = vmatpush1.bf16.msra.mxu0 0
        %403 = vmatprep.subr.bf16.mxu0 0
        %404 = vmatpush1.bf16.msra.mxu0 0
        %405 = vmatprep.subr.bf16.mxu0 0
        %406 = vmatpush1.bf16.msra.mxu0 0
        %407 = vmatprep.subr.bf16.mxu0 0
        %408 = vmatpush1.bf16.msra.mxu0 0
        %409 = vmatprep.subr.bf16.mxu0 0
        %410 = vmatpush1.bf16.msra.mxu0 0
        %411 = vmatprep.subr.bf16.mxu0 0
        %412 = vmatpush1.bf16.msra.mxu0 0
        %413 = vmatprep.subr.bf16.mxu0 0
        %414 = vmatpush1.bf16.msra.mxu0 0
        %415 = vmatprep.subr.bf16.mxu0 0
        %416 = vmatpush1.bf16.msra.mxu0 0
        %417 = vmatprep.subr.bf16.mxu0 0
        %418 = vmatpush1.bf16.msra.mxu0 0
        %419 = vmatprep.subr.bf16.mxu0 0
        %420 = vmatpush1.bf16.msra.mxu0 0
        %421 = vmatprep.mubr.bf16.mxu0 0
        %422 = vmatmul.mubr.bf16.gmra.mrb[0].mxu0 %v387
        %v423 = vpop.f32.mrb[0].mxu0
        %v424 = vadd.f32 0.0, %v423
        %v425 = vpop.f32.mrb[0].mxu0
        %v426 = vpop.f32.mrb[0].mxu0
        %v427 = vadd.f32 0.0, %v426
        %v428 = vpop.f32.mrb[0].mxu0
        %429 = vdwg.mxu0
        %v431 = vlaneseq
        %v432 = vshrl.u32 %v431, 7
        %v433 = vsub.s32 0, %v432
        %v434 = vrot.slane %v346, %v433
        %v436 = vadd.f32 %v424, %v434
        %v437 = vadd.f32 %v427, %v434
        %v438 = vmax.f32 %v436, 0.0
        %v439 = vmax.f32 %v437, 0.0
        %vm440 = vcmp.ne.f32.partialorder %v436, %v436
        %vm441 = vcmp.ne.f32.partialorder %v437, %v437
        %v442 = vadd.f32 %v436, 0.0
        %v443 = vadd.f32 %v437, 0.0
        %v444 = vand.u32 2147483647, %v436
        %v445 = vand.u32 2147483647, %v437
        %v446 = vsub.f32 0.0, %v444
        %v447 = vsub.f32 0.0, %v445
        %v448 = vmul.f32 %v446, 1.442695
        %v449 = vpow.pop %v448
        %v450 = vmul.f32 %v447, 1.442695
        %v451 = vpow.pop %v450
        %v452 = vadd.f32 %v449, 1.0
        %v453 = vlog2.pop %v452
        %v454 = vmul.f32 %v453, 0.6931472
        %v455 = vmul.f32 -0.5, %v449
        %v456 = vadd.f32 %v455, 1.0
        %v457 = vmul.f32 %v456, %v449
        %v458 = vand.u32 2147483647, %v449
        %vm459 = vcmp.lt.f32.partialorder %v458, 0.0004427343
        %v460 = vsel %vm459, %v457, %v454
        %v461 = vadd.f32 %v451, 1.0
        %v462 = vlog2.pop %v461
        %v463 = vmul.f32 %v462, 0.6931472
        %v464 = vmul.f32 -0.5, %v451
        %v465 = vadd.f32 %v464, 1.0
        %v466 = vmul.f32 %v465, %v451
        %v467 = vand.u32 2147483647, %v451
        %vm468 = vcmp.lt.f32.partialorder %v467, 0.0004427343
        %v469 = vsel %vm468, %v466, %v463
        %v470 = vadd.f32 %v438, %v460
        %v471 = vadd.f32 %v439, %v469
        %v472 = vsel %vm440, %v442, %v470
        %v473 = vsel %vm441, %v443, %v471
        %v474 = vlaneseq
        %v475 = vshrl.u32 %v474, 7
        %v476 = vsub.s32 0, %v475
        %v477 = vrot.slane %v424, %v476
        %s479 = sor.u32 256, 64
        %480 = vbcast.lane.b32.xlu0 %v477, %s479
        %v481 = vpop.permute.xlu0 %480
        %s483 = sor.u32 256, 72
        %484 = vbcast.lane.b32.xlu0 %v477, %s483
        %v485 = vpop.permute.xlu0 %484
        %v486 = vlaneseq
        %v487 = vshrl.u32 %v486, 7
        %v488 = vsub.s32 1, %v487
        %v489 = vrot.slane %v424, %v488
        %s491 = sor.u32 256, 64
        %492 = vbcast.lane.b32.xlu0 %v489, %s491
        %v493 = vpop.permute.xlu0 %492
        %s495 = sor.u32 256, 72
        %496 = vbcast.lane.b32.xlu0 %v489, %s495
        %v497 = vpop.permute.xlu0 %496
        %v498 = vlaneseq
        %v499 = vshrl.u32 %v498, 7
        %v500 = vsub.s32 2, %v499
        %v501 = vrot.slane %v424, %v500
        %s503 = sor.u32 256, 64
        %504 = vbcast.lane.b32.xlu0 %v501, %s503
        %v505 = vpop.permute.xlu0 %504
        %s507 = sor.u32 256, 72
        %508 = vbcast.lane.b32.xlu0 %v501, %s507
        %v509 = vpop.permute.xlu0 %508
        %v510 = vlaneseq
        %v511 = vshrl.u32 %v510, 7
        %v512 = vsub.s32 3, %v511
        %v513 = vrot.slane %v424, %v512
        %s515 = sor.u32 256, 64
        %516 = vbcast.lane.b32.xlu0 %v513, %s515
        %v517 = vpop.permute.xlu0 %516
        %s519 = sor.u32 256, 72
        %520 = vbcast.lane.b32.xlu0 %v513, %s519
        %v521 = vpop.permute.xlu0 %520
        %v522 = vlaneseq
        %v523 = vshrl.u32 %v522, 7
        %v524 = vsub.s32 4, %v523
        %v525 = vrot.slane %v424, %v524
        %s527 = sor.u32 256, 64
        %528 = vbcast.lane.b32.xlu0 %v525, %s527
        %v529 = vpop.permute.xlu0 %528
        %s531 = sor.u32 256, 72
        %532 = vbcast.lane.b32.xlu0 %v525, %s531
        %v533 = vpop.permute.xlu0 %532
        %v534 = vlaneseq
        %v535 = vshrl.u32 %v534, 7
        %v536 = vsub.s32 5, %v535
        %v537 = vrot.slane %v424, %v536
        %s539 = sor.u32 256, 64
        %540 = vbcast.lane.b32.xlu0 %v537, %s539
        %v541 = vpop.permute.xlu0 %540
        %s543 = sor.u32 256, 72
        %544 = vbcast.lane.b32.xlu0 %v537, %s543
        %v545 = vpop.permute.xlu0 %544
        %v546 = vlaneseq
        %v547 = vshrl.u32 %v546, 7
        %v548 = vsub.s32 6, %v547
        %v549 = vrot.slane %v424, %v548
        %s551 = sor.u32 256, 64
        %552 = vbcast.lane.b32.xlu0 %v549, %s551
        %v553 = vpop.permute.xlu0 %552
        %s555 = sor.u32 256, 72
        %556 = vbcast.lane.b32.xlu0 %v549, %s555
        %v557 = vpop.permute.xlu0 %556
        %v558 = vlaneseq
        %v559 = vshrl.u32 %v558, 7
        %v560 = vsub.s32 7, %v559
        %v561 = vrot.slane %v424, %v560
        %s563 = sor.u32 256, 64
        %564 = vbcast.lane.b32.xlu0 %v561, %s563
        %v565 = vpop.permute.xlu0 %564
        %s567 = sor.u32 256, 72
        %568 = vbcast.lane.b32.xlu0 %v561, %s567
        %v569 = vpop.permute.xlu0 %568
        %v570 = vlaneseq
        %v571 = vshrl.u32 %v570, 7
        %v572 = vsub.s32 0, %v571
        %v573 = vrot.slane %v427, %v572
        %s575 = sor.u32 256, 64
        %576 = vbcast.lane.b32.xlu0 %v573, %s575
        %v577 = vpop.permute.xlu0 %576
        %s579 = sor.u32 256, 72
        %580 = vbcast.lane.b32.xlu0 %v573, %s579
        %v581 = vpop.permute.xlu0 %580
        %v582 = vlaneseq
        %v583 = vshrl.u32 %v582, 7
        %v584 = vsub.s32 1, %v583
        %v585 = vrot.slane %v427, %v584
        %s587 = sor.u32 256, 64
        %588 = vbcast.lane.b32.xlu0 %v585, %s587
        %v589 = vpop.permute.xlu0 %588
        %s591 = sor.u32 256, 72
        %592 = vbcast.lane.b32.xlu0 %v585, %s591
        %v593 = vpop.permute.xlu0 %592
        %v594 = vlaneseq
        %v595 = vshrl.u32 %v594, 7
        %v596 = vsub.s32 2, %v595
        %v597 = vrot.slane %v427, %v596
        %s599 = sor.u32 256, 64
        %600 = vbcast.lane.b32.xlu0 %v597, %s599
        %v601 = vpop.permute.xlu0 %600
        %s603 = sor.u32 256, 72
        %604 = vbcast.lane.b32.xlu0 %v597, %s603
        %v605 = vpop.permute.xlu0 %604
        %v606 = vlaneseq
        %v607 = vshrl.u32 %v606, 7
        %v608 = vsub.s32 3, %v607
        %v609 = vrot.slane %v427, %v608
        %s611 = sor.u32 256, 64
        %612 = vbcast.lane.b32.xlu0 %v609, %s611
        %v613 = vpop.permute.xlu0 %612
        %s615 = sor.u32 256, 72
        %616 = vbcast.lane.b32.xlu0 %v609, %s615
        %v617 = vpop.permute.xlu0 %616
        %v618 = vlaneseq
        %v619 = vshrl.u32 %v618, 7
        %v620 = vsub.s32 4, %v619
        %v621 = vrot.slane %v427, %v620
        %s623 = sor.u32 256, 64
        %624 = vbcast.lane.b32.xlu0 %v621, %s623
        %v625 = vpop.permute.xlu0 %624
        %s627 = sor.u32 256, 72
        %628 = vbcast.lane.b32.xlu0 %v621, %s627
        %v629 = vpop.permute.xlu0 %628
        %v630 = vlaneseq
        %v631 = vshrl.u32 %v630, 7
        %v632 = vsub.s32 5, %v631
        %v633 = vrot.slane %v427, %v632
        %s635 = sor.u32 256, 64
        %636 = vbcast.lane.b32.xlu0 %v633, %s635
        %v637 = vpop.permute.xlu0 %636
        %s639 = sor.u32 256, 72
        %640 = vbcast.lane.b32.xlu0 %v633, %s639
        %v641 = vpop.permute.xlu0 %640
        %v642 = vlaneseq
        %v643 = vshrl.u32 %v642, 7
        %v644 = vsub.s32 6, %v643
        %v645 = vrot.slane %v427, %v644
        %s647 = sor.u32 256, 64
        %648 = vbcast.lane.b32.xlu0 %v645, %s647
        %v649 = vpop.permute.xlu0 %648
        %s651 = sor.u32 256, 72
        %652 = vbcast.lane.b32.xlu0 %v645, %s651
        %v653 = vpop.permute.xlu0 %652
        %v654 = vlaneseq
        %v655 = vshrl.u32 %v654, 7
        %v656 = vsub.s32 7, %v655
        %v657 = vrot.slane %v427, %v656
        %s659 = sor.u32 256, 64
        %660 = vbcast.lane.b32.xlu0 %v657, %s659
        %v661 = vpop.permute.xlu0 %660
        %s663 = sor.u32 256, 72
        %664 = vbcast.lane.b32.xlu0 %v657, %s663
        %v665 = vpop.permute.xlu0 %664
        %s667 = sor.u32 256, 80
        %668 = vbcast.lane.b32.xlu0 %v477, %s667
        %v669 = vpop.permute.xlu0 %668
        %s671 = sor.u32 256, 88
        %672 = vbcast.lane.b32.xlu0 %v477, %s671
        %v673 = vpop.permute.xlu0 %672
        %s675 = sor.u32 256, 80
        %676 = vbcast.lane.b32.xlu0 %v489, %s675
        %v677 = vpop.permute.xlu0 %676
        %s679 = sor.u32 256, 88
        %680 = vbcast.lane.b32.xlu0 %v489, %s679
        %v681 = vpop.permute.xlu0 %680
        %s683 = sor.u32 256, 80
        %684 = vbcast.lane.b32.xlu0 %v501, %s683
        %v685 = vpop.permute.xlu0 %684
        %s687 = sor.u32 256, 88
        %688 = vbcast.lane.b32.xlu0 %v501, %s687
        %v689 = vpop.permute.xlu0 %688
        %s691 = sor.u32 256, 80
        %692 = vbcast.lane.b32.xlu0 %v513, %s691
        %v693 = vpop.permute.xlu0 %692
        %s695 = sor.u32 256, 88
        %696 = vbcast.lane.b32.xlu0 %v513, %s695
        %v697 = vpop.permute.xlu0 %696
        %s699 = sor.u32 256, 80
        %700 = vbcast.lane.b32.xlu0 %v525, %s699
        %v701 = vpop.permute.xlu0 %700
        %s703 = sor.u32 256, 88
        %704 = vbcast.lane.b32.xlu0 %v525, %s703
        %v705 = vpop.permute.xlu0 %704
        %s707 = sor.u32 256, 80
        %708 = vbcast.lane.b32.xlu0 %v537, %s707
        %v709 = vpop.permute.xlu0 %708
        %s711 = sor.u32 256, 88
        %712 = vbcast.lane.b32.xlu0 %v537, %s711
        %v713 = vpop.permute.xlu0 %712
        %s715 = sor.u32 256, 80
        %716 = vbcast.lane.b32.xlu0 %v549, %s715
        %v717 = vpop.permute.xlu0 %716
        %s719 = sor.u32 256, 88
        %720 = vbcast.lane.b32.xlu0 %v549, %s719
        %v721 = vpop.permute.xlu0 %720
        %s723 = sor.u32 256, 80
        %724 = vbcast.lane.b32.xlu0 %v561, %s723
        %v725 = vpop.permute.xlu0 %724
        %s727 = sor.u32 256, 88
        %728 = vbcast.lane.b32.xlu0 %v561, %s727
        %v729 = vpop.permute.xlu0 %728
        %s731 = sor.u32 256, 80
        %732 = vbcast.lane.b32.xlu0 %v573, %s731
        %v733 = vpop.permute.xlu0 %732
        %s735 = sor.u32 256, 88
        %736 = vbcast.lane.b32.xlu0 %v573, %s735
        %v737 = vpop.permute.xlu0 %736
        %s739 = sor.u32 256, 80
        %740 = vbcast.lane.b32.xlu0 %v585, %s739
        %v741 = vpop.permute.xlu0 %740
        %s743 = sor.u32 256, 88
        %744 = vbcast.lane.b32.xlu0 %v585, %s743
        %v745 = vpop.permute.xlu0 %744
        %s747 = sor.u32 256, 80
        %748 = vbcast.lane.b32.xlu0 %v597, %s747
        %v749 = vpop.permute.xlu0 %748
        %s751 = sor.u32 256, 88
        %752 = vbcast.lane.b32.xlu0 %v597, %s751
        %v753 = vpop.permute.xlu0 %752
        %s755 = sor.u32 256, 80
        %756 = vbcast.lane.b32.xlu0 %v609, %s755
        %v757 = vpop.permute.xlu0 %756
        %s759 = sor.u32 256, 88
        %760 = vbcast.lane.b32.xlu0 %v609, %s759
        %v761 = vpop.permute.xlu0 %760
        %s763 = sor.u32 256, 80
        %764 = vbcast.lane.b32.xlu0 %v621, %s763
        %v765 = vpop.permute.xlu0 %764
        %s767 = sor.u32 256, 88
        %768 = vbcast.lane.b32.xlu0 %v621, %s767
        %v769 = vpop.permute.xlu0 %768
        %s771 = sor.u32 256, 80
        %772 = vbcast.lane.b32.xlu0 %v633, %s771
        %v773 = vpop.permute.xlu0 %772
        %s775 = sor.u32 256, 88
        %776 = vbcast.lane.b32.xlu0 %v633, %s775
        %v777 = vpop.permute.xlu0 %776
        %s779 = sor.u32 256, 80
        %780 = vbcast.lane.b32.xlu0 %v645, %s779
        %v781 = vpop.permute.xlu0 %780
        %s783 = sor.u32 256, 88
        %784 = vbcast.lane.b32.xlu0 %v645, %s783
        %v785 = vpop.permute.xlu0 %784
        %s787 = sor.u32 256, 80
        %788 = vbcast.lane.b32.xlu0 %v657, %s787
        %v789 = vpop.permute.xlu0 %788
        %s791 = sor.u32 256, 88
        %792 = vbcast.lane.b32.xlu0 %v657, %s791
        %v793 = vpop.permute.xlu0 %792
        %v794 = vlaneseq
        %v795 = vshrl.u32 %v794, 7
        %v796 = vsub.s32 0, %v795
        %v797 = vrot.slane %v472, %v796
        %v798 = vmul.f32 %v797, %v344
        %v799 = vmul.f32 %v797, %v345
        %v800 = vmul.f32 %v798, 1.442695
        %v801 = vpow.pop %v800
        %v802 = vmul.f32 %v799, 1.442695
        %v803 = vpow.pop %v802
        %v804 = vmul.f32 %v472, %v358
        %v805 = vlaneseq
        %v806 = vshrl.u32 %v805, 7
        %v807 = vsub.s32 0, %v806
        %v808 = vrot.slane %v804, %v807
        %v809 = vmul.f32 %v808, %v481
        %v810 = vmul.f32 %v808, %v485
        %v811 = vmul.f32 %v801, %v354
        %v812 = vmul.f32 %v803, %v355
        %v813 = vadd.f32 %v811, %v809
        %v814 = vadd.f32 %v812, %v810
        %v815 = vmul.f32 %v813, %v669
        %v816 = vmul.f32 %v814, %v673
        %v817 = vsel %vm385, %v815, 0.0
        %v818 = vsel %vm385, %v816, 0.0
        %v819 = vadd.f32 %v817, %v818
        %v820 = vrot.slane %v819, 4
        %v821 = vadd.f32 %v819, %v820
        %v822 = vrot.slane %v821, 2
        %v823 = vadd.f32 %v821, %v822
        %v824 = vrot.slane %v823, 1
        %v825 = vadd.f32 %v823, %v824
        %v826 = vlaneseq
        %v827 = vshrl.u32 %v826, 7
        %v828 = vsub.s32 1, %v827
        %v829 = vrot.slane %v472, %v828
        %v830 = vmul.f32 %v829, %v344
        %v831 = vmul.f32 %v829, %v345
        %v832 = vmul.f32 %v830, 1.442695
        %v833 = vpow.pop %v832
        %v834 = vmul.f32 %v831, 1.442695
        %v835 = vpow.pop %v834
        %v836 = vlaneseq
        %v837 = vshrl.u32 %v836, 7
        %v838 = vsub.s32 1, %v837
        %v839 = vrot.slane %v804, %v838
        %v840 = vmul.f32 %v839, %v493
        %v841 = vmul.f32 %v839, %v497
        %v842 = vmul.f32 %v833, %v813
        %v843 = vmul.f32 %v835, %v814
        %v844 = vadd.f32 %v842, %v840
        %v845 = vadd.f32 %v843, %v841
        %v846 = vmul.f32 %v844, %v677
        %v847 = vmul.f32 %v845, %v681
        %v848 = vsel %vm385, %v846, 0.0
        %v849 = vsel %vm385, %v847, 0.0
        %v850 = vadd.f32 %v848, %v849
        %v851 = vrot.slane %v850, 4
        %v852 = vadd.f32 %v850, %v851
        %v853 = vrot.slane %v852, 2
        %v854 = vadd.f32 %v852, %v853
        %v855 = vrot.slane %v854, 1
        %v856 = vadd.f32 %v854, %v855
        %v857 = vlaneseq
        %v858 = vshrl.u32 %v857, 7
        %v859 = vsub.s32 2, %v858
        %v860 = vrot.slane %v472, %v859
        %v861 = vmul.f32 %v860, %v344
        %v862 = vmul.f32 %v860, %v345
        %v863 = vmul.f32 %v861, 1.442695
        %v864 = vpow.pop %v863
        %v865 = vmul.f32 %v862, 1.442695
        %v866 = vpow.pop %v865
        %v867 = vlaneseq
        %v868 = vshrl.u32 %v867, 7
        %v869 = vsub.s32 2, %v868
        %v870 = vrot.slane %v804, %v869
        %v871 = vmul.f32 %v870, %v505
        %v872 = vmul.f32 %v870, %v509
        %v873 = vmul.f32 %v864, %v844
        %v874 = vmul.f32 %v866, %v845
        %v875 = vadd.f32 %v873, %v871
        %v876 = vadd.f32 %v874, %v872
        %v877 = vmul.f32 %v875, %v685
        %v878 = vmul.f32 %v876, %v689
        %v879 = vsel %vm385, %v877, 0.0
        %v880 = vsel %vm385, %v878, 0.0
        %v881 = vadd.f32 %v879, %v880
        %v882 = vrot.slane %v881, 4
        %v883 = vadd.f32 %v881, %v882
        %v884 = vrot.slane %v883, 2
        %v885 = vadd.f32 %v883, %v884
        %v886 = vrot.slane %v885, 1
        %v887 = vadd.f32 %v885, %v886
        %v888 = vlaneseq
        %v889 = vshrl.u32 %v888, 7
        %v890 = vsub.s32 3, %v889
        %v891 = vrot.slane %v472, %v890
        %v892 = vmul.f32 %v891, %v344
        %v893 = vmul.f32 %v891, %v345
        %v894 = vmul.f32 %v892, 1.442695
        %v895 = vpow.pop %v894
        %v896 = vmul.f32 %v893, 1.442695
        %v897 = vpow.pop %v896
        %v898 = vlaneseq
        %v899 = vshrl.u32 %v898, 7
        %v900 = vsub.s32 3, %v899
        %v901 = vrot.slane %v804, %v900
        %v902 = vmul.f32 %v901, %v517
        %v903 = vmul.f32 %v901, %v521
        %v904 = vmul.f32 %v895, %v875
        %v905 = vmul.f32 %v897, %v876
        %v906 = vadd.f32 %v904, %v902
        %v907 = vadd.f32 %v905, %v903
        %v908 = vmul.f32 %v906, %v693
        %v909 = vmul.f32 %v907, %v697
        %v910 = vsel %vm385, %v908, 0.0
        %v911 = vsel %vm385, %v909, 0.0
        %v912 = vadd.f32 %v910, %v911
        %v913 = vrot.slane %v912, 4
        %v914 = vadd.f32 %v912, %v913
        %v915 = vrot.slane %v914, 2
        %v916 = vadd.f32 %v914, %v915
        %v917 = vrot.slane %v916, 1
        %v918 = vadd.f32 %v916, %v917
        %v919 = vlaneseq
        %v920 = vshrl.u32 %v919, 7
        %v921 = vsub.s32 4, %v920
        %v922 = vrot.slane %v472, %v921
        %v923 = vmul.f32 %v922, %v344
        %v924 = vmul.f32 %v922, %v345
        %v925 = vmul.f32 %v923, 1.442695
        %v926 = vpow.pop %v925
        %v927 = vmul.f32 %v924, 1.442695
        %v928 = vpow.pop %v927
        %v929 = vlaneseq
        %v930 = vshrl.u32 %v929, 7
        %v931 = vsub.s32 4, %v930
        %v932 = vrot.slane %v804, %v931
        %v933 = vmul.f32 %v932, %v529
        %v934 = vmul.f32 %v932, %v533
        %v935 = vmul.f32 %v926, %v906
        %v936 = vmul.f32 %v928, %v907
        %v937 = vadd.f32 %v935, %v933
        %v938 = vadd.f32 %v936, %v934
        %v939 = vmul.f32 %v937, %v701
        %v940 = vmul.f32 %v938, %v705
        %v941 = vsel %vm385, %v939, 0.0
        %v942 = vsel %vm385, %v940, 0.0
        %v943 = vadd.f32 %v941, %v942
        %v944 = vrot.slane %v943, 4
        %v945 = vadd.f32 %v943, %v944
        %v946 = vrot.slane %v945, 2
        %v947 = vadd.f32 %v945, %v946
        %v948 = vrot.slane %v947, 1
        %v949 = vadd.f32 %v947, %v948
        %v950 = vlaneseq
        %v951 = vshrl.u32 %v950, 7
        %v952 = vsub.s32 5, %v951
        %v953 = vrot.slane %v472, %v952
        %v954 = vmul.f32 %v953, %v344
        %v955 = vmul.f32 %v953, %v345
        %v956 = vmul.f32 %v954, 1.442695
        %v957 = vpow.pop %v956
        %v958 = vmul.f32 %v955, 1.442695
        %v959 = vpow.pop %v958
        %v960 = vlaneseq
        %v961 = vshrl.u32 %v960, 7
        %v962 = vsub.s32 5, %v961
        %v963 = vrot.slane %v804, %v962
        %v964 = vmul.f32 %v963, %v541
        %v965 = vmul.f32 %v963, %v545
        %v966 = vmul.f32 %v957, %v937
        %v967 = vmul.f32 %v959, %v938
        %v968 = vadd.f32 %v966, %v964
        %v969 = vadd.f32 %v967, %v965
        %v970 = vmul.f32 %v968, %v709
        %v971 = vmul.f32 %v969, %v713
        %v972 = vsel %vm385, %v970, 0.0
        %v973 = vsel %vm385, %v971, 0.0
        %v974 = vadd.f32 %v972, %v973
        %v975 = vrot.slane %v974, 4
        %v976 = vadd.f32 %v974, %v975
        %v977 = vrot.slane %v976, 2
        %v978 = vadd.f32 %v976, %v977
        %v979 = vrot.slane %v978, 1
        %v980 = vadd.f32 %v978, %v979
        %v981 = vlaneseq
        %v982 = vshrl.u32 %v981, 7
        %v983 = vsub.s32 6, %v982
        %v984 = vrot.slane %v472, %v983
        %v985 = vmul.f32 %v984, %v344
        %v986 = vmul.f32 %v984, %v345
        %v987 = vmul.f32 %v985, 1.442695
        %v988 = vpow.pop %v987
        %v989 = vmul.f32 %v986, 1.442695
        %v990 = vpow.pop %v989
        %v991 = vlaneseq
        %v992 = vshrl.u32 %v991, 7
        %v993 = vsub.s32 6, %v992
        %v994 = vrot.slane %v804, %v993
        %v995 = vmul.f32 %v994, %v553
        %v996 = vmul.f32 %v994, %v557
        %v997 = vmul.f32 %v988, %v968
        %v998 = vmul.f32 %v990, %v969
        %v999 = vadd.f32 %v997, %v995
        %v1000 = vadd.f32 %v998, %v996
        %v1001 = vmul.f32 %v999, %v717
        %v1002 = vmul.f32 %v1000, %v721
        %v1003 = vsel %vm385, %v1001, 0.0
        %v1004 = vsel %vm385, %v1002, 0.0
        %v1005 = vadd.f32 %v1003, %v1004
        %v1006 = vrot.slane %v1005, 4
        %v1007 = vadd.f32 %v1005, %v1006
        %v1008 = vrot.slane %v1007, 2
        %v1009 = vadd.f32 %v1007, %v1008
        %v1010 = vrot.slane %v1009, 1
        %v1011 = vadd.f32 %v1009, %v1010
        %v1012 = vlaneseq
        %v1013 = vshrl.u32 %v1012, 7
        %v1014 = vsub.s32 7, %v1013
        %v1015 = vrot.slane %v472, %v1014
        %v1016 = vmul.f32 %v1015, %v344
        %v1017 = vmul.f32 %v1015, %v345
        %v1018 = vmul.f32 %v1016, 1.442695
        %v1019 = vpow.pop %v1018
        %v1020 = vmul.f32 %v1017, 1.442695
        %v1021 = vpow.pop %v1020
        %v1022 = vlaneseq
        %v1023 = vshrl.u32 %v1022, 7
        %v1024 = vsub.s32 7, %v1023
        %v1025 = vrot.slane %v804, %v1024
        %v1026 = vmul.f32 %v1025, %v565
        %v1027 = vmul.f32 %v1025, %v569
        %v1028 = vmul.f32 %v1019, %v999
        %v1029 = vmul.f32 %v1021, %v1000
        %v1030 = vadd.f32 %v1028, %v1026
        %v1031 = vadd.f32 %v1029, %v1027
        %v1032 = vmul.f32 %v1030, %v725
        %v1033 = vmul.f32 %v1031, %v729
        %v1034 = vsel %vm385, %v1032, 0.0
        %v1035 = vsel %vm385, %v1033, 0.0
        %v1036 = vadd.f32 %v1034, %v1035
        %v1037 = vrot.slane %v1036, 4
        %v1038 = vadd.f32 %v1036, %v1037
        %v1039 = vrot.slane %v1038, 2
        %v1040 = vadd.f32 %v1038, %v1039
        %v1041 = vrot.slane %v1040, 1
        %v1042 = vadd.f32 %v1040, %v1041
        %v1043 = vlaneseq
        %v1044 = vshrl.u32 %v1043, 7
        %v1045 = vsub.s32 0, %v1044
        %v1046 = vrot.slane %v473, %v1045
        %v1047 = vmul.f32 %v1046, %v344
        %v1048 = vmul.f32 %v1046, %v345
        %v1049 = vmul.f32 %v1047, 1.442695
        %v1050 = vpow.pop %v1049
        %v1051 = vmul.f32 %v1048, 1.442695
        %v1052 = vpow.pop %v1051
        %v1053 = vmul.f32 %v473, %v359
        %v1054 = vlaneseq
        %v1055 = vshrl.u32 %v1054, 7
        %v1056 = vsub.s32 0, %v1055
        %v1057 = vrot.slane %v1053, %v1056
        %v1058 = vmul.f32 %v1057, %v577
        %v1059 = vmul.f32 %v1057, %v581
        %v1060 = vmul.f32 %v1050, %v1030
        %v1061 = vmul.f32 %v1052, %v1031
        %v1062 = vadd.f32 %v1060, %v1058
        %v1063 = vadd.f32 %v1061, %v1059
        %v1064 = vmul.f32 %v1062, %v733
        %v1065 = vmul.f32 %v1063, %v737
        %v1066 = vsel %vm385, %v1064, 0.0
        %v1067 = vsel %vm385, %v1065, 0.0
        %v1068 = vadd.f32 %v1066, %v1067
        %v1069 = vrot.slane %v1068, 4
        %v1070 = vadd.f32 %v1068, %v1069
        %v1071 = vrot.slane %v1070, 2
        %v1072 = vadd.f32 %v1070, %v1071
        %v1073 = vrot.slane %v1072, 1
        %v1074 = vadd.f32 %v1072, %v1073
        %v1075 = vlaneseq
        %v1076 = vshrl.u32 %v1075, 7
        %v1077 = vsub.s32 1, %v1076
        %v1078 = vrot.slane %v473, %v1077
        %v1079 = vmul.f32 %v1078, %v344
        %v1080 = vmul.f32 %v1078, %v345
        %v1081 = vmul.f32 %v1079, 1.442695
        %v1082 = vpow.pop %v1081
        %v1083 = vmul.f32 %v1080, 1.442695
        %v1084 = vpow.pop %v1083
        %v1085 = vlaneseq
        %v1086 = vshrl.u32 %v1085, 7
        %v1087 = vsub.s32 1, %v1086
        %v1088 = vrot.slane %v1053, %v1087
        %v1089 = vmul.f32 %v1088, %v589
        %v1090 = vmul.f32 %v1088, %v593
        %v1091 = vmul.f32 %v1082, %v1062
        %v1092 = vmul.f32 %v1084, %v1063
        %v1093 = vadd.f32 %v1091, %v1089
        %v1094 = vadd.f32 %v1092, %v1090
        %v1095 = vmul.f32 %v1093, %v741
        %v1096 = vmul.f32 %v1094, %v745
        %v1097 = vsel %vm385, %v1095, 0.0
        %v1098 = vsel %vm385, %v1096, 0.0
        %v1099 = vadd.f32 %v1097, %v1098
        %v1100 = vrot.slane %v1099, 4
        %v1101 = vadd.f32 %v1099, %v1100
        %v1102 = vrot.slane %v1101, 2
        %v1103 = vadd.f32 %v1101, %v1102
        %v1104 = vrot.slane %v1103, 1
        %v1105 = vadd.f32 %v1103, %v1104
        %v1106 = vlaneseq
        %v1107 = vshrl.u32 %v1106, 7
        %v1108 = vsub.s32 2, %v1107
        %v1109 = vrot.slane %v473, %v1108
        %v1110 = vmul.f32 %v1109, %v344
        %v1111 = vmul.f32 %v1109, %v345
        %v1112 = vmul.f32 %v1110, 1.442695
        %v1113 = vpow.pop %v1112
        %v1114 = vmul.f32 %v1111, 1.442695
        %v1115 = vpow.pop %v1114
        %v1116 = vlaneseq
        %v1117 = vshrl.u32 %v1116, 7
        %v1118 = vsub.s32 2, %v1117
        %v1119 = vrot.slane %v1053, %v1118
        %v1120 = vmul.f32 %v1119, %v601
        %v1121 = vmul.f32 %v1119, %v605
        %v1122 = vmul.f32 %v1113, %v1093
        %v1123 = vmul.f32 %v1115, %v1094
        %v1124 = vadd.f32 %v1122, %v1120
        %v1125 = vadd.f32 %v1123, %v1121
        %v1126 = vmul.f32 %v1124, %v749
        %v1127 = vmul.f32 %v1125, %v753
        %v1128 = vsel %vm385, %v1126, 0.0
        %v1129 = vsel %vm385, %v1127, 0.0
        %v1130 = vadd.f32 %v1128, %v1129
        %v1131 = vrot.slane %v1130, 4
        %v1132 = vadd.f32 %v1130, %v1131
        %v1133 = vrot.slane %v1132, 2
        %v1134 = vadd.f32 %v1132, %v1133
        %v1135 = vrot.slane %v1134, 1
        %v1136 = vadd.f32 %v1134, %v1135
        %v1137 = vlaneseq
        %v1138 = vshrl.u32 %v1137, 7
        %v1139 = vsub.s32 3, %v1138
        %v1140 = vrot.slane %v473, %v1139
        %v1141 = vmul.f32 %v1140, %v344
        %v1142 = vmul.f32 %v1140, %v345
        %v1143 = vmul.f32 %v1141, 1.442695
        %v1144 = vpow.pop %v1143
        %v1145 = vmul.f32 %v1142, 1.442695
        %v1146 = vpow.pop %v1145
        %v1147 = vlaneseq
        %v1148 = vshrl.u32 %v1147, 7
        %v1149 = vsub.s32 3, %v1148
        %v1150 = vrot.slane %v1053, %v1149
        %v1151 = vmul.f32 %v1150, %v613
        %v1152 = vmul.f32 %v1150, %v617
        %v1153 = vmul.f32 %v1144, %v1124
        %v1154 = vmul.f32 %v1146, %v1125
        %v1155 = vadd.f32 %v1153, %v1151
        %v1156 = vadd.f32 %v1154, %v1152
        %v1157 = vmul.f32 %v1155, %v757
        %v1158 = vmul.f32 %v1156, %v761
        %v1159 = vsel %vm385, %v1157, 0.0
        %v1160 = vsel %vm385, %v1158, 0.0
        %v1161 = vadd.f32 %v1159, %v1160
        %v1162 = vrot.slane %v1161, 4
        %v1163 = vadd.f32 %v1161, %v1162
        %v1164 = vrot.slane %v1163, 2
        %v1165 = vadd.f32 %v1163, %v1164
        %v1166 = vrot.slane %v1165, 1
        %v1167 = vadd.f32 %v1165, %v1166
        %v1168 = vlaneseq
        %v1169 = vshrl.u32 %v1168, 7
        %v1170 = vsub.s32 4, %v1169
        %v1171 = vrot.slane %v473, %v1170
        %v1172 = vmul.f32 %v1171, %v344
        %v1173 = vmul.f32 %v1171, %v345
        %v1174 = vmul.f32 %v1172, 1.442695
        %v1175 = vpow.pop %v1174
        %v1176 = vmul.f32 %v1173, 1.442695
        %v1177 = vpow.pop %v1176
        %v1178 = vlaneseq
        %v1179 = vshrl.u32 %v1178, 7
        %v1180 = vsub.s32 4, %v1179
        %v1181 = vrot.slane %v1053, %v1180
        %v1182 = vmul.f32 %v1181, %v625
        %v1183 = vmul.f32 %v1181, %v629
        %v1184 = vmul.f32 %v1175, %v1155
        %v1185 = vmul.f32 %v1177, %v1156
        %v1186 = vadd.f32 %v1184, %v1182
        %v1187 = vadd.f32 %v1185, %v1183
        %v1188 = vmul.f32 %v1186, %v765
        %v1189 = vmul.f32 %v1187, %v769
        %v1190 = vsel %vm385, %v1188, 0.0
        %v1191 = vsel %vm385, %v1189, 0.0
        %v1192 = vadd.f32 %v1190, %v1191
        %v1193 = vrot.slane %v1192, 4
        %v1194 = vadd.f32 %v1192, %v1193
        %v1195 = vrot.slane %v1194, 2
        %v1196 = vadd.f32 %v1194, %v1195
        %v1197 = vrot.slane %v1196, 1
        %v1198 = vadd.f32 %v1196, %v1197
        %v1199 = vlaneseq
        %v1200 = vshrl.u32 %v1199, 7
        %v1201 = vsub.s32 5, %v1200
        %v1202 = vrot.slane %v473, %v1201
        %v1203 = vmul.f32 %v1202, %v344
        %v1204 = vmul.f32 %v1202, %v345
        %v1205 = vmul.f32 %v1203, 1.442695
        %v1206 = vpow.pop %v1205
        %v1207 = vmul.f32 %v1204, 1.442695
        %v1208 = vpow.pop %v1207
        %v1209 = vlaneseq
        %v1210 = vshrl.u32 %v1209, 7
        %v1211 = vsub.s32 5, %v1210
        %v1212 = vrot.slane %v1053, %v1211
        %v1213 = vmul.f32 %v1212, %v637
        %v1214 = vmul.f32 %v1212, %v641
        %v1215 = vmul.f32 %v1206, %v1186
        %v1216 = vmul.f32 %v1208, %v1187
        %v1217 = vadd.f32 %v1215, %v1213
        %v1218 = vadd.f32 %v1216, %v1214
        %v1219 = vmul.f32 %v1217, %v773
        %v1220 = vmul.f32 %v1218, %v777
        %v1221 = vsel %vm385, %v1219, 0.0
        %v1222 = vsel %vm385, %v1220, 0.0
        %v1223 = vadd.f32 %v1221, %v1222
        %v1224 = vrot.slane %v1223, 4
        %v1225 = vadd.f32 %v1223, %v1224
        %v1226 = vrot.slane %v1225, 2
        %v1227 = vadd.f32 %v1225, %v1226
        %v1228 = vrot.slane %v1227, 1
        %v1229 = vadd.f32 %v1227, %v1228
        %v1230 = vlaneseq
        %v1231 = vshrl.u32 %v1230, 7
        %v1232 = vsub.s32 6, %v1231
        %v1233 = vrot.slane %v473, %v1232
        %v1234 = vmul.f32 %v1233, %v344
        %v1235 = vmul.f32 %v1233, %v345
        %v1236 = vmul.f32 %v1234, 1.442695
        %v1237 = vpow.pop %v1236
        %v1238 = vmul.f32 %v1235, 1.442695
        %v1239 = vpow.pop %v1238
        %v1240 = vlaneseq
        %v1241 = vshrl.u32 %v1240, 7
        %v1242 = vsub.s32 6, %v1241
        %v1243 = vrot.slane %v1053, %v1242
        %v1244 = vmul.f32 %v1243, %v649
        %v1245 = vmul.f32 %v1243, %v653
        %v1246 = vmul.f32 %v1237, %v1217
        %v1247 = vmul.f32 %v1239, %v1218
        %v1248 = vadd.f32 %v1246, %v1244
        %v1249 = vadd.f32 %v1247, %v1245
        %v1250 = vmul.f32 %v1248, %v781
        %v1251 = vmul.f32 %v1249, %v785
        %v1252 = vsel %vm385, %v1250, 0.0
        %v1253 = vsel %vm385, %v1251, 0.0
        %v1254 = vadd.f32 %v1252, %v1253
        %v1255 = vrot.slane %v1254, 4
        %v1256 = vadd.f32 %v1254, %v1255
        %v1257 = vrot.slane %v1256, 2
        %v1258 = vadd.f32 %v1256, %v1257
        %v1259 = vrot.slane %v1258, 1
        %v1260 = vadd.f32 %v1258, %v1259
        %v1261 = vlaneseq
        %v1262 = vshrl.u32 %v1261, 7
        %v1263 = vsub.s32 7, %v1262
        %v1264 = vrot.slane %v473, %v1263
        %v1265 = vmul.f32 %v1264, %v344
        %v1266 = vmul.f32 %v1264, %v345
        %v1267 = vmul.f32 %v1265, 1.442695
        %v1268 = vpow.pop %v1267
        %v1269 = vmul.f32 %v1266, 1.442695
        %v1270 = vpow.pop %v1269
        %v1271 = vlaneseq
        %v1272 = vshrl.u32 %v1271, 7
        %v1273 = vsub.s32 7, %v1272
        %v1274 = vrot.slane %v1053, %v1273
        %v1275 = vmul.f32 %v1274, %v661
        %v1276 = vmul.f32 %v1274, %v665
        %v1277 = vmul.f32 %v1268, %v1248
        %v1278 = vmul.f32 %v1270, %v1249
        %v1279 = vadd.f32 %v1277, %v1275
        %v1280 = vadd.f32 %v1278, %v1276
        %v1281 = vmul.f32 %v1279, %v789
        %v1282 = vmul.f32 %v1280, %v793
        %v1283 = vsel %vm385, %v1281, 0.0
        %v1284 = vsel %vm385, %v1282, 0.0
        %v1285 = vadd.f32 %v1283, %v1284
        %v1286 = vrot.slane %v1285, 4
        %v1287 = vadd.f32 %v1285, %v1286
        %v1288 = vrot.slane %v1287, 2
        %v1289 = vadd.f32 %v1287, %v1288
        %v1290 = vrot.slane %v1289, 1
        %v1291 = vadd.f32 %v1289, %v1290
        %vm1292 = vcmask 1040384
        %v1293 = vsel %vm1292, %v825, %v856
        %vm1294 = vcmask 1041408
        %v1295 = vsel %vm1294, %v1293, %v887
        %vm1296 = vcmask 1042432
        %v1297 = vsel %vm1296, %v1295, %v918
        %vm1298 = vcmask 1043456
        %v1299 = vsel %vm1298, %v1297, %v949
        %vm1300 = vcmask 1044480
        %v1301 = vsel %vm1300, %v1299, %v980
        %vm1302 = vcmask 1045504
        %v1303 = vsel %vm1302, %v1301, %v1011
        %vm1304 = vcmask 1046528
        %v1305 = vsel %vm1304, %v1303, %v1042
        %v1306 = vsel %vm1292, %v1074, %v1105
        %v1307 = vsel %vm1294, %v1306, %v1136
        %v1308 = vsel %vm1296, %v1307, %v1167
        %v1309 = vsel %vm1298, %v1308, %v1198
        %v1310 = vsel %vm1300, %v1309, %v1229
        %v1311 = vsel %vm1302, %v1310, %v1260
        %v1312 = vsel %vm1304, %v1311, %v1291
        %v1314 = vlaneseq
        %v1315 = vshrl.u32 %v1314, 7
        %v1316 = vsub.s32 0, %v1315
        %v1317 = vrot.slane %v347, %v1316
        %v1319 = vmul.f32 %v358, %v1317
        %v1320 = vmul.f32 %v359, %v1317
        %v1321 = vadd.f32 %v1305, %v1319
        %v1322 = vadd.f32 %v1312, %v1320
        %s1323 = scalar_lea.vmem %s334, %s356
        %1324 = vst.msk [vmem:[%s1323] sm:$0xff] %vm385, %v1321
        %1325 = vst.msk [vmem:[%s1323 + $0x8] sm:$0xff] %vm385, %v1322
      $region45: #{_lambda_.6} parent=39 // loop_footer
        %s353 = sadd.s32 1, %s349
      $region46: #{_lambda_.6} parent=39 // loop_footer_branch
        %348 = sbr.rel target = $region42
      $region47: #{_lambda_.6} parent=39 // loop_exit
        _
      %s1326 = scalar_lea.vmem %s312, 32
      %v1327 = vld [vmem:[%s1326] sm:$0xf]
      %v1328 = vld [vmem:[%s1326 + $0x4] sm:$0xf]
      %v1329 = vld [vmem:[%s1326 + $0x8] sm:$0xf]
      %v1330 = vld [vmem:[%s1326 + $0xc] sm:$0xf]
      %v1331 = vld [vmem:[%s1326 + $0x10] sm:$0xf]
      %v1332 = vld [vmem:[%s1326 + $0x14] sm:$0xf]
      %v1333 = vld [vmem:[%s1326 + $0x18] sm:$0xf]
      %v1334 = vld [vmem:[%s1326 + $0x1c] sm:$0xf]
      %s1335 = scalar_lea.vmem %s321, 16
      %v1336 = vld [vmem:[%s1335] sm:$0xff]
      %v1337 = vld [vmem:[%s1335 + $0x8] sm:$0xff]
      %s1338 = scalar_lea.vmem %s316, 1
      %v1339 = vld [vmem:[%s1338] sm:$0x1]
      %s1340 = scalar_lea.vmem %s325, 1
      %v1341 = vld [vmem:[%s1340] sm:$0x1]
      loop: start=0, step=1, limit=8
      $region48: #{_lambda_.6} parent=39 // loop_pre_header
        _
      $region49: #{_lambda_.6} parent=39 // loop_header
        %s1343 = sphi 0, %s1347
        %p1344 = scmp.ge.s32.totalorder %s1343, 8
        %v1348 = vphi 0.0, %v2274
        %v1349 = vphi 0.0, %v2275
      $region50: #{_lambda_.6} parent=39 // loop_header_branch
        %1346 = sbr.rel (%p1344) target = $region54
      $region51: #{_lambda_.6} parent=39 // loop_body
        %s1350 = ssub.s32 7, %s1343
        %s1351 = smul.u32 %s1350, 16
        %s1352 = scalar_lea.vmem %s307, %s1351
        %v1353 = vld [vmem:[%s1352] sm:$0xff]
        %v1354 = vld [vmem:[%s1352 + $0x8] sm:$0xff]
        %v1355 = vpack.c.bf16 %v1354, %v1353
        %v1364 = vunpack.c.l.b16 %v1327
        %v1365 = vunpack.c.l.b16 %v1328
        %v1366 = vunpack.c.l.b16 %v1329
        %v1367 = vunpack.c.l.b16 %v1330
        %v1368 = vunpack.c.l.b16 %v1331
        %v1369 = vunpack.c.l.b16 %v1332
        %v1370 = vunpack.c.l.b16 %v1333
        %v1371 = vunpack.c.l.b16 %v1334
        %v1372 = vpack.c.b16 %v1365, %v1364
        %v1373 = vpack.c.b16 %v1367, %v1366
        %v1374 = vpack.c.b16 %v1369, %v1368
        %v1375 = vpack.c.b16 %v1371, %v1370
        %vm1380 = vcmask 523264
        %v1382 = vsel %vm1380, %v1355, 0
        %1384 = vmatprep.subr.bf16.mxu0 0
        %1385 = vmatpush1.bf16.msra.mxu0 %v1372
        %1386 = vmatprep.subr.bf16.mxu0 0
        %1387 = vmatpush1.bf16.msra.mxu0 %v1373
        %1388 = vmatprep.subr.bf16.mxu0 0
        %1389 = vmatpush1.bf16.msra.mxu0 %v1374
        %1390 = vmatprep.subr.bf16.mxu0 0
        %1391 = vmatpush1.bf16.msra.mxu0 %v1375
        %1392 = vmatprep.subr.bf16.mxu0 0
        %1393 = vmatpush1.bf16.msra.mxu0 0
        %1394 = vmatprep.subr.bf16.mxu0 0
        %1395 = vmatpush1.bf16.msra.mxu0 0
        %1396 = vmatprep.subr.bf16.mxu0 0
        %1397 = vmatpush1.bf16.msra.mxu0 0
        %1398 = vmatprep.subr.bf16.mxu0 0
        %1399 = vmatpush1.bf16.msra.mxu0 0
        %1400 = vmatprep.subr.bf16.mxu0 0
        %1401 = vmatpush1.bf16.msra.mxu0 0
        %1402 = vmatprep.subr.bf16.mxu0 0
        %1403 = vmatpush1.bf16.msra.mxu0 0
        %1404 = vmatprep.subr.bf16.mxu0 0
        %1405 = vmatpush1.bf16.msra.mxu0 0
        %1406 = vmatprep.subr.bf16.mxu0 0
        %1407 = vmatpush1.bf16.msra.mxu0 0
        %1408 = vmatprep.subr.bf16.mxu0 0
        %1409 = vmatpush1.bf16.msra.mxu0 0
        %1410 = vmatprep.subr.bf16.mxu0 0
        %1411 = vmatpush1.bf16.msra.mxu0 0
        %1412 = vmatprep.subr.bf16.mxu0 0
        %1413 = vmatpush1.bf16.msra.mxu0 0
        %1414 = vmatprep.subr.bf16.mxu0 0
        %1415 = vmatpush1.bf16.msra.mxu0 0
        %1416 = vmatprep.mubr.bf16.mxu0 0
        %1417 = vmatmul.mubr.bf16.gmra.mrb[0].mxu0 %v1382
        %v1418 = vpop.f32.mrb[0].mxu0
        %v1419 = vadd.f32 0.0, %v1418
        %v1420 = vpop.f32.mrb[0].mxu0
        %v1421 = vpop.f32.mrb[0].mxu0
        %v1422 = vadd.f32 0.0, %v1421
        %v1423 = vpop.f32.mrb[0].mxu0
        %1424 = vdwg.mxu0
        %v1426 = vlaneseq
        %v1427 = vshrl.u32 %v1426, 7
        %v1428 = vsub.s32 0, %v1427
        %v1429 = vrot.slane %v1339, %v1428
        %v1431 = vadd.f32 %v1419, %v1429
        %v1432 = vadd.f32 %v1422, %v1429
        %v1433 = vmax.f32 %v1431, 0.0
        %v1434 = vmax.f32 %v1432, 0.0
        %vm1435 = vcmp.ne.f32.partialorder %v1431, %v1431
        %vm1436 = vcmp.ne.f32.partialorder %v1432, %v1432
        %v1437 = vadd.f32 %v1431, 0.0
        %v1438 = vadd.f32 %v1432, 0.0
        %v1439 = vand.u32 2147483647, %v1431
        %v1440 = vand.u32 2147483647, %v1432
        %v1441 = vsub.f32 0.0, %v1439
        %v1442 = vsub.f32 0.0, %v1440
        %v1443 = vmul.f32 %v1441, 1.442695
        %v1444 = vpow.pop %v1443
        %v1445 = vmul.f32 %v1442, 1.442695
        %v1446 = vpow.pop %v1445
        %v1447 = vadd.f32 %v1444, 1.0
        %v1448 = vlog2.pop %v1447
        %v1449 = vmul.f32 %v1448, 0.6931472
        %v1450 = vmul.f32 -0.5, %v1444
        %v1451 = vadd.f32 %v1450, 1.0
        %v1452 = vmul.f32 %v1451, %v1444
        %v1453 = vand.u32 2147483647, %v1444
        %vm1454 = vcmp.lt.f32.partialorder %v1453, 0.0004427343
        %v1455 = vsel %vm1454, %v1452, %v1449
        %v1456 = vadd.f32 %v1446, 1.0
        %v1457 = vlog2.pop %v1456
        %v1458 = vmul.f32 %v1457, 0.6931472
        %v1459 = vmul.f32 -0.5, %v1446
        %v1460 = vadd.f32 %v1459, 1.0
        %v1461 = vmul.f32 %v1460, %v1446
        %v1462 = vand.u32 2147483647, %v1446
        %vm1463 = vcmp.lt.f32.partialorder %v1462, 0.0004427343
        %v1464 = vsel %vm1463, %v1461, %v1458
        %v1465 = vadd.f32 %v1433, %v1455
        %v1466 = vadd.f32 %v1434, %v1464
        %v1467 = vsel %vm1435, %v1437, %v1465
        %v1468 = vsel %vm1436, %v1438, %v1466
        %v1469 = vlaneseq
        %v1470 = vshrl.u32 %v1469, 7
        %v1471 = vsub.s32 0, %v1470
        %v1472 = vrot.slane %v1419, %v1471
        %s1474 = sor.u32 256, 64
        %1475 = vbcast.lane.b32.xlu0 %v1472, %s1474
        %v1476 = vpop.permute.xlu0 %1475
        %s1478 = sor.u32 256, 72
        %1479 = vbcast.lane.b32.xlu0 %v1472, %s1478
        %v1480 = vpop.permute.xlu0 %1479
        %v1481 = vlaneseq
        %v1482 = vshrl.u32 %v1481, 7
        %v1483 = vsub.s32 1, %v1482
        %v1484 = vrot.slane %v1419, %v1483
        %s1486 = sor.u32 256, 64
        %1487 = vbcast.lane.b32.xlu0 %v1484, %s1486
        %v1488 = vpop.permute.xlu0 %1487
        %s1490 = sor.u32 256, 72
        %1491 = vbcast.lane.b32.xlu0 %v1484, %s1490
        %v1492 = vpop.permute.xlu0 %1491
        %v1493 = vlaneseq
        %v1494 = vshrl.u32 %v1493, 7
        %v1495 = vsub.s32 2, %v1494
        %v1496 = vrot.slane %v1419, %v1495
        %s1498 = sor.u32 256, 64
        %1499 = vbcast.lane.b32.xlu0 %v1496, %s1498
        %v1500 = vpop.permute.xlu0 %1499
        %s1502 = sor.u32 256, 72
        %1503 = vbcast.lane.b32.xlu0 %v1496, %s1502
        %v1504 = vpop.permute.xlu0 %1503
        %v1505 = vlaneseq
        %v1506 = vshrl.u32 %v1505, 7
        %v1507 = vsub.s32 3, %v1506
        %v1508 = vrot.slane %v1419, %v1507
        %s1510 = sor.u32 256, 64
        %1511 = vbcast.lane.b32.xlu0 %v1508, %s1510
        %v1512 = vpop.permute.xlu0 %1511
        %s1514 = sor.u32 256, 72
        %1515 = vbcast.lane.b32.xlu0 %v1508, %s1514
        %v1516 = vpop.permute.xlu0 %1515
        %v1517 = vlaneseq
        %v1518 = vshrl.u32 %v1517, 7
        %v1519 = vsub.s32 4, %v1518
        %v1520 = vrot.slane %v1419, %v1519
        %s1522 = sor.u32 256, 64
        %1523 = vbcast.lane.b32.xlu0 %v1520, %s1522
        %v1524 = vpop.permute.xlu0 %1523
        %s1526 = sor.u32 256, 72
        %1527 = vbcast.lane.b32.xlu0 %v1520, %s1526
        %v1528 = vpop.permute.xlu0 %1527
        %v1529 = vlaneseq
        %v1530 = vshrl.u32 %v1529, 7
        %v1531 = vsub.s32 5, %v1530
        %v1532 = vrot.slane %v1419, %v1531
        %s1534 = sor.u32 256, 64
        %1535 = vbcast.lane.b32.xlu0 %v1532, %s1534
        %v1536 = vpop.permute.xlu0 %1535
        %s1538 = sor.u32 256, 72
        %1539 = vbcast.lane.b32.xlu0 %v1532, %s1538
        %v1540 = vpop.permute.xlu0 %1539
        %v1541 = vlaneseq
        %v1542 = vshrl.u32 %v1541, 7
        %v1543 = vsub.s32 6, %v1542
        %v1544 = vrot.slane %v1419, %v1543
        %s1546 = sor.u32 256, 64
        %1547 = vbcast.lane.b32.xlu0 %v1544, %s1546
        %v1548 = vpop.permute.xlu0 %1547
        %s1550 = sor.u32 256, 72
        %1551 = vbcast.lane.b32.xlu0 %v1544, %s1550
        %v1552 = vpop.permute.xlu0 %1551
        %v1553 = vlaneseq
        %v1554 = vshrl.u32 %v1553, 7
        %v1555 = vsub.s32 7, %v1554
        %v1556 = vrot.slane %v1419, %v1555
        %s1558 = sor.u32 256, 64
        %1559 = vbcast.lane.b32.xlu0 %v1556, %s1558
        %v1560 = vpop.permute.xlu0 %1559
        %s1562 = sor.u32 256, 72
        %1563 = vbcast.lane.b32.xlu0 %v1556, %s1562
        %v1564 = vpop.permute.xlu0 %1563
        %v1565 = vlaneseq
        %v1566 = vshrl.u32 %v1565, 7
        %v1567 = vsub.s32 0, %v1566
        %v1568 = vrot.slane %v1422, %v1567
        %s1570 = sor.u32 256, 64
        %1571 = vbcast.lane.b32.xlu0 %v1568, %s1570
        %v1572 = vpop.permute.xlu0 %1571
        %s1574 = sor.u32 256, 72
        %1575 = vbcast.lane.b32.xlu0 %v1568, %s1574
        %v1576 = vpop.permute.xlu0 %1575
        %v1577 = vlaneseq
        %v1578 = vshrl.u32 %v1577, 7
        %v1579 = vsub.s32 1, %v1578
        %v1580 = vrot.slane %v1422, %v1579
        %s1582 = sor.u32 256, 64
        %1583 = vbcast.lane.b32.xlu0 %v1580, %s1582
        %v1584 = vpop.permute.xlu0 %1583
        %s1586 = sor.u32 256, 72
        %1587 = vbcast.lane.b32.xlu0 %v1580, %s1586
        %v1588 = vpop.permute.xlu0 %1587
        %v1589 = vlaneseq
        %v1590 = vshrl.u32 %v1589, 7
        %v1591 = vsub.s32 2, %v1590
        %v1592 = vrot.slane %v1422, %v1591
        %s1594 = sor.u32 256, 64
        %1595 = vbcast.lane.b32.xlu0 %v1592, %s1594
        %v1596 = vpop.permute.xlu0 %1595
        %s1598 = sor.u32 256, 72
        %1599 = vbcast.lane.b32.xlu0 %v1592, %s1598
        %v1600 = vpop.permute.xlu0 %1599
        %v1601 = vlaneseq
        %v1602 = vshrl.u32 %v1601, 7
        %v1603 = vsub.s32 3, %v1602
        %v1604 = vrot.slane %v1422, %v1603
        %s1606 = sor.u32 256, 64
        %1607 = vbcast.lane.b32.xlu0 %v1604, %s1606
        %v1608 = vpop.permute.xlu0 %1607
        %s1610 = sor.u32 256, 72
        %1611 = vbcast.lane.b32.xlu0 %v1604, %s1610
        %v1612 = vpop.permute.xlu0 %1611
        %v1613 = vlaneseq
        %v1614 = vshrl.u32 %v1613, 7
        %v1615 = vsub.s32 4, %v1614
        %v1616 = vrot.slane %v1422, %v1615
        %s1618 = sor.u32 256, 64
        %1619 = vbcast.lane.b32.xlu0 %v1616, %s1618
        %v1620 = vpop.permute.xlu0 %1619
        %s1622 = sor.u32 256, 72
        %1623 = vbcast.lane.b32.xlu0 %v1616, %s1622
        %v1624 = vpop.permute.xlu0 %1623
        %v1625 = vlaneseq
        %v1626 = vshrl.u32 %v1625, 7
        %v1627 = vsub.s32 5, %v1626
        %v1628 = vrot.slane %v1422, %v1627
        %s1630 = sor.u32 256, 64
        %1631 = vbcast.lane.b32.xlu0 %v1628, %s1630
        %v1632 = vpop.permute.xlu0 %1631
        %s1634 = sor.u32 256, 72
        %1635 = vbcast.lane.b32.xlu0 %v1628, %s1634
        %v1636 = vpop.permute.xlu0 %1635
        %v1637 = vlaneseq
        %v1638 = vshrl.u32 %v1637, 7
        %v1639 = vsub.s32 6, %v1638
        %v1640 = vrot.slane %v1422, %v1639
        %s1642 = sor.u32 256, 64
        %1643 = vbcast.lane.b32.xlu0 %v1640, %s1642
        %v1644 = vpop.permute.xlu0 %1643
        %s1646 = sor.u32 256, 72
        %1647 = vbcast.lane.b32.xlu0 %v1640, %s1646
        %v1648 = vpop.permute.xlu0 %1647
        %v1649 = vlaneseq
        %v1650 = vshrl.u32 %v1649, 7
        %v1651 = vsub.s32 7, %v1650
        %v1652 = vrot.slane %v1422, %v1651
        %s1654 = sor.u32 256, 64
        %1655 = vbcast.lane.b32.xlu0 %v1652, %s1654
        %v1656 = vpop.permute.xlu0 %1655
        %s1658 = sor.u32 256, 72
        %1659 = vbcast.lane.b32.xlu0 %v1652, %s1658
        %v1660 = vpop.permute.xlu0 %1659
        %s1662 = sor.u32 256, 80
        %1663 = vbcast.lane.b32.xlu0 %v1472, %s1662
        %v1664 = vpop.permute.xlu0 %1663
        %s1666 = sor.u32 256, 88
        %1667 = vbcast.lane.b32.xlu0 %v1472, %s1666
        %v1668 = vpop.permute.xlu0 %1667
        %s1670 = sor.u32 256, 80
        %1671 = vbcast.lane.b32.xlu0 %v1484, %s1670
        %v1672 = vpop.permute.xlu0 %1671
        %s1674 = sor.u32 256, 88
        %1675 = vbcast.lane.b32.xlu0 %v1484, %s1674
        %v1676 = vpop.permute.xlu0 %1675
        %s1678 = sor.u32 256, 80
        %1679 = vbcast.lane.b32.xlu0 %v1496, %s1678
        %v1680 = vpop.permute.xlu0 %1679
        %s1682 = sor.u32 256, 88
        %1683 = vbcast.lane.b32.xlu0 %v1496, %s1682
        %v1684 = vpop.permute.xlu0 %1683
        %s1686 = sor.u32 256, 80
        %1687 = vbcast.lane.b32.xlu0 %v1508, %s1686
        %v1688 = vpop.permute.xlu0 %1687
        %s1690 = sor.u32 256, 88
        %1691 = vbcast.lane.b32.xlu0 %v1508, %s1690
        %v1692 = vpop.permute.xlu0 %1691
        %s1694 = sor.u32 256, 80
        %1695 = vbcast.lane.b32.xlu0 %v1520, %s1694
        %v1696 = vpop.permute.xlu0 %1695
        %s1698 = sor.u32 256, 88
        %1699 = vbcast.lane.b32.xlu0 %v1520, %s1698
        %v1700 = vpop.permute.xlu0 %1699
        %s1702 = sor.u32 256, 80
        %1703 = vbcast.lane.b32.xlu0 %v1532, %s1702
        %v1704 = vpop.permute.xlu0 %1703
        %s1706 = sor.u32 256, 88
        %1707 = vbcast.lane.b32.xlu0 %v1532, %s1706
        %v1708 = vpop.permute.xlu0 %1707
        %s1710 = sor.u32 256, 80
        %1711 = vbcast.lane.b32.xlu0 %v1544, %s1710
        %v1712 = vpop.permute.xlu0 %1711
        %s1714 = sor.u32 256, 88
        %1715 = vbcast.lane.b32.xlu0 %v1544, %s1714
        %v1716 = vpop.permute.xlu0 %1715
        %s1718 = sor.u32 256, 80
        %1719 = vbcast.lane.b32.xlu0 %v1556, %s1718
        %v1720 = vpop.permute.xlu0 %1719
        %s1722 = sor.u32 256, 88
        %1723 = vbcast.lane.b32.xlu0 %v1556, %s1722
        %v1724 = vpop.permute.xlu0 %1723
        %s1726 = sor.u32 256, 80
        %1727 = vbcast.lane.b32.xlu0 %v1568, %s1726
        %v1728 = vpop.permute.xlu0 %1727
        %s1730 = sor.u32 256, 88
        %1731 = vbcast.lane.b32.xlu0 %v1568, %s1730
        %v1732 = vpop.permute.xlu0 %1731
        %s1734 = sor.u32 256, 80
        %1735 = vbcast.lane.b32.xlu0 %v1580, %s1734
        %v1736 = vpop.permute.xlu0 %1735
        %s1738 = sor.u32 256, 88
        %1739 = vbcast.lane.b32.xlu0 %v1580, %s1738
        %v1740 = vpop.permute.xlu0 %1739
        %s1742 = sor.u32 256, 80
        %1743 = vbcast.lane.b32.xlu0 %v1592, %s1742
        %v1744 = vpop.permute.xlu0 %1743
        %s1746 = sor.u32 256, 88
        %1747 = vbcast.lane.b32.xlu0 %v1592, %s1746
        %v1748 = vpop.permute.xlu0 %1747
        %s1750 = sor.u32 256, 80
        %1751 = vbcast.lane.b32.xlu0 %v1604, %s1750
        %v1752 = vpop.permute.xlu0 %1751
        %s1754 = sor.u32 256, 88
        %1755 = vbcast.lane.b32.xlu0 %v1604, %s1754
        %v1756 = vpop.permute.xlu0 %1755
        %s1758 = sor.u32 256, 80
        %1759 = vbcast.lane.b32.xlu0 %v1616, %s1758
        %v1760 = vpop.permute.xlu0 %1759
        %s1762 = sor.u32 256, 88
        %1763 = vbcast.lane.b32.xlu0 %v1616, %s1762
        %v1764 = vpop.permute.xlu0 %1763
        %s1766 = sor.u32 256, 80
        %1767 = vbcast.lane.b32.xlu0 %v1628, %s1766
        %v1768 = vpop.permute.xlu0 %1767
        %s1770 = sor.u32 256, 88
        %1771 = vbcast.lane.b32.xlu0 %v1628, %s1770
        %v1772 = vpop.permute.xlu0 %1771
        %s1774 = sor.u32 256, 80
        %1775 = vbcast.lane.b32.xlu0 %v1640, %s1774
        %v1776 = vpop.permute.xlu0 %1775
        %s1778 = sor.u32 256, 88
        %1779 = vbcast.lane.b32.xlu0 %v1640, %s1778
        %v1780 = vpop.permute.xlu0 %1779
        %s1782 = sor.u32 256, 80
        %1783 = vbcast.lane.b32.xlu0 %v1652, %s1782
        %v1784 = vpop.permute.xlu0 %1783
        %s1786 = sor.u32 256, 88
        %1787 = vbcast.lane.b32.xlu0 %v1652, %s1786
        %v1788 = vpop.permute.xlu0 %1787
        %v1789 = vlaneseq
        %v1790 = vshrl.u32 %v1789, 7
        %v1791 = vsub.s32 7, %v1790
        %v1792 = vrot.slane %v1468, %v1791
        %v1793 = vmul.f32 %v1792, %v1336
        %v1794 = vmul.f32 %v1792, %v1337
        %v1795 = vmul.f32 %v1793, 1.442695
        %v1796 = vpow.pop %v1795
        %v1797 = vmul.f32 %v1794, 1.442695
        %v1798 = vpow.pop %v1797
        %v1799 = vmul.f32 %v1468, %v1354
        %v1800 = vlaneseq
        %v1801 = vshrl.u32 %v1800, 7
        %v1802 = vsub.s32 7, %v1801
        %v1803 = vrot.slane %v1799, %v1802
        %v1804 = vmul.f32 %v1803, %v1656
        %v1805 = vmul.f32 %v1803, %v1660
        %v1806 = vmul.f32 %v1796, %v1348
        %v1807 = vmul.f32 %v1798, %v1349
        %v1808 = vadd.f32 %v1806, %v1804
        %v1809 = vadd.f32 %v1807, %v1805
        %v1810 = vmul.f32 %v1808, %v1784
        %v1811 = vmul.f32 %v1809, %v1788
        %v1812 = vsel %vm1380, %v1810, 0.0
        %v1813 = vsel %vm1380, %v1811, 0.0
        %v1814 = vadd.f32 %v1812, %v1813
        %v1815 = vrot.slane %v1814, 4
        %v1816 = vadd.f32 %v1814, %v1815
        %v1817 = vrot.slane %v1816, 2
        %v1818 = vadd.f32 %v1816, %v1817
        %v1819 = vrot.slane %v1818, 1
        %v1820 = vadd.f32 %v1818, %v1819
        %v1821 = vlaneseq
        %v1822 = vshrl.u32 %v1821, 7
        %v1823 = vsub.s32 6, %v1822
        %v1824 = vrot.slane %v1468, %v1823
        %v1825 = vmul.f32 %v1824, %v1336
        %v1826 = vmul.f32 %v1824, %v1337
        %v1827 = vmul.f32 %v1825, 1.442695
        %v1828 = vpow.pop %v1827
        %v1829 = vmul.f32 %v1826, 1.442695
        %v1830 = vpow.pop %v1829
        %v1831 = vlaneseq
        %v1832 = vshrl.u32 %v1831, 7
        %v1833 = vsub.s32 6, %v1832
        %v1834 = vrot.slane %v1799, %v1833
        %v1835 = vmul.f32 %v1834, %v1644
        %v1836 = vmul.f32 %v1834, %v1648
        %v1837 = vmul.f32 %v1828, %v1808
        %v1838 = vmul.f32 %v1830, %v1809
        %v1839 = vadd.f32 %v1837, %v1835
        %v1840 = vadd.f32 %v1838, %v1836
        %v1841 = vmul.f32 %v1839, %v1776
        %v1842 = vmul.f32 %v1840, %v1780
        %v1843 = vsel %vm1380, %v1841, 0.0
        %v1844 = vsel %vm1380, %v1842, 0.0
        %v1845 = vadd.f32 %v1843, %v1844
        %v1846 = vrot.slane %v1845, 4
        %v1847 = vadd.f32 %v1845, %v1846
        %v1848 = vrot.slane %v1847, 2
        %v1849 = vadd.f32 %v1847, %v1848
        %v1850 = vrot.slane %v1849, 1
        %v1851 = vadd.f32 %v1849, %v1850
        %v1852 = vlaneseq
        %v1853 = vshrl.u32 %v1852, 7
        %v1854 = vsub.s32 5, %v1853
        %v1855 = vrot.slane %v1468, %v1854
        %v1856 = vmul.f32 %v1855, %v1336
        %v1857 = vmul.f32 %v1855, %v1337
        %v1858 = vmul.f32 %v1856, 1.442695
        %v1859 = vpow.pop %v1858
        %v1860 = vmul.f32 %v1857, 1.442695
        %v1861 = vpow.pop %v1860
        %v1862 = vlaneseq
        %v1863 = vshrl.u32 %v1862, 7
        %v1864 = vsub.s32 5, %v1863
        %v1865 = vrot.slane %v1799, %v1864
        %v1866 = vmul.f32 %v1865, %v1632
        %v1867 = vmul.f32 %v1865, %v1636
        %v1868 = vmul.f32 %v1859, %v1839
        %v1869 = vmul.f32 %v1861, %v1840
        %v1870 = vadd.f32 %v1868, %v1866
        %v1871 = vadd.f32 %v1869, %v1867
        %v1872 = vmul.f32 %v1870, %v1768
        %v1873 = vmul.f32 %v1871, %v1772
        %v1874 = vsel %vm1380, %v1872, 0.0
        %v1875 = vsel %vm1380, %v1873, 0.0
        %v1876 = vadd.f32 %v1874, %v1875
        %v1877 = vrot.slane %v1876, 4
        %v1878 = vadd.f32 %v1876, %v1877
        %v1879 = vrot.slane %v1878, 2
        %v1880 = vadd.f32 %v1878, %v1879
        %v1881 = vrot.slane %v1880, 1
        %v1882 = vadd.f32 %v1880, %v1881
        %v1883 = vlaneseq
        %v1884 = vshrl.u32 %v1883, 7
        %v1885 = vsub.s32 4, %v1884
        %v1886 = vrot.slane %v1468, %v1885
        %v1887 = vmul.f32 %v1886, %v1336
        %v1888 = vmul.f32 %v1886, %v1337
        %v1889 = vmul.f32 %v1887, 1.442695
        %v1890 = vpow.pop %v1889
        %v1891 = vmul.f32 %v1888, 1.442695
        %v1892 = vpow.pop %v1891
        %v1893 = vlaneseq
        %v1894 = vshrl.u32 %v1893, 7
        %v1895 = vsub.s32 4, %v1894
        %v1896 = vrot.slane %v1799, %v1895
        %v1897 = vmul.f32 %v1896, %v1620
        %v1898 = vmul.f32 %v1896, %v1624
        %v1899 = vmul.f32 %v1890, %v1870
        %v1900 = vmul.f32 %v1892, %v1871
        %v1901 = vadd.f32 %v1899, %v1897
        %v1902 = vadd.f32 %v1900, %v1898
        %v1903 = vmul.f32 %v1901, %v1760
        %v1904 = vmul.f32 %v1902, %v1764
        %v1905 = vsel %vm1380, %v1903, 0.0
        %v1906 = vsel %vm1380, %v1904, 0.0
        %v1907 = vadd.f32 %v1905, %v1906
        %v1908 = vrot.slane %v1907, 4
        %v1909 = vadd.f32 %v1907, %v1908
        %v1910 = vrot.slane %v1909, 2
        %v1911 = vadd.f32 %v1909, %v1910
        %v1912 = vrot.slane %v1911, 1
        %v1913 = vadd.f32 %v1911, %v1912
        %v1914 = vlaneseq
        %v1915 = vshrl.u32 %v1914, 7
        %v1916 = vsub.s32 3, %v1915
        %v1917 = vrot.slane %v1468, %v1916
        %v1918 = vmul.f32 %v1917, %v1336
        %v1919 = vmul.f32 %v1917, %v1337
        %v1920 = vmul.f32 %v1918, 1.442695
        %v1921 = vpow.pop %v1920
        %v1922 = vmul.f32 %v1919, 1.442695
        %v1923 = vpow.pop %v1922
        %v1924 = vlaneseq
        %v1925 = vshrl.u32 %v1924, 7
        %v1926 = vsub.s32 3, %v1925
        %v1927 = vrot.slane %v1799, %v1926
        %v1928 = vmul.f32 %v1927, %v1608
        %v1929 = vmul.f32 %v1927, %v1612
        %v1930 = vmul.f32 %v1921, %v1901
        %v1931 = vmul.f32 %v1923, %v1902
        %v1932 = vadd.f32 %v1930, %v1928
        %v1933 = vadd.f32 %v1931, %v1929
        %v1934 = vmul.f32 %v1932, %v1752
        %v1935 = vmul.f32 %v1933, %v1756
        %v1936 = vsel %vm1380, %v1934, 0.0
        %v1937 = vsel %vm1380, %v1935, 0.0
        %v1938 = vadd.f32 %v1936, %v1937
        %v1939 = vrot.slane %v1938, 4
        %v1940 = vadd.f32 %v1938, %v1939
        %v1941 = vrot.slane %v1940, 2
        %v1942 = vadd.f32 %v1940, %v1941
        %v1943 = vrot.slane %v1942, 1
        %v1944 = vadd.f32 %v1942, %v1943
        %v1945 = vlaneseq
        %v1946 = vshrl.u32 %v1945, 7
        %v1947 = vsub.s32 2, %v1946
        %v1948 = vrot.slane %v1468, %v1947
        %v1949 = vmul.f32 %v1948, %v1336
        %v1950 = vmul.f32 %v1948, %v1337
        %v1951 = vmul.f32 %v1949, 1.442695
        %v1952 = vpow.pop %v1951
        %v1953 = vmul.f32 %v1950, 1.442695
        %v1954 = vpow.pop %v1953
        %v1955 = vlaneseq
        %v1956 = vshrl.u32 %v1955, 7
        %v1957 = vsub.s32 2, %v1956
        %v1958 = vrot.slane %v1799, %v1957
        %v1959 = vmul.f32 %v1958, %v1596
        %v1960 = vmul.f32 %v1958, %v1600
        %v1961 = vmul.f32 %v1952, %v1932
        %v1962 = vmul.f32 %v1954, %v1933
        %v1963 = vadd.f32 %v1961, %v1959
        %v1964 = vadd.f32 %v1962, %v1960
        %v1965 = vmul.f32 %v1963, %v1744
        %v1966 = vmul.f32 %v1964, %v1748
        %v1967 = vsel %vm1380, %v1965, 0.0
        %v1968 = vsel %vm1380, %v1966, 0.0
        %v1969 = vadd.f32 %v1967, %v1968
        %v1970 = vrot.slane %v1969, 4
        %v1971 = vadd.f32 %v1969, %v1970
        %v1972 = vrot.slane %v1971, 2
        %v1973 = vadd.f32 %v1971, %v1972
        %v1974 = vrot.slane %v1973, 1
        %v1975 = vadd.f32 %v1973, %v1974
        %v1976 = vlaneseq
        %v1977 = vshrl.u32 %v1976, 7
        %v1978 = vsub.s32 1, %v1977
        %v1979 = vrot.slane %v1468, %v1978
        %v1980 = vmul.f32 %v1979, %v1336
        %v1981 = vmul.f32 %v1979, %v1337
        %v1982 = vmul.f32 %v1980, 1.442695
        %v1983 = vpow.pop %v1982
        %v1984 = vmul.f32 %v1981, 1.442695
        %v1985 = vpow.pop %v1984
        %v1986 = vlaneseq
        %v1987 = vshrl.u32 %v1986, 7
        %v1988 = vsub.s32 1, %v1987
        %v1989 = vrot.slane %v1799, %v1988
        %v1990 = vmul.f32 %v1989, %v1584
        %v1991 = vmul.f32 %v1989, %v1588
        %v1992 = vmul.f32 %v1983, %v1963
        %v1993 = vmul.f32 %v1985, %v1964
        %v1994 = vadd.f32 %v1992, %v1990
        %v1995 = vadd.f32 %v1993, %v1991
        %v1996 = vmul.f32 %v1994, %v1736
        %v1997 = vmul.f32 %v1995, %v1740
        %v1998 = vsel %vm1380, %v1996, 0.0
        %v1999 = vsel %vm1380, %v1997, 0.0
        %v2000 = vadd.f32 %v1998, %v1999
        %v2001 = vrot.slane %v2000, 4
        %v2002 = vadd.f32 %v2000, %v2001
        %v2003 = vrot.slane %v2002, 2
        %v2004 = vadd.f32 %v2002, %v2003
        %v2005 = vrot.slane %v2004, 1
        %v2006 = vadd.f32 %v2004, %v2005
        %v2007 = vlaneseq
        %v2008 = vshrl.u32 %v2007, 7
        %v2009 = vsub.s32 0, %v2008
        %v2010 = vrot.slane %v1468, %v2009
        %v2011 = vmul.f32 %v2010, %v1336
        %v2012 = vmul.f32 %v2010, %v1337
        %v2013 = vmul.f32 %v2011, 1.442695
        %v2014 = vpow.pop %v2013
        %v2015 = vmul.f32 %v2012, 1.442695
        %v2016 = vpow.pop %v2015
        %v2017 = vlaneseq
        %v2018 = vshrl.u32 %v2017, 7
        %v2019 = vsub.s32 0, %v2018
        %v2020 = vrot.slane %v1799, %v2019
        %v2021 = vmul.f32 %v2020, %v1572
        %v2022 = vmul.f32 %v2020, %v1576
        %v2023 = vmul.f32 %v2014, %v1994
        %v2024 = vmul.f32 %v2016, %v1995
        %v2025 = vadd.f32 %v2023, %v2021
        %v2026 = vadd.f32 %v2024, %v2022
        %v2027 = vmul.f32 %v2025, %v1728
        %v2028 = vmul.f32 %v2026, %v1732
        %v2029 = vsel %vm1380, %v2027, 0.0
        %v2030 = vsel %vm1380, %v2028, 0.0
        %v2031 = vadd.f32 %v2029, %v2030
        %v2032 = vrot.slane %v2031, 4
        %v2033 = vadd.f32 %v2031, %v2032
        %v2034 = vrot.slane %v2033, 2
        %v2035 = vadd.f32 %v2033, %v2034
        %v2036 = vrot.slane %v2035, 1
        %v2037 = vadd.f32 %v2035, %v2036
        %v2038 = vlaneseq
        %v2039 = vshrl.u32 %v2038, 7
        %v2040 = vsub.s32 7, %v2039
        %v2041 = vrot.slane %v1467, %v2040
        %v2042 = vmul.f32 %v2041, %v1336
        %v2043 = vmul.f32 %v2041, %v1337
        %v2044 = vmul.f32 %v2042, 1.442695
        %v2045 = vpow.pop %v2044
        %v2046 = vmul.f32 %v2043, 1.442695
        %v2047 = vpow.pop %v2046
        %v2048 = vmul.f32 %v1467, %v1353
        %v2049 = vlaneseq
        %v2050 = vshrl.u32 %v2049, 7
        %v2051 = vsub.s32 7, %v2050
        %v2052 = vrot.slane %v2048, %v2051
        %v2053 = vmul.f32 %v2052, %v1560
        %v2054 = vmul.f32 %v2052, %v1564
        %v2055 = vmul.f32 %v2045, %v2025
        %v2056 = vmul.f32 %v2047, %v2026
        %v2057 = vadd.f32 %v2055, %v2053
        %v2058 = vadd.f32 %v2056, %v2054
        %v2059 = vmul.f32 %v2057, %v1720
        %v2060 = vmul.f32 %v2058, %v1724
        %v2061 = vsel %vm1380, %v2059, 0.0
        %v2062 = vsel %vm1380, %v2060, 0.0
        %v2063 = vadd.f32 %v2061, %v2062
        %v2064 = vrot.slane %v2063, 4
        %v2065 = vadd.f32 %v2063, %v2064
        %v2066 = vrot.slane %v2065, 2
        %v2067 = vadd.f32 %v2065, %v2066
        %v2068 = vrot.slane %v2067, 1
        %v2069 = vadd.f32 %v2067, %v2068
        %v2070 = vlaneseq
        %v2071 = vshrl.u32 %v2070, 7
        %v2072 = vsub.s32 6, %v2071
        %v2073 = vrot.slane %v1467, %v2072
        %v2074 = vmul.f32 %v2073, %v1336
        %v2075 = vmul.f32 %v2073, %v1337
        %v2076 = vmul.f32 %v2074, 1.442695
        %v2077 = vpow.pop %v2076
        %v2078 = vmul.f32 %v2075, 1.442695
        %v2079 = vpow.pop %v2078
        %v2080 = vlaneseq
        %v2081 = vshrl.u32 %v2080, 7
        %v2082 = vsub.s32 6, %v2081
        %v2083 = vrot.slane %v2048, %v2082
        %v2084 = vmul.f32 %v2083, %v1548
        %v2085 = vmul.f32 %v2083, %v1552
        %v2086 = vmul.f32 %v2077, %v2057
        %v2087 = vmul.f32 %v2079, %v2058
        %v2088 = vadd.f32 %v2086, %v2084
        %v2089 = vadd.f32 %v2087, %v2085
        %v2090 = vmul.f32 %v2088, %v1712
        %v2091 = vmul.f32 %v2089, %v1716
        %v2092 = vsel %vm1380, %v2090, 0.0
        %v2093 = vsel %vm1380, %v2091, 0.0
        %v2094 = vadd.f32 %v2092, %v2093
        %v2095 = vrot.slane %v2094, 4
        %v2096 = vadd.f32 %v2094, %v2095
        %v2097 = vrot.slane %v2096, 2
        %v2098 = vadd.f32 %v2096, %v2097
        %v2099 = vrot.slane %v2098, 1
        %v2100 = vadd.f32 %v2098, %v2099
        %v2101 = vlaneseq
        %v2102 = vshrl.u32 %v2101, 7
        %v2103 = vsub.s32 5, %v2102
        %v2104 = vrot.slane %v1467, %v2103
        %v2105 = vmul.f32 %v2104, %v1336
        %v2106 = vmul.f32 %v2104, %v1337
        %v2107 = vmul.f32 %v2105, 1.442695
        %v2108 = vpow.pop %v2107
        %v2109 = vmul.f32 %v2106, 1.442695
        %v2110 = vpow.pop %v2109
        %v2111 = vlaneseq
        %v2112 = vshrl.u32 %v2111, 7
        %v2113 = vsub.s32 5, %v2112
        %v2114 = vrot.slane %v2048, %v2113
        %v2115 = vmul.f32 %v2114, %v1536
        %v2116 = vmul.f32 %v2114, %v1540
        %v2117 = vmul.f32 %v2108, %v2088
        %v2118 = vmul.f32 %v2110, %v2089
        %v2119 = vadd.f32 %v2117, %v2115
        %v2120 = vadd.f32 %v2118, %v2116
        %v2121 = vmul.f32 %v2119, %v1704
        %v2122 = vmul.f32 %v2120, %v1708
        %v2123 = vsel %vm1380, %v2121, 0.0
        %v2124 = vsel %vm1380, %v2122, 0.0
        %v2125 = vadd.f32 %v2123, %v2124
        %v2126 = vrot.slane %v2125, 4
        %v2127 = vadd.f32 %v2125, %v2126
        %v2128 = vrot.slane %v2127, 2
        %v2129 = vadd.f32 %v2127, %v2128
        %v2130 = vrot.slane %v2129, 1
        %v2131 = vadd.f32 %v2129, %v2130
        %v2132 = vlaneseq
        %v2133 = vshrl.u32 %v2132, 7
        %v2134 = vsub.s32 4, %v2133
        %v2135 = vrot.slane %v1467, %v2134
        %v2136 = vmul.f32 %v2135, %v1336
        %v2137 = vmul.f32 %v2135, %v1337
        %v2138 = vmul.f32 %v2136, 1.442695
        %v2139 = vpow.pop %v2138
        %v2140 = vmul.f32 %v2137, 1.442695
        %v2141 = vpow.pop %v2140
        %v2142 = vlaneseq
        %v2143 = vshrl.u32 %v2142, 7
        %v2144 = vsub.s32 4, %v2143
        %v2145 = vrot.slane %v2048, %v2144
        %v2146 = vmul.f32 %v2145, %v1524
        %v2147 = vmul.f32 %v2145, %v1528
        %v2148 = vmul.f32 %v2139, %v2119
        %v2149 = vmul.f32 %v2141, %v2120
        %v2150 = vadd.f32 %v2148, %v2146
        %v2151 = vadd.f32 %v2149, %v2147
        %v2152 = vmul.f32 %v2150, %v1696
        %v2153 = vmul.f32 %v2151, %v1700
        %v2154 = vsel %vm1380, %v2152, 0.0
        %v2155 = vsel %vm1380, %v2153, 0.0
        %v2156 = vadd.f32 %v2154, %v2155
        %v2157 = vrot.slane %v2156, 4
        %v2158 = vadd.f32 %v2156, %v2157
        %v2159 = vrot.slane %v2158, 2
        %v2160 = vadd.f32 %v2158, %v2159
        %v2161 = vrot.slane %v2160, 1
        %v2162 = vadd.f32 %v2160, %v2161
        %v2163 = vlaneseq
        %v2164 = vshrl.u32 %v2163, 7
        %v2165 = vsub.s32 3, %v2164
        %v2166 = vrot.slane %v1467, %v2165
        %v2167 = vmul.f32 %v2166, %v1336
        %v2168 = vmul.f32 %v2166, %v1337
        %v2169 = vmul.f32 %v2167, 1.442695
        %v2170 = vpow.pop %v2169
        %v2171 = vmul.f32 %v2168, 1.442695
        %v2172 = vpow.pop %v2171
        %v2173 = vlaneseq
        %v2174 = vshrl.u32 %v2173, 7
        %v2175 = vsub.s32 3, %v2174
        %v2176 = vrot.slane %v2048, %v2175
        %v2177 = vmul.f32 %v2176, %v1512
        %v2178 = vmul.f32 %v2176, %v1516
        %v2179 = vmul.f32 %v2170, %v2150
        %v2180 = vmul.f32 %v2172, %v2151
        %v2181 = vadd.f32 %v2179, %v2177
        %v2182 = vadd.f32 %v2180, %v2178
        %v2183 = vmul.f32 %v2181, %v1688
        %v2184 = vmul.f32 %v2182, %v1692
        %v2185 = vsel %vm1380, %v2183, 0.0
        %v2186 = vsel %vm1380, %v2184, 0.0
        %v2187 = vadd.f32 %v2185, %v2186
        %v2188 = vrot.slane %v2187, 4
        %v2189 = vadd.f32 %v2187, %v2188
        %v2190 = vrot.slane %v2189, 2
        %v2191 = vadd.f32 %v2189, %v2190
        %v2192 = vrot.slane %v2191, 1
        %v2193 = vadd.f32 %v2191, %v2192
        %v2194 = vlaneseq
        %v2195 = vshrl.u32 %v2194, 7
        %v2196 = vsub.s32 2, %v2195
        %v2197 = vrot.slane %v1467, %v2196
        %v2198 = vmul.f32 %v2197, %v1336
        %v2199 = vmul.f32 %v2197, %v1337
        %v2200 = vmul.f32 %v2198, 1.442695
        %v2201 = vpow.pop %v2200
        %v2202 = vmul.f32 %v2199, 1.442695
        %v2203 = vpow.pop %v2202
        %v2204 = vlaneseq
        %v2205 = vshrl.u32 %v2204, 7
        %v2206 = vsub.s32 2, %v2205
        %v2207 = vrot.slane %v2048, %v2206
        %v2208 = vmul.f32 %v2207, %v1500
        %v2209 = vmul.f32 %v2207, %v1504
        %v2210 = vmul.f32 %v2201, %v2181
        %v2211 = vmul.f32 %v2203, %v2182
        %v2212 = vadd.f32 %v2210, %v2208
        %v2213 = vadd.f32 %v2211, %v2209
        %v2214 = vmul.f32 %v2212, %v1680
        %v2215 = vmul.f32 %v2213, %v1684
        %v2216 = vsel %vm1380, %v2214, 0.0
        %v2217 = vsel %vm1380, %v2215, 0.0
        %v2218 = vadd.f32 %v2216, %v2217
        %v2219 = vrot.slane %v2218, 4
        %v2220 = vadd.f32 %v2218, %v2219
        %v2221 = vrot.slane %v2220, 2
        %v2222 = vadd.f32 %v2220, %v2221
        %v2223 = vrot.slane %v2222, 1
        %v2224 = vadd.f32 %v2222, %v2223
        %v2225 = vlaneseq
        %v2226 = vshrl.u32 %v2225, 7
        %v2227 = vsub.s32 1, %v2226
        %v2228 = vrot.slane %v1467, %v2227
        %v2229 = vmul.f32 %v2228, %v1336
        %v2230 = vmul.f32 %v2228, %v1337
        %v2231 = vmul.f32 %v2229, 1.442695
        %v2232 = vpow.pop %v2231
        %v2233 = vmul.f32 %v2230, 1.442695
        %v2234 = vpow.pop %v2233
        %v2235 = vlaneseq
        %v2236 = vshrl.u32 %v2235, 7
        %v2237 = vsub.s32 1, %v2236
        %v2238 = vrot.slane %v2048, %v2237
        %v2239 = vmul.f32 %v2238, %v1488
        %v2240 = vmul.f32 %v2238, %v1492
        %v2241 = vmul.f32 %v2232, %v2212
        %v2242 = vmul.f32 %v2234, %v2213
        %v2243 = vadd.f32 %v2241, %v2239
        %v2244 = vadd.f32 %v2242, %v2240
        %v2245 = vmul.f32 %v2243, %v1672
        %v2246 = vmul.f32 %v2244, %v1676
        %v2247 = vsel %vm1380, %v2245, 0.0
        %v2248 = vsel %vm1380, %v2246, 0.0
        %v2249 = vadd.f32 %v2247, %v2248
        %v2250 = vrot.slane %v2249, 4
        %v2251 = vadd.f32 %v2249, %v2250
        %v2252 = vrot.slane %v2251, 2
        %v2253 = vadd.f32 %v2251, %v2252
        %v2254 = vrot.slane %v2253, 1
        %v2255 = vadd.f32 %v2253, %v2254
        %v2256 = vlaneseq
        %v2257 = vshrl.u32 %v2256, 7
        %v2258 = vsub.s32 0, %v2257
        %v2259 = vrot.slane %v1467, %v2258
        %v2260 = vmul.f32 %v2259, %v1336
        %v2261 = vmul.f32 %v2259, %v1337
        %v2262 = vmul.f32 %v2260, 1.442695
        %v2263 = vpow.pop %v2262
        %v2264 = vmul.f32 %v2261, 1.442695
        %v2265 = vpow.pop %v2264
        %v2266 = vlaneseq
        %v2267 = vshrl.u32 %v2266, 7
        %v2268 = vsub.s32 0, %v2267
        %v2269 = vrot.slane %v2048, %v2268
        %v2270 = vmul.f32 %v2269, %v1476
        %v2271 = vmul.f32 %v2269, %v1480
        %v2272 = vmul.f32 %v2263, %v2243
        %v2273 = vmul.f32 %v2265, %v2244
        %v2274 = vadd.f32 %v2272, %v2270
        %v2275 = vadd.f32 %v2273, %v2271
        %v2276 = vmul.f32 %v2274, %v1664
        %v2277 = vmul.f32 %v2275, %v1668
        %v2278 = vsel %vm1380, %v2276, 0.0
        %v2279 = vsel %vm1380, %v2277, 0.0
        %v2280 = vadd.f32 %v2278, %v2279
        %v2281 = vrot.slane %v2280, 4
        %v2282 = vadd.f32 %v2280, %v2281
        %v2283 = vrot.slane %v2282, 2
        %v2284 = vadd.f32 %v2282, %v2283
        %v2285 = vrot.slane %v2284, 1
        %v2286 = vadd.f32 %v2284, %v2285
        %vm2287 = vcmask 1040384
        %v2288 = vsel %vm2287, %v2286, %v2255
        %vm2289 = vcmask 1041408
        %v2290 = vsel %vm2289, %v2288, %v2224
        %vm2291 = vcmask 1042432
        %v2292 = vsel %vm2291, %v2290, %v2193
        %vm2293 = vcmask 1043456
        %v2294 = vsel %vm2293, %v2292, %v2162
        %vm2295 = vcmask 1044480
        %v2296 = vsel %vm2295, %v2294, %v2131
        %vm2297 = vcmask 1045504
        %v2298 = vsel %vm2297, %v2296, %v2100
        %vm2299 = vcmask 1046528
        %v2300 = vsel %vm2299, %v2298, %v2069
        %v2301 = vsel %vm2287, %v2037, %v2006
        %v2302 = vsel %vm2289, %v2301, %v1975
        %v2303 = vsel %vm2291, %v2302, %v1944
        %v2304 = vsel %vm2293, %v2303, %v1913
        %v2305 = vsel %vm2295, %v2304, %v1882
        %v2306 = vsel %vm2297, %v2305, %v1851
        %v2307 = vsel %vm2299, %v2306, %v1820
        %v2309 = vlaneseq
        %v2310 = vshrl.u32 %v2309, 7
        %v2311 = vsub.s32 0, %v2310
        %v2312 = vrot.slane %v1341, %v2311
        %v2314 = vmul.f32 %v1353, %v2312
        %v2315 = vmul.f32 %v1354, %v2312
        %v2316 = vadd.f32 %v2300, %v2314
        %v2317 = vadd.f32 %v2307, %v2315
        %s2318 = scalar_lea.vmem %s334, %s1351
        %v2319 = vld [vmem:[%s2318] sm:$0xff]
        %v2320 = vld [vmem:[%s2318 + $0x8] sm:$0xff]
        %v2321 = vadd.f32 %v2319, %v2316
        %v2322 = vadd.f32 %v2320, %v2317
        %2323 = vst.msk [vmem:[%s2318] sm:$0xff] %vm1380, %v2321
        %2324 = vst.msk [vmem:[%s2318 + $0x8] sm:$0xff] %vm1380, %v2322
      $region52: #{_lambda_.6} parent=39 // loop_footer
        %s1347 = sadd.s32 1, %s1343
      $region53: #{_lambda_.6} parent=39 // loop_footer_branch
        %1342 = sbr.rel target = $region49
      $region54: #{_lambda_.6} parent=39 // loop_exit
        _
      %p2325 = scmp.lt.s32.totalorder %s20, 1
      %s2326 = scalar_select %p2325, %s20, 1
      %p2327 = scmp.lt.s32.totalorder %s21, 1
      %s2328 = scalar_select %p2327, %s21, 1
      %s2329 = smul.addr %s2328, 16
      %s2330 = smul.addr %s2326, 32
      %s2331 = sadd.s32 %s2329, %s2330
      %s2332 = smul.addr %s2331, 8
      %s2333 = scalar_lea.vmem %s5, %s2332
      // Predicated region
      $region55: #{_lambda_.6} parent=39 // pred_check
        %p2334 = pneg %p180
      $region56: #{_lambda_.6} parent=39 // pred_check_branch
        %2336 = sbr.rel (%p2334) target = $region58
      $region57: #{_lambda_.6} parent=39 // pred_region
        _
      $region58: #{_lambda_.6} parent=39 // pred_fallthru
        _
    $region40: #{_lambda_.6} parent=5 // pred_fallthru
      _
    %p2337 = scmp.le.s32.totalorder 2, %s11
    // Predicated region
    $region59: #{_lambda_.6} parent=5 // pred_check
      %p2338 = pneg %p2337
    $region60: #{_lambda_.6} parent=5 // pred_check_branch
      %2340 = sbr.rel (%p2338) target = $region62
    $region61: #{_lambda_.6} parent=5 // pred_region
      %s2341 = ssub.s32 %s11, 2
      // Predicated region
      $region63: #{_lambda_.6} parent=61 // pred_check
        %p2342 = pneg %p186
      $region64: #{_lambda_.6} parent=61 // pred_check_branch
        %2344 = sbr.rel (%p2342) target = $region66
      $region65: #{_lambda_.6} parent=61 // pred_region
        %p2345 = scmp.lt.s32.totalorder %s22, 1
        %s2346 = scalar_select %p2345, %s22, 1
        %p2347 = scmp.lt.s32.totalorder %s23, 1
        %s2348 = scalar_select %p2347, %s23, 1
        %s2349 = smul.addr %s2348, 16
        %s2350 = smul.addr %s2346, 32
        %s2351 = sadd.s32 %s2349, %s2350
        %s2352 = smul.addr %s2351, 8
        %s2353 = scalar_lea.vmem %s5, %s2352
      $region66: #{_lambda_.6} parent=61 // pred_fallthru
        _
    $region62: #{_lambda_.6} parent=5 // pred_fallthru
      _
  $region6: #{_lambda_.6} parent=0 // loop_footer
    %s15 = sadd.s32 1, %s11
  $region7: #{_lambda_.6} parent=0 // loop_footer_branch
    %10 = sbr.rel target = $region3
  $region8: #{_lambda_.6} parent=0 // loop_exit
    _

</llo_original>
